<compile_context>
chip_gen: v7x
topology: tpu7x:2x2x1
jax: 0.10.0
libtpu: 0.0.40
codegen_flags: <defaults>
</compile_context>

<pallas_src>
import math
from functools import partial

import jax
import jax.numpy as jnp
from jax import lax
from jax.experimental import pallas as pl
from jax.experimental.pallas import tpu as pltpu


def _gelu_exact(x):
    # PyTorch nn.GELU() default = exact erf formulation.
    return 0.5 * x * (1.0 + lax.erf(x * (1.0 / math.sqrt(2.0))))


def transformer_block_kernel(
    x_ref, ctx_ref,
    norm_sa_w, norm_cross_w, norm_out_w,
    sa_wqkv, sa_wo,
    ca_wq, ca_wkv, ca_wo,
    ff_w1, ff_ln_g, ff_w2,
    o_ref, *, heads, compute_dtype,
):
    # TODO(synk): key_padding_mask / context_mask paths not implemented (inputs are None here).
    Bb, S, D = x_ref.shape
    Sc = ctx_ref.shape[1]
    hd = D // heads
    scale = 1.0 / math.sqrt(hd)

    # Hoist all weight loads / gamma broadcasts out of the per-head loops
    # (JAX does not CSE broadcast_in_dim).
    g_sa = norm_sa_w[...].astype(jnp.float32)
    g_cross = norm_cross_w[...].astype(jnp.float32)
    g_out = norm_out_w[...].astype(jnp.float32)
    g_ff = ff_ln_g[...].astype(jnp.float32)
    w_sa_qkv = sa_wqkv[...]
    w_sa_o = sa_wo[...]
    w_ca_q = ca_wq[...]
    w_ca_kv = ca_wkv[...]
    w_ca_o = ca_wo[...]
    w_ff1 = ff_w1[...]
    w_ff2 = ff_w2[...]

    def layernorm(v, gamma, eps=1e-5):
        # F.layer_norm over last dim; beta == 0 in both LayerNorm variants used.
        mean = jnp.mean(v, axis=-1, keepdims=True)
        c = v - mean
        var = jnp.mean(c * c, axis=-1, keepdims=True)
        return c * lax.rsqrt(var + eps) * gamma

    def mha(q_rows, k_rows, v_rows, wo, Sq, Sk):
        """nn.MultiheadAttention(bias=False, dropout=0, batch_first=True), after QKV projection."""
        q3 = q_rows.astype(compute_dtype).reshape(Bb, Sq, D)
        k3 = k_rows.astype(compute_dtype).reshape(Bb, Sk, D)
        v3 = v_rows.astype(compute_dtype).reshape(Bb, Sk, D)
        acc = jnp.zeros((Bb * Sq, D), jnp.float32)
        # Static unrolled loop; heads is small.  Head slices are lane slices of
        # the already-loaded projection outputs (no extra VMEM traffic).
        for h in range(heads):
            sl = slice(h * hd, (h + 1) * hd)
            s = jnp.einsum('bqd,bkd->bqk', q3[:, :, sl], k3[:, :, sl],
                           preferred_element_type=jnp.float32) * scale
            s = s - jnp.max(s, axis=-1, keepdims=True)
            p = jnp.exp(s)
            # Softmax denominator via the (otherwise idle) EUP reciprocal slot.
            p = p * pl.reciprocal(jnp.sum(p, axis=-1, keepdims=True), approx=True)
            oh = jnp.einsum('bqk,bkd->bqd', p.astype(compute_dtype), v3[:, :, sl],
                            preferred_element_type=jnp.float32)
            # Fold the output projection in per head: avoids a 4-way lane concat.
            acc = acc + jnp.dot(oh.reshape(Bb * Sq, hd).astype(compute_dtype),
                                wo[sl, :], preferred_element_type=jnp.float32)
        return acc

    # Flatten batch into rows: (Bb, S, D) -> (Bb*S, D) is a free re-interpretation
    # here (leading-dim reshape; S, Sc are multiples of 8).
    x = x_ref[...].astype(jnp.float32).reshape(Bb * S, D)
    ctx = ctx_ref[...].astype(jnp.float32).reshape(Bb * Sc, D)

    # x = norm_sa(x); x = self_attn(x, x, x) + x   (residual adds the *normalized* x,
    # exactly as in the PyTorch forward)
    x = layernorm(x, g_sa)
    qkv = jnp.dot(x.astype(compute_dtype), w_sa_qkv,
                  preferred_element_type=jnp.float32)                   # fused Q|K|V
    x = mha(qkv[:, :D], qkv[:, D:2 * D], qkv[:, 2 * D:], w_sa_o, S, S) + x

    # x = cross_attn(norm_cross(x), context, context) + x
    xn = layernorm(x, g_cross)
    qc = jnp.dot(xn.astype(compute_dtype), w_ca_q, preferred_element_type=jnp.float32)
    kv = jnp.dot(ctx.astype(compute_dtype), w_ca_kv,
                 preferred_element_type=jnp.float32)                    # fused K|V
    x = mha(qc, kv[:, :D], kv[:, D:], w_ca_o, S, Sc) + x

    # ff = Linear(no bias) -> GELU(exact erf) -> LayerNorm -> Dropout(p=0, identity) -> Linear(no bias)
    # x = norm_out(ff(x) + x)
    h1 = jnp.dot(x.astype(compute_dtype), w_ff1, preferred_element_type=jnp.float32)
    h1 = layernorm(_gelu_exact(h1), g_ff)
    y = jnp.dot(h1.astype(compute_dtype), w_ff2, preferred_element_type=jnp.float32)
    x = layernorm(y + x, g_out)

    # TODO(synk): with D=32 this store is 32-lane (masked vst); presenting a lane-dense
    # (Bb, S*D) output would need an in-kernel minor-dim reshape that we avoid for
    # lowering safety at these sizes.
    o_ref[...] = x.reshape(Bb, S, D).astype(o_ref.dtype)


def transformer_block_muse(x, context, params, heads,
                           batch_block=None, compute_dtype=jnp.float32):
    B, S, D = x.shape
    Bc, Sc, Dc = context.shape
    assert Bc == B and Dc == D and D % heads == 0

    if batch_block is None:
        # Keep >=2 grid steps so both v7x TensorCores get work, while making each
        # step as fat as possible to amortize the ~0.35us per-step overhead
        # (also fine on single-TC v5e/v6e: only 2 steps total).
        batch_block = B // 2 if (B >= 2 and B % 2 == 0) else B
    assert B % batch_block == 0
    grid = (B // batch_block,)

    # compute_dtype=jnp.bfloat16 halves weight DMA/VMEM and uses the bf16-native MXU
    # on v6e/v7x; default float32 matches PyTorch numerics exactly.
    mm = lambda w: w.astype(compute_dtype)
    weights = [
        params["norm_sa_w"], params["norm_cross_w"], params["norm_out_w"],
        mm(jnp.concatenate([params["sa_wq"], params["sa_wk"], params["sa_wv"]], axis=1)),
        mm(params["sa_wo"]),
        mm(params["ca_wq"]),
        mm(jnp.concatenate([params["ca_wk"], params["ca_wv"]], axis=1)),
        mm(params["ca_wo"]),
        mm(params["ff_w1"]), params["ff_ln_g"], mm(params["ff_w2"]),
    ]
    # Constant index_map -> weights are DMA'd once and reused across grid steps.
    w_specs = [pl.BlockSpec(w.shape, lambda b, nd=w.ndim: (0,) * nd) for w in weights]

    grid_spec = pltpu.PrefetchScalarGridSpec(
        num_scalar_prefetch=0,
        grid=grid,
        in_specs=[
            pl.BlockSpec((batch_block, S, D), lambda b: (b, 0, 0)),    # x block
            pl.BlockSpec((batch_block, Sc, D), lambda b: (b, 0, 0)),   # context block
        ] + w_specs,
        out_specs=pl.BlockSpec((batch_block, S, D), lambda b: (b, 0, 0)),
    )

    return pl.pallas_call(
        partial(transformer_block_kernel, heads=heads, compute_dtype=compute_dtype),
        grid_spec=grid_spec,
        out_shape=jax.ShapeDtypeStruct((B, S, D), x.dtype),
        compiler_params=pltpu.CompilerParams(dimension_semantics=("parallel",)),
    )(x, context, *weights)


def init_params(key, dim, heads, ff_mult):
    inner = dim * ff_mult
    ks = jax.random.split(key, 10)

    def lin(k, fan_in, fan_out):
        # deterministic synthetic init; stored (in_features, out_features)
        return jax.random.normal(k, (fan_in, fan_out), jnp.float32) * 0.02

    return {
        # nn.LayerNorm(dim, bias=False) weights
        "norm_sa_w": jnp.ones((1, dim), jnp.float32),
        "norm_cross_w": jnp.ones((1, dim), jnp.float32),
        "norm_out_w": jnp.ones((1, dim), jnp.float32),
        # self-attention (in_proj split into q/k/v, out_proj), all bias=False
        "sa_wq": lin(ks[0], dim, dim),
        "sa_wk": lin(ks[1], dim, dim),
        "sa_wv": lin(ks[2], dim, dim),
        "sa_wo": lin(ks[3], dim, dim),
        # cross-attention
        "ca_wq": lin(ks[4], dim, dim),
        "ca_wk": lin(ks[5], dim, dim),
        "ca_wv": lin(ks[6], dim, dim),
        "ca_wo": lin(ks[7], dim, dim),
        # FeedForward: Linear(dim, inner) -> GELU -> LayerNorm(inner) -> Linear(inner, dim)
        "ff_w1": lin(ks[8], dim, inner),
        "ff_ln_g": jnp.ones((1, inner), jnp.float32),
        "ff_w2": lin(ks[9], inner, dim),
    }


if __name__ == "__main__":
    B, S, Sc = 4, 8, 16
    dim, heads, ff_mult = 32, 4, 4

    key = jax.random.PRNGKey(0)
    kx, kc, kp = jax.random.split(key, 3)
    x = jax.random.normal(kx, (B, S, dim), jnp.float32)
    context = jax.random.normal(kc, (B, Sc, dim), jnp.float32)
    params = init_params(kp, dim, heads, ff_mult)

    out = transformer_block_muse(x, context, params, heads)
    out = jax.block_until_ready(out)
    assert out.shape == (B, S, dim) and out.dtype == jnp.float32
    assert bool(jnp.all(jnp.isfinite(out)))
    print("KERNEL_OK")
</pallas_src>

<mosaic_0001>
module attributes {stable_mosaic.version = 11 : i64} {
  func.func @transformer_block_kernel(%arg0: i32, %arg1: memref<2x8x32xf32, #tpu.memory_space<vmem>>, %arg2: memref<2x16x32xf32, #tpu.memory_space<vmem>>, %arg3: memref<1x32xf32, #tpu.memory_space<vmem>>, %arg4: memref<1x32xf32, #tpu.memory_space<vmem>>, %arg5: memref<1x32xf32, #tpu.memory_space<vmem>>, %arg6: memref<32x96xf32, #tpu.memory_space<vmem>>, %arg7: memref<32x32xf32, #tpu.memory_space<vmem>>, %arg8: memref<32x32xf32, #tpu.memory_space<vmem>>, %arg9: memref<32x64xf32, #tpu.memory_space<vmem>>, %arg10: memref<32x32xf32, #tpu.memory_space<vmem>>, %arg11: memref<32x128xf32, #tpu.memory_space<vmem>>, %arg12: memref<1x128xf32, #tpu.memory_space<vmem>>, %arg13: memref<128x32xf32, #tpu.memory_space<vmem>>, %arg14: memref<2x8x32xf32, #tpu.memory_space<vmem>>) attributes {dimension_semantics = [#tpu.dimension_semantics<parallel>], iteration_bounds = array<i64: 2>, scalar_prefetch = 0 : i64, scratch_operands = 0 : i64, tpu.core_type = #tpu.core_type<tc>, window_params = [{transform_indices = @transform_0, window_bounds = array<i64: 2, 8, 32>}, {transform_indices = @transform_1, window_bounds = array<i64: 2, 16, 32>}, {pipeline_mode = #tpu.pipeline_mode<synchronous>, transform_indices = @transform_2, window_bounds = array<i64: 1, 32>}, {pipeline_mode = #tpu.pipeline_mode<synchronous>, transform_indices = @transform_3, window_bounds = array<i64: 1, 32>}, {pipeline_mode = #tpu.pipeline_mode<synchronous>, transform_indices = @transform_4, window_bounds = array<i64: 1, 32>}, {pipeline_mode = #tpu.pipeline_mode<synchronous>, transform_indices = @transform_5, window_bounds = array<i64: 32, 96>}, {pipeline_mode = #tpu.pipeline_mode<synchronous>, transform_indices = @transform_6, window_bounds = array<i64: 32, 32>}, {pipeline_mode = #tpu.pipeline_mode<synchronous>, transform_indices = @transform_7, window_bounds = array<i64: 32, 32>}, {pipeline_mode = #tpu.pipeline_mode<synchronous>, transform_indices = @transform_8, window_bounds = array<i64: 32, 64>}, {pipeline_mode = #tpu.pipeline_mode<synchronous>, transform_indices = @transform_9, window_bounds = array<i64: 32, 32>}, {pipeline_mode = #tpu.pipeline_mode<synchronous>, transform_indices = @transform_10, window_bounds = array<i64: 32, 128>}, {pipeline_mode = #tpu.pipeline_mode<synchronous>, transform_indices = @transform_11, window_bounds = array<i64: 1, 128>}, {pipeline_mode = #tpu.pipeline_mode<synchronous>, transform_indices = @transform_12, window_bounds = array<i64: 128, 32>}, {transform_indices = @transform_13, window_bounds = array<i64: 2, 8, 32>}]} {
    %c0 = arith.constant 0 : index
    %c0_0 = arith.constant 0 : index
    %0 = vector.load %arg3[%c0, %c0_0] : memref<1x32xf32, #tpu.memory_space<vmem>>, vector<1x32xf32>
    %c0_1 = arith.constant 0 : index
    %c0_2 = arith.constant 0 : index
    %1 = vector.load %arg4[%c0_1, %c0_2] : memref<1x32xf32, #tpu.memory_space<vmem>>, vector<1x32xf32>
    %c0_3 = arith.constant 0 : index
    %c0_4 = arith.constant 0 : index
    %2 = vector.load %arg5[%c0_3, %c0_4] : memref<1x32xf32, #tpu.memory_space<vmem>>, vector<1x32xf32>
    %c0_5 = arith.constant 0 : index
    %c0_6 = arith.constant 0 : index
    %3 = vector.load %arg12[%c0_5, %c0_6] : memref<1x128xf32, #tpu.memory_space<vmem>>, vector<1x128xf32>
    %c0_7 = arith.constant 0 : index
    %c0_8 = arith.constant 0 : index
    %4 = vector.load %arg6[%c0_7, %c0_8] : memref<32x96xf32, #tpu.memory_space<vmem>>, vector<32x96xf32>
    %c0_9 = arith.constant 0 : index
    %c0_10 = arith.constant 0 : index
    %5 = vector.load %arg7[%c0_9, %c0_10] : memref<32x32xf32, #tpu.memory_space<vmem>>, vector<32x32xf32>
    %c0_11 = arith.constant 0 : index
    %c0_12 = arith.constant 0 : index
    %6 = vector.load %arg8[%c0_11, %c0_12] : memref<32x32xf32, #tpu.memory_space<vmem>>, vector<32x32xf32>
    %c0_13 = arith.constant 0 : index
    %c0_14 = arith.constant 0 : index
    %7 = vector.load %arg9[%c0_13, %c0_14] : memref<32x64xf32, #tpu.memory_space<vmem>>, vector<32x64xf32>
    %c0_15 = arith.constant 0 : index
    %c0_16 = arith.constant 0 : index
    %8 = vector.load %arg10[%c0_15, %c0_16] : memref<32x32xf32, #tpu.memory_space<vmem>>, vector<32x32xf32>
    %c0_17 = arith.constant 0 : index
    %c0_18 = arith.constant 0 : index
    %9 = vector.load %arg11[%c0_17, %c0_18] : memref<32x128xf32, #tpu.memory_space<vmem>>, vector<32x128xf32>
    %c0_19 = arith.constant 0 : index
    %c0_20 = arith.constant 0 : index
    %10 = vector.load %arg13[%c0_19, %c0_20] : memref<128x32xf32, #tpu.memory_space<vmem>>, vector<128x32xf32>
    %c0_21 = arith.constant 0 : index
    %c0_22 = arith.constant 0 : index
    %c0_23 = arith.constant 0 : index
    %11 = vector.load %arg1[%c0_21, %c0_22, %c0_23] : memref<2x8x32xf32, #tpu.memory_space<vmem>>, vector<2x8x32xf32>
    %12 = vector.shape_cast %11 : vector<2x8x32xf32> to vector<16x32xf32>
    %c0_24 = arith.constant 0 : index
    %c0_25 = arith.constant 0 : index
    %c0_26 = arith.constant 0 : index
    %13 = vector.load %arg2[%c0_24, %c0_25, %c0_26] : memref<2x16x32xf32, #tpu.memory_space<vmem>>, vector<2x16x32xf32>
    %14 = vector.shape_cast %13 : vector<2x16x32xf32> to vector<32x32xf32>
    %cst = arith.constant dense<0.000000e+00> : vector<16xf32>
    %15 = vector.multi_reduction <add>, %12, %cst [1] : vector<16x32xf32> to vector<16xf32>
    %16 = vector.shape_cast %15 : vector<16xf32> to vector<16x1xf32>
    %cst_27 = arith.constant 3.200000e+01 : f32
    %17 = vector.broadcast %cst_27 : f32 to vector<16x1xf32>
    %18 = arith.divf %16, %17 : vector<16x1xf32>
    %19 = vector.broadcast %18 : vector<16x1xf32> to vector<16x32xf32>
    %20 = arith.subf %12, %19 : vector<16x32xf32>
    %21 = arith.mulf %20, %20 : vector<16x32xf32>
    %cst_28 = arith.constant dense<0.000000e+00> : vector<16xf32>
    %22 = vector.multi_reduction <add>, %21, %cst_28 [1] : vector<16x32xf32> to vector<16xf32>
    %23 = vector.shape_cast %22 : vector<16xf32> to vector<16x1xf32>
    %cst_29 = arith.constant 3.200000e+01 : f32
    %24 = vector.broadcast %cst_29 : f32 to vector<16x1xf32>
    %25 = arith.divf %23, %24 : vector<16x1xf32>
    %cst_30 = arith.constant 9.99999974E-6 : f32
    %26 = vector.broadcast %cst_30 : f32 to vector<16x1xf32>
    %27 = arith.addf %25, %26 : vector<16x1xf32>
    %28 = math.rsqrt %27 : vector<16x1xf32>
    %29 = vector.broadcast %28 : vector<16x1xf32> to vector<16x32xf32>
    %30 = arith.mulf %20, %29 : vector<16x32xf32>
    %31 = vector.broadcast %0 : vector<1x32xf32> to vector<16x32xf32>
    %32 = arith.mulf %30, %31 : vector<16x32xf32>
    %cst_31 = arith.constant dense<0.000000e+00> : vector<16x96xf32>
    %33 = tpu.matmul %32, %4, %cst_31 {dimension_numbers = #tpu.dot_dimension_numbers<[1], [0], [0], [1], [0, 0, 1, 1], [], []>} : vector<16x32xf32>, vector<32x96xf32>, vector<16x96xf32> -> vector<16x96xf32>
    %34 = vector.extract_strided_slice %33 {offsets = [0, 0], sizes = [16, 32], strides = [1, 1]} : vector<16x96xf32> to vector<16x32xf32>
    %35 = vector.extract_strided_slice %33 {offsets = [0, 32], sizes = [16, 32], strides = [1, 1]} : vector<16x96xf32> to vector<16x32xf32>
    %36 = vector.extract_strided_slice %33 {offsets = [0, 64], sizes = [16, 32], strides = [1, 1]} : vector<16x96xf32> to vector<16x32xf32>
    %37 = vector.shape_cast %34 : vector<16x32xf32> to vector<2x8x32xf32>
    %38 = vector.shape_cast %35 : vector<16x32xf32> to vector<2x8x32xf32>
    %39 = vector.shape_cast %36 : vector<16x32xf32> to vector<2x8x32xf32>
    %cst_32 = arith.constant 0.000000e+00 : f32
    %40 = vector.broadcast %cst_32 : f32 to vector<16x32xf32>
    %41 = vector.extract_strided_slice %37 {offsets = [0, 0, 0], sizes = [2, 8, 8], strides = [1, 1, 1]} : vector<2x8x32xf32> to vector<2x8x8xf32>
    %42 = vector.extract_strided_slice %38 {offsets = [0, 0, 0], sizes = [2, 8, 8], strides = [1, 1, 1]} : vector<2x8x32xf32> to vector<2x8x8xf32>
    "tpu.trace_start"() <{level = 10 : i32, message = "bqd,bkd->bqk"}> : () -> ()
    %cst_33 = arith.constant dense<0.000000e+00> : vector<2x8x8xf32>
    %43 = tpu.matmul %41, %42, %cst_33 {dimension_numbers = #tpu.dot_dimension_numbers<[2], [2], [1], [1], [0, 0, 0, 1, 1, 1], [0], [0]>} : vector<2x8x8xf32>, vector<2x8x8xf32>, vector<2x8x8xf32> -> vector<2x8x8xf32>
    "tpu.trace_stop"() : () -> ()
    %cst_34 = arith.constant 0.353553385 : f32
    %44 = vector.broadcast %cst_34 : f32 to vector<2x8x8xf32>
    %45 = arith.mulf %43, %44 : vector<2x8x8xf32>
    %cst_35 = arith.constant dense<0xFF800000> : vector<2x8xf32>
    %46 = vector.multi_reduction <maximumf>, %45, %cst_35 [2] : vector<2x8x8xf32> to vector<2x8xf32>
    %47 = vector.shape_cast %46 : vector<2x8xf32> to vector<2x8x1xf32>
    %48 = vector.broadcast %47 : vector<2x8x1xf32> to vector<2x8x8xf32>
    %49 = arith.subf %45, %48 : vector<2x8x8xf32>
    %50 = math.exp %49 : vector<2x8x8xf32>
    %cst_36 = arith.constant dense<0.000000e+00> : vector<2x8xf32>
    %51 = vector.multi_reduction <add>, %50, %cst_36 [2] : vector<2x8x8xf32> to vector<2x8xf32>
    %52 = vector.shape_cast %51 : vector<2x8xf32> to vector<2x8x1xf32>
    %53 = tpu.reciprocal %52 {approx = true} : vector<2x8x1xf32> -> vector<2x8x1xf32>
    %54 = vector.broadcast %53 : vector<2x8x1xf32> to vector<2x8x8xf32>
    %55 = arith.mulf %50, %54 : vector<2x8x8xf32>
    %56 = vector.extract_strided_slice %39 {offsets = [0, 0, 0], sizes = [2, 8, 8], strides = [1, 1, 1]} : vector<2x8x32xf32> to vector<2x8x8xf32>
    "tpu.trace_start"() <{level = 10 : i32, message = "bqk,bkd->bqd"}> : () -> ()
    %cst_37 = arith.constant dense<0.000000e+00> : vector<2x8x8xf32>
    %57 = tpu.matmul %55, %56, %cst_37 {dimension_numbers = #tpu.dot_dimension_numbers<[2], [1], [1], [2], [0, 0, 0, 1, 1, 2], [0], [0]>} : vector<2x8x8xf32>, vector<2x8x8xf32>, vector<2x8x8xf32> -> vector<2x8x8xf32>
    "tpu.trace_stop"() : () -> ()
    %58 = vector.shape_cast %57 : vector<2x8x8xf32> to vector<16x8xf32>
    %59 = vector.extract_strided_slice %5 {offsets = [0, 0], sizes = [8, 32], strides = [1, 1]} : vector<32x32xf32> to vector<8x32xf32>
    %cst_38 = arith.constant dense<0.000000e+00> : vector<16x32xf32>
    %60 = tpu.matmul %58, %59, %cst_38 {dimension_numbers = #tpu.dot_dimension_numbers<[1], [0], [0], [1], [0, 0, 1, 1], [], []>} : vector<16x8xf32>, vector<8x32xf32>, vector<16x32xf32> -> vector<16x32xf32>
    %61 = arith.addf %40, %60 : vector<16x32xf32>
    %62 = vector.extract_strided_slice %37 {offsets = [0, 0, 8], sizes = [2, 8, 8], strides = [1, 1, 1]} : vector<2x8x32xf32> to vector<2x8x8xf32>
    %63 = vector.extract_strided_slice %38 {offsets = [0, 0, 8], sizes = [2, 8, 8], strides = [1, 1, 1]} : vector<2x8x32xf32> to vector<2x8x8xf32>
    "tpu.trace_start"() <{level = 10 : i32, message = "bqd,bkd->bqk"}> : () -> ()
    %cst_39 = arith.constant dense<0.000000e+00> : vector<2x8x8xf32>
    %64 = tpu.matmul %62, %63, %cst_39 {dimension_numbers = #tpu.dot_dimension_numbers<[2], [2], [1], [1], [0, 0, 0, 1, 1, 1], [0], [0]>} : vector<2x8x8xf32>, vector<2x8x8xf32>, vector<2x8x8xf32> -> vector<2x8x8xf32>
    "tpu.trace_stop"() : () -> ()
    %cst_40 = arith.constant 0.353553385 : f32
    %65 = vector.broadcast %cst_40 : f32 to vector<2x8x8xf32>
    %66 = arith.mulf %64, %65 : vector<2x8x8xf32>
    %cst_41 = arith.constant dense<0xFF800000> : vector<2x8xf32>
    %67 = vector.multi_reduction <maximumf>, %66, %cst_41 [2] : vector<2x8x8xf32> to vector<2x8xf32>
    %68 = vector.shape_cast %67 : vector<2x8xf32> to vector<2x8x1xf32>
    %69 = vector.broadcast %68 : vector<2x8x1xf32> to vector<2x8x8xf32>
    %70 = arith.subf %66, %69 : vector<2x8x8xf32>
    %71 = math.exp %70 : vector<2x8x8xf32>
    %cst_42 = arith.constant dense<0.000000e+00> : vector<2x8xf32>
    %72 = vector.multi_reduction <add>, %71, %cst_42 [2] : vector<2x8x8xf32> to vector<2x8xf32>
    %73 = vector.shape_cast %72 : vector<2x8xf32> to vector<2x8x1xf32>
    %74 = tpu.reciprocal %73 {approx = true} : vector<2x8x1xf32> -> vector<2x8x1xf32>
    %75 = vector.broadcast %74 : vector<2x8x1xf32> to vector<2x8x8xf32>
    %76 = arith.mulf %71, %75 : vector<2x8x8xf32>
    %77 = vector.extract_strided_slice %39 {offsets = [0, 0, 8], sizes = [2, 8, 8], strides = [1, 1, 1]} : vector<2x8x32xf32> to vector<2x8x8xf32>
    "tpu.trace_start"() <{level = 10 : i32, message = "bqk,bkd->bqd"}> : () -> ()
    %cst_43 = arith.constant dense<0.000000e+00> : vector<2x8x8xf32>
    %78 = tpu.matmul %76, %77, %cst_43 {dimension_numbers = #tpu.dot_dimension_numbers<[2], [1], [1], [2], [0, 0, 0, 1, 1, 2], [0], [0]>} : vector<2x8x8xf32>, vector<2x8x8xf32>, vector<2x8x8xf32> -> vector<2x8x8xf32>
    "tpu.trace_stop"() : () -> ()
    %79 = vector.shape_cast %78 : vector<2x8x8xf32> to vector<16x8xf32>
    %80 = vector.extract_strided_slice %5 {offsets = [8, 0], sizes = [8, 32], strides = [1, 1]} : vector<32x32xf32> to vector<8x32xf32>
    %cst_44 = arith.constant dense<0.000000e+00> : vector<16x32xf32>
    %81 = tpu.matmul %79, %80, %cst_44 {dimension_numbers = #tpu.dot_dimension_numbers<[1], [0], [0], [1], [0, 0, 1, 1], [], []>} : vector<16x8xf32>, vector<8x32xf32>, vector<16x32xf32> -> vector<16x32xf32>
    %82 = arith.addf %61, %81 : vector<16x32xf32>
    %83 = vector.extract_strided_slice %37 {offsets = [0, 0, 16], sizes = [2, 8, 8], strides = [1, 1, 1]} : vector<2x8x32xf32> to vector<2x8x8xf32>
    %84 = vector.extract_strided_slice %38 {offsets = [0, 0, 16], sizes = [2, 8, 8], strides = [1, 1, 1]} : vector<2x8x32xf32> to vector<2x8x8xf32>
    "tpu.trace_start"() <{level = 10 : i32, message = "bqd,bkd->bqk"}> : () -> ()
    %cst_45 = arith.constant dense<0.000000e+00> : vector<2x8x8xf32>
    %85 = tpu.matmul %83, %84, %cst_45 {dimension_numbers = #tpu.dot_dimension_numbers<[2], [2], [1], [1], [0, 0, 0, 1, 1, 1], [0], [0]>} : vector<2x8x8xf32>, vector<2x8x8xf32>, vector<2x8x8xf32> -> vector<2x8x8xf32>
    "tpu.trace_stop"() : () -> ()
    %cst_46 = arith.constant 0.353553385 : f32
    %86 = vector.broadcast %cst_46 : f32 to vector<2x8x8xf32>
    %87 = arith.mulf %85, %86 : vector<2x8x8xf32>
    %cst_47 = arith.constant dense<0xFF800000> : vector<2x8xf32>
    %88 = vector.multi_reduction <maximumf>, %87, %cst_47 [2] : vector<2x8x8xf32> to vector<2x8xf32>
    %89 = vector.shape_cast %88 : vector<2x8xf32> to vector<2x8x1xf32>
    %90 = vector.broadcast %89 : vector<2x8x1xf32> to vector<2x8x8xf32>
    %91 = arith.subf %87, %90 : vector<2x8x8xf32>
    %92 = math.exp %91 : vector<2x8x8xf32>
    %cst_48 = arith.constant dense<0.000000e+00> : vector<2x8xf32>
    %93 = vector.multi_reduction <add>, %92, %cst_48 [2] : vector<2x8x8xf32> to vector<2x8xf32>
    %94 = vector.shape_cast %93 : vector<2x8xf32> to vector<2x8x1xf32>
    %95 = tpu.reciprocal %94 {approx = true} : vector<2x8x1xf32> -> vector<2x8x1xf32>
    %96 = vector.broadcast %95 : vector<2x8x1xf32> to vector<2x8x8xf32>
    %97 = arith.mulf %92, %96 : vector<2x8x8xf32>
    %98 = vector.extract_strided_slice %39 {offsets = [0, 0, 16], sizes = [2, 8, 8], strides = [1, 1, 1]} : vector<2x8x32xf32> to vector<2x8x8xf32>
    "tpu.trace_start"() <{level = 10 : i32, message = "bqk,bkd->bqd"}> : () -> ()
    %cst_49 = arith.constant dense<0.000000e+00> : vector<2x8x8xf32>
    %99 = tpu.matmul %97, %98, %cst_49 {dimension_numbers = #tpu.dot_dimension_numbers<[2], [1], [1], [2], [0, 0, 0, 1, 1, 2], [0], [0]>} : vector<2x8x8xf32>, vector<2x8x8xf32>, vector<2x8x8xf32> -> vector<2x8x8xf32>
    "tpu.trace_stop"() : () -> ()
    %100 = vector.shape_cast %99 : vector<2x8x8xf32> to vector<16x8xf32>
    %101 = vector.extract_strided_slice %5 {offsets = [16, 0], sizes = [8, 32], strides = [1, 1]} : vector<32x32xf32> to vector<8x32xf32>
    %cst_50 = arith.constant dense<0.000000e+00> : vector<16x32xf32>
    %102 = tpu.matmul %100, %101, %cst_50 {dimension_numbers = #tpu.dot_dimension_numbers<[1], [0], [0], [1], [0, 0, 1, 1], [], []>} : vector<16x8xf32>, vector<8x32xf32>, vector<16x32xf32> -> vector<16x32xf32>
    %103 = arith.addf %82, %102 : vector<16x32xf32>
    %104 = vector.extract_strided_slice %37 {offsets = [0, 0, 24], sizes = [2, 8, 8], strides = [1, 1, 1]} : vector<2x8x32xf32> to vector<2x8x8xf32>
    %105 = vector.extract_strided_slice %38 {offsets = [0, 0, 24], sizes = [2, 8, 8], strides = [1, 1, 1]} : vector<2x8x32xf32> to vector<2x8x8xf32>
    "tpu.trace_start"() <{level = 10 : i32, message = "bqd,bkd->bqk"}> : () -> ()
    %cst_51 = arith.constant dense<0.000000e+00> : vector<2x8x8xf32>
    %106 = tpu.matmul %104, %105, %cst_51 {dimension_numbers = #tpu.dot_dimension_numbers<[2], [2], [1], [1], [0, 0, 0, 1, 1, 1], [0], [0]>} : vector<2x8x8xf32>, vector<2x8x8xf32>, vector<2x8x8xf32> -> vector<2x8x8xf32>
    "tpu.trace_stop"() : () -> ()
    %cst_52 = arith.constant 0.353553385 : f32
    %107 = vector.broadcast %cst_52 : f32 to vector<2x8x8xf32>
    %108 = arith.mulf %106, %107 : vector<2x8x8xf32>
    %cst_53 = arith.constant dense<0xFF800000> : vector<2x8xf32>
    %109 = vector.multi_reduction <maximumf>, %108, %cst_53 [2] : vector<2x8x8xf32> to vector<2x8xf32>
    %110 = vector.shape_cast %109 : vector<2x8xf32> to vector<2x8x1xf32>
    %111 = vector.broadcast %110 : vector<2x8x1xf32> to vector<2x8x8xf32>
    %112 = arith.subf %108, %111 : vector<2x8x8xf32>
    %113 = math.exp %112 : vector<2x8x8xf32>
    %cst_54 = arith.constant dense<0.000000e+00> : vector<2x8xf32>
    %114 = vector.multi_reduction <add>, %113, %cst_54 [2] : vector<2x8x8xf32> to vector<2x8xf32>
    %115 = vector.shape_cast %114 : vector<2x8xf32> to vector<2x8x1xf32>
    %116 = tpu.reciprocal %115 {approx = true} : vector<2x8x1xf32> -> vector<2x8x1xf32>
    %117 = vector.broadcast %116 : vector<2x8x1xf32> to vector<2x8x8xf32>
    %118 = arith.mulf %113, %117 : vector<2x8x8xf32>
    %119 = vector.extract_strided_slice %39 {offsets = [0, 0, 24], sizes = [2, 8, 8], strides = [1, 1, 1]} : vector<2x8x32xf32> to vector<2x8x8xf32>
    "tpu.trace_start"() <{level = 10 : i32, message = "bqk,bkd->bqd"}> : () -> ()
    %cst_55 = arith.constant dense<0.000000e+00> : vector<2x8x8xf32>
    %120 = tpu.matmul %118, %119, %cst_55 {dimension_numbers = #tpu.dot_dimension_numbers<[2], [1], [1], [2], [0, 0, 0, 1, 1, 2], [0], [0]>} : vector<2x8x8xf32>, vector<2x8x8xf32>, vector<2x8x8xf32> -> vector<2x8x8xf32>
    "tpu.trace_stop"() : () -> ()
    %121 = vector.shape_cast %120 : vector<2x8x8xf32> to vector<16x8xf32>
    %122 = vector.extract_strided_slice %5 {offsets = [24, 0], sizes = [8, 32], strides = [1, 1]} : vector<32x32xf32> to vector<8x32xf32>
    %cst_56 = arith.constant dense<0.000000e+00> : vector<16x32xf32>
    %123 = tpu.matmul %121, %122, %cst_56 {dimension_numbers = #tpu.dot_dimension_numbers<[1], [0], [0], [1], [0, 0, 1, 1], [], []>} : vector<16x8xf32>, vector<8x32xf32>, vector<16x32xf32> -> vector<16x32xf32>
    %124 = arith.addf %103, %123 : vector<16x32xf32>
    %125 = arith.addf %124, %32 : vector<16x32xf32>
    %cst_57 = arith.constant dense<0.000000e+00> : vector<16xf32>
    %126 = vector.multi_reduction <add>, %125, %cst_57 [1] : vector<16x32xf32> to vector<16xf32>
    %127 = vector.shape_cast %126 : vector<16xf32> to vector<16x1xf32>
    %cst_58 = arith.constant 3.200000e+01 : f32
    %128 = vector.broadcast %cst_58 : f32 to vector<16x1xf32>
    %129 = arith.divf %127, %128 : vector<16x1xf32>
    %130 = vector.broadcast %129 : vector<16x1xf32> to vector<16x32xf32>
    %131 = arith.subf %125, %130 : vector<16x32xf32>
    %132 = arith.mulf %131, %131 : vector<16x32xf32>
    %cst_59 = arith.constant dense<0.000000e+00> : vector<16xf32>
    %133 = vector.multi_reduction <add>, %132, %cst_59 [1] : vector<16x32xf32> to vector<16xf32>
    %134 = vector.shape_cast %133 : vector<16xf32> to vector<16x1xf32>
    %cst_60 = arith.constant 3.200000e+01 : f32
    %135 = vector.broadcast %cst_60 : f32 to vector<16x1xf32>
    %136 = arith.divf %134, %135 : vector<16x1xf32>
    %cst_61 = arith.constant 9.99999974E-6 : f32
    %137 = vector.broadcast %cst_61 : f32 to vector<16x1xf32>
    %138 = arith.addf %136, %137 : vector<16x1xf32>
    %139 = math.rsqrt %138 : vector<16x1xf32>
    %140 = vector.broadcast %139 : vector<16x1xf32> to vector<16x32xf32>
    %141 = arith.mulf %131, %140 : vector<16x32xf32>
    %142 = vector.broadcast %1 : vector<1x32xf32> to vector<16x32xf32>
    %143 = arith.mulf %141, %142 : vector<16x32xf32>
    %cst_62 = arith.constant dense<0.000000e+00> : vector<16x32xf32>
    %144 = tpu.matmul %143, %6, %cst_62 {dimension_numbers = #tpu.dot_dimension_numbers<[1], [0], [0], [1], [0, 0, 1, 1], [], []>} : vector<16x32xf32>, vector<32x32xf32>, vector<16x32xf32> -> vector<16x32xf32>
    %cst_63 = arith.constant dense<0.000000e+00> : vector<32x64xf32>
    %145 = tpu.matmul %14, %7, %cst_63 {dimension_numbers = #tpu.dot_dimension_numbers<[1], [0], [0], [1], [0, 0, 1, 1], [], []>} : vector<32x32xf32>, vector<32x64xf32>, vector<32x64xf32> -> vector<32x64xf32>
    %146 = vector.extract_strided_slice %145 {offsets = [0, 0], sizes = [32, 32], strides = [1, 1]} : vector<32x64xf32> to vector<32x32xf32>
    %147 = vector.extract_strided_slice %145 {offsets = [0, 32], sizes = [32, 32], strides = [1, 1]} : vector<32x64xf32> to vector<32x32xf32>
    %148 = vector.shape_cast %144 : vector<16x32xf32> to vector<2x8x32xf32>
    %149 = vector.shape_cast %146 : vector<32x32xf32> to vector<2x16x32xf32>
    %150 = vector.shape_cast %147 : vector<32x32xf32> to vector<2x16x32xf32>
    %cst_64 = arith.constant 0.000000e+00 : f32
    %151 = vector.broadcast %cst_64 : f32 to vector<16x32xf32>
    %152 = vector.extract_strided_slice %148 {offsets = [0, 0, 0], sizes = [2, 8, 8], strides = [1, 1, 1]} : vector<2x8x32xf32> to vector<2x8x8xf32>
    %153 = vector.extract_strided_slice %149 {offsets = [0, 0, 0], sizes = [2, 16, 8], strides = [1, 1, 1]} : vector<2x16x32xf32> to vector<2x16x8xf32>
    "tpu.trace_start"() <{level = 10 : i32, message = "bqd,bkd->bqk"}> : () -> ()
    %cst_65 = arith.constant dense<0.000000e+00> : vector<2x8x16xf32>
    %154 = tpu.matmul %152, %153, %cst_65 {dimension_numbers = #tpu.dot_dimension_numbers<[2], [2], [1], [1], [0, 0, 0, 1, 1, 1], [0], [0]>} : vector<2x8x8xf32>, vector<2x16x8xf32>, vector<2x8x16xf32> -> vector<2x8x16xf32>
    "tpu.trace_stop"() : () -> ()
    %cst_66 = arith.constant 0.353553385 : f32
    %155 = vector.broadcast %cst_66 : f32 to vector<2x8x16xf32>
    %156 = arith.mulf %154, %155 : vector<2x8x16xf32>
    %cst_67 = arith.constant dense<0xFF800000> : vector<2x8xf32>
    %157 = vector.multi_reduction <maximumf>, %156, %cst_67 [2] : vector<2x8x16xf32> to vector<2x8xf32>
    %158 = vector.shape_cast %157 : vector<2x8xf32> to vector<2x8x1xf32>
    %159 = vector.broadcast %158 : vector<2x8x1xf32> to vector<2x8x16xf32>
    %160 = arith.subf %156, %159 : vector<2x8x16xf32>
    %161 = math.exp %160 : vector<2x8x16xf32>
    %cst_68 = arith.constant dense<0.000000e+00> : vector<2x8xf32>
    %162 = vector.multi_reduction <add>, %161, %cst_68 [2] : vector<2x8x16xf32> to vector<2x8xf32>
    %163 = vector.shape_cast %162 : vector<2x8xf32> to vector<2x8x1xf32>
    %164 = tpu.reciprocal %163 {approx = true} : vector<2x8x1xf32> -> vector<2x8x1xf32>
    %165 = vector.broadcast %164 : vector<2x8x1xf32> to vector<2x8x16xf32>
    %166 = arith.mulf %161, %165 : vector<2x8x16xf32>
    %167 = vector.extract_strided_slice %150 {offsets = [0, 0, 0], sizes = [2, 16, 8], strides = [1, 1, 1]} : vector<2x16x32xf32> to vector<2x16x8xf32>
    "tpu.trace_start"() <{level = 10 : i32, message = "bqk,bkd->bqd"}> : () -> ()
    %cst_69 = arith.constant dense<0.000000e+00> : vector<2x8x8xf32>
    %168 = tpu.matmul %166, %167, %cst_69 {dimension_numbers = #tpu.dot_dimension_numbers<[2], [1], [1], [2], [0, 0, 0, 1, 1, 2], [0], [0]>} : vector<2x8x16xf32>, vector<2x16x8xf32>, vector<2x8x8xf32> -> vector<2x8x8xf32>
    "tpu.trace_stop"() : () -> ()
    %169 = vector.shape_cast %168 : vector<2x8x8xf32> to vector<16x8xf32>
    %170 = vector.extract_strided_slice %8 {offsets = [0, 0], sizes = [8, 32], strides = [1, 1]} : vector<32x32xf32> to vector<8x32xf32>
    %cst_70 = arith.constant dense<0.000000e+00> : vector<16x32xf32>
    %171 = tpu.matmul %169, %170, %cst_70 {dimension_numbers = #tpu.dot_dimension_numbers<[1], [0], [0], [1], [0, 0, 1, 1], [], []>} : vector<16x8xf32>, vector<8x32xf32>, vector<16x32xf32> -> vector<16x32xf32>
    %172 = arith.addf %151, %171 : vector<16x32xf32>
    %173 = vector.extract_strided_slice %148 {offsets = [0, 0, 8], sizes = [2, 8, 8], strides = [1, 1, 1]} : vector<2x8x32xf32> to vector<2x8x8xf32>
    %174 = vector.extract_strided_slice %149 {offsets = [0, 0, 8], sizes = [2, 16, 8], strides = [1, 1, 1]} : vector<2x16x32xf32> to vector<2x16x8xf32>
    "tpu.trace_start"() <{level = 10 : i32, message = "bqd,bkd->bqk"}> : () -> ()
    %cst_71 = arith.constant dense<0.000000e+00> : vector<2x8x16xf32>
    %175 = tpu.matmul %173, %174, %cst_71 {dimension_numbers = #tpu.dot_dimension_numbers<[2], [2], [1], [1], [0, 0, 0, 1, 1, 1], [0], [0]>} : vector<2x8x8xf32>, vector<2x16x8xf32>, vector<2x8x16xf32> -> vector<2x8x16xf32>
    "tpu.trace_stop"() : () -> ()
    %cst_72 = arith.constant 0.353553385 : f32
    %176 = vector.broadcast %cst_72 : f32 to vector<2x8x16xf32>
    %177 = arith.mulf %175, %176 : vector<2x8x16xf32>
    %cst_73 = arith.constant dense<0xFF800000> : vector<2x8xf32>
    %178 = vector.multi_reduction <maximumf>, %177, %cst_73 [2] : vector<2x8x16xf32> to vector<2x8xf32>
    %179 = vector.shape_cast %178 : vector<2x8xf32> to vector<2x8x1xf32>
    %180 = vector.broadcast %179 : vector<2x8x1xf32> to vector<2x8x16xf32>
    %181 = arith.subf %177, %180 : vector<2x8x16xf32>
    %182 = math.exp %181 : vector<2x8x16xf32>
    %cst_74 = arith.constant dense<0.000000e+00> : vector<2x8xf32>
    %183 = vector.multi_reduction <add>, %182, %cst_74 [2] : vector<2x8x16xf32> to vector<2x8xf32>
    %184 = vector.shape_cast %183 : vector<2x8xf32> to vector<2x8x1xf32>
    %185 = tpu.reciprocal %184 {approx = true} : vector<2x8x1xf32> -> vector<2x8x1xf32>
    %186 = vector.broadcast %185 : vector<2x8x1xf32> to vector<2x8x16xf32>
    %187 = arith.mulf %182, %186 : vector<2x8x16xf32>
    %188 = vector.extract_strided_slice %150 {offsets = [0, 0, 8], sizes = [2, 16, 8], strides = [1, 1, 1]} : vector<2x16x32xf32> to vector<2x16x8xf32>
    "tpu.trace_start"() <{level = 10 : i32, message = "bqk,bkd->bqd"}> : () -> ()
    %cst_75 = arith.constant dense<0.000000e+00> : vector<2x8x8xf32>
    %189 = tpu.matmul %187, %188, %cst_75 {dimension_numbers = #tpu.dot_dimension_numbers<[2], [1], [1], [2], [0, 0, 0, 1, 1, 2], [0], [0]>} : vector<2x8x16xf32>, vector<2x16x8xf32>, vector<2x8x8xf32> -> vector<2x8x8xf32>
    "tpu.trace_stop"() : () -> ()
    %190 = vector.shape_cast %189 : vector<2x8x8xf32> to vector<16x8xf32>
    %191 = vector.extract_strided_slice %8 {offsets = [8, 0], sizes = [8, 32], strides = [1, 1]} : vector<32x32xf32> to vector<8x32xf32>
    %cst_76 = arith.constant dense<0.000000e+00> : vector<16x32xf32>
    %192 = tpu.matmul %190, %191, %cst_76 {dimension_numbers = #tpu.dot_dimension_numbers<[1], [0], [0], [1], [0, 0, 1, 1], [], []>} : vector<16x8xf32>, vector<8x32xf32>, vector<16x32xf32> -> vector<16x32xf32>
    %193 = arith.addf %172, %192 : vector<16x32xf32>
    %194 = vector.extract_strided_slice %148 {offsets = [0, 0, 16], sizes = [2, 8, 8], strides = [1, 1, 1]} : vector<2x8x32xf32> to vector<2x8x8xf32>
    %195 = vector.extract_strided_slice %149 {offsets = [0, 0, 16], sizes = [2, 16, 8], strides = [1, 1, 1]} : vector<2x16x32xf32> to vector<2x16x8xf32>
    "tpu.trace_start"() <{level = 10 : i32, message = "bqd,bkd->bqk"}> : () -> ()
    %cst_77 = arith.constant dense<0.000000e+00> : vector<2x8x16xf32>
    %196 = tpu.matmul %194, %195, %cst_77 {dimension_numbers = #tpu.dot_dimension_numbers<[2], [2], [1], [1], [0, 0, 0, 1, 1, 1], [0], [0]>} : vector<2x8x8xf32>, vector<2x16x8xf32>, vector<2x8x16xf32> -> vector<2x8x16xf32>
    "tpu.trace_stop"() : () -> ()
    %cst_78 = arith.constant 0.353553385 : f32
    %197 = vector.broadcast %cst_78 : f32 to vector<2x8x16xf32>
    %198 = arith.mulf %196, %197 : vector<2x8x16xf32>
    %cst_79 = arith.constant dense<0xFF800000> : vector<2x8xf32>
    %199 = vector.multi_reduction <maximumf>, %198, %cst_79 [2] : vector<2x8x16xf32> to vector<2x8xf32>
    %200 = vector.shape_cast %199 : vector<2x8xf32> to vector<2x8x1xf32>
    %201 = vector.broadcast %200 : vector<2x8x1xf32> to vector<2x8x16xf32>
    %202 = arith.subf %198, %201 : vector<2x8x16xf32>
    %203 = math.exp %202 : vector<2x8x16xf32>
    %cst_80 = arith.constant dense<0.000000e+00> : vector<2x8xf32>
    %204 = vector.multi_reduction <add>, %203, %cst_80 [2] : vector<2x8x16xf32> to vector<2x8xf32>
    %205 = vector.shape_cast %204 : vector<2x8xf32> to vector<2x8x1xf32>
    %206 = tpu.reciprocal %205 {approx = true} : vector<2x8x1xf32> -> vector<2x8x1xf32>
    %207 = vector.broadcast %206 : vector<2x8x1xf32> to vector<2x8x16xf32>
    %208 = arith.mulf %203, %207 : vector<2x8x16xf32>
    %209 = vector.extract_strided_slice %150 {offsets = [0, 0, 16], sizes = [2, 16, 8], strides = [1, 1, 1]} : vector<2x16x32xf32> to vector<2x16x8xf32>
    "tpu.trace_start"() <{level = 10 : i32, message = "bqk,bkd->bqd"}> : () -> ()
    %cst_81 = arith.constant dense<0.000000e+00> : vector<2x8x8xf32>
    %210 = tpu.matmul %208, %209, %cst_81 {dimension_numbers = #tpu.dot_dimension_numbers<[2], [1], [1], [2], [0, 0, 0, 1, 1, 2], [0], [0]>} : vector<2x8x16xf32>, vector<2x16x8xf32>, vector<2x8x8xf32> -> vector<2x8x8xf32>
    "tpu.trace_stop"() : () -> ()
    %211 = vector.shape_cast %210 : vector<2x8x8xf32> to vector<16x8xf32>
    %212 = vector.extract_strided_slice %8 {offsets = [16, 0], sizes = [8, 32], strides = [1, 1]} : vector<32x32xf32> to vector<8x32xf32>
    %cst_82 = arith.constant dense<0.000000e+00> : vector<16x32xf32>
    %213 = tpu.matmul %211, %212, %cst_82 {dimension_numbers = #tpu.dot_dimension_numbers<[1], [0], [0], [1], [0, 0, 1, 1], [], []>} : vector<16x8xf32>, vector<8x32xf32>, vector<16x32xf32> -> vector<16x32xf32>
    %214 = arith.addf %193, %213 : vector<16x32xf32>
    %215 = vector.extract_strided_slice %148 {offsets = [0, 0, 24], sizes = [2, 8, 8], strides = [1, 1, 1]} : vector<2x8x32xf32> to vector<2x8x8xf32>
    %216 = vector.extract_strided_slice %149 {offsets = [0, 0, 24], sizes = [2, 16, 8], strides = [1, 1, 1]} : vector<2x16x32xf32> to vector<2x16x8xf32>
    "tpu.trace_start"() <{level = 10 : i32, message = "bqd,bkd->bqk"}> : () -> ()
    %cst_83 = arith.constant dense<0.000000e+00> : vector<2x8x16xf32>
    %217 = tpu.matmul %215, %216, %cst_83 {dimension_numbers = #tpu.dot_dimension_numbers<[2], [2], [1], [1], [0, 0, 0, 1, 1, 1], [0], [0]>} : vector<2x8x8xf32>, vector<2x16x8xf32>, vector<2x8x16xf32> -> vector<2x8x16xf32>
    "tpu.trace_stop"() : () -> ()
    %cst_84 = arith.constant 0.353553385 : f32
    %218 = vector.broadcast %cst_84 : f32 to vector<2x8x16xf32>
    %219 = arith.mulf %217, %218 : vector<2x8x16xf32>
    %cst_85 = arith.constant dense<0xFF800000> : vector<2x8xf32>
    %220 = vector.multi_reduction <maximumf>, %219, %cst_85 [2] : vector<2x8x16xf32> to vector<2x8xf32>
    %221 = vector.shape_cast %220 : vector<2x8xf32> to vector<2x8x1xf32>
    %222 = vector.broadcast %221 : vector<2x8x1xf32> to vector<2x8x16xf32>
    %223 = arith.subf %219, %222 : vector<2x8x16xf32>
    %224 = math.exp %223 : vector<2x8x16xf32>
    %cst_86 = arith.constant dense<0.000000e+00> : vector<2x8xf32>
    %225 = vector.multi_reduction <add>, %224, %cst_86 [2] : vector<2x8x16xf32> to vector<2x8xf32>
    %226 = vector.shape_cast %225 : vector<2x8xf32> to vector<2x8x1xf32>
    %227 = tpu.reciprocal %226 {approx = true} : vector<2x8x1xf32> -> vector<2x8x1xf32>
    %228 = vector.broadcast %227 : vector<2x8x1xf32> to vector<2x8x16xf32>
    %229 = arith.mulf %224, %228 : vector<2x8x16xf32>
    %230 = vector.extract_strided_slice %150 {offsets = [0, 0, 24], sizes = [2, 16, 8], strides = [1, 1, 1]} : vector<2x16x32xf32> to vector<2x16x8xf32>
    "tpu.trace_start"() <{level = 10 : i32, message = "bqk,bkd->bqd"}> : () -> ()
    %cst_87 = arith.constant dense<0.000000e+00> : vector<2x8x8xf32>
    %231 = tpu.matmul %229, %230, %cst_87 {dimension_numbers = #tpu.dot_dimension_numbers<[2], [1], [1], [2], [0, 0, 0, 1, 1, 2], [0], [0]>} : vector<2x8x16xf32>, vector<2x16x8xf32>, vector<2x8x8xf32> -> vector<2x8x8xf32>
    "tpu.trace_stop"() : () -> ()
    %232 = vector.shape_cast %231 : vector<2x8x8xf32> to vector<16x8xf32>
    %233 = vector.extract_strided_slice %8 {offsets = [24, 0], sizes = [8, 32], strides = [1, 1]} : vector<32x32xf32> to vector<8x32xf32>
    %cst_88 = arith.constant dense<0.000000e+00> : vector<16x32xf32>
    %234 = tpu.matmul %232, %233, %cst_88 {dimension_numbers = #tpu.dot_dimension_numbers<[1], [0], [0], [1], [0, 0, 1, 1], [], []>} : vector<16x8xf32>, vector<8x32xf32>, vector<16x32xf32> -> vector<16x32xf32>
    %235 = arith.addf %214, %234 : vector<16x32xf32>
    %236 = arith.addf %235, %125 : vector<16x32xf32>
    %cst_89 = arith.constant dense<0.000000e+00> : vector<16x128xf32>
    %237 = tpu.matmul %236, %9, %cst_89 {dimension_numbers = #tpu.dot_dimension_numbers<[1], [0], [0], [1], [0, 0, 1, 1], [], []>} : vector<16x32xf32>, vector<32x128xf32>, vector<16x128xf32> -> vector<16x128xf32>
    %cst_90 = arith.constant 5.000000e-01 : f32
    %238 = vector.broadcast %cst_90 : f32 to vector<16x128xf32>
    %239 = arith.mulf %238, %237 : vector<16x128xf32>
    %cst_91 = arith.constant 0.707106769 : f32
    %240 = vector.broadcast %cst_91 : f32 to vector<16x128xf32>
    %241 = arith.mulf %237, %240 : vector<16x128xf32>
    %242 = math.erf %241 : vector<16x128xf32>
    %cst_92 = arith.constant 1.000000e+00 : f32
    %243 = vector.broadcast %cst_92 : f32 to vector<16x128xf32>
    %244 = arith.addf %243, %242 : vector<16x128xf32>
    %245 = arith.mulf %239, %244 : vector<16x128xf32>
    %cst_93 = arith.constant dense<0.000000e+00> : vector<16xf32>
    %246 = vector.multi_reduction <add>, %245, %cst_93 [1] : vector<16x128xf32> to vector<16xf32>
    %247 = vector.shape_cast %246 : vector<16xf32> to vector<16x1xf32>
    %cst_94 = arith.constant 1.280000e+02 : f32
    %248 = vector.broadcast %cst_94 : f32 to vector<16x1xf32>
    %249 = arith.divf %247, %248 : vector<16x1xf32>
    %250 = vector.broadcast %249 : vector<16x1xf32> to vector<16x128xf32>
    %251 = arith.subf %245, %250 : vector<16x128xf32>
    %252 = arith.mulf %251, %251 : vector<16x128xf32>
    %cst_95 = arith.constant dense<0.000000e+00> : vector<16xf32>
    %253 = vector.multi_reduction <add>, %252, %cst_95 [1] : vector<16x128xf32> to vector<16xf32>
    %254 = vector.shape_cast %253 : vector<16xf32> to vector<16x1xf32>
    %cst_96 = arith.constant 1.280000e+02 : f32
    %255 = vector.broadcast %cst_96 : f32 to vector<16x1xf32>
    %256 = arith.divf %254, %255 : vector<16x1xf32>
    %cst_97 = arith.constant 9.99999974E-6 : f32
    %257 = vector.broadcast %cst_97 : f32 to vector<16x1xf32>
    %258 = arith.addf %256, %257 : vector<16x1xf32>
    %259 = math.rsqrt %258 : vector<16x1xf32>
    %260 = vector.broadcast %259 : vector<16x1xf32> to vector<16x128xf32>
    %261 = arith.mulf %251, %260 : vector<16x128xf32>
    %262 = vector.broadcast %3 : vector<1x128xf32> to vector<16x128xf32>
    %263 = arith.mulf %261, %262 : vector<16x128xf32>
    %cst_98 = arith.constant dense<0.000000e+00> : vector<16x32xf32>
    %264 = tpu.matmul %263, %10, %cst_98 {dimension_numbers = #tpu.dot_dimension_numbers<[1], [0], [0], [1], [0, 0, 1, 1], [], []>} : vector<16x128xf32>, vector<128x32xf32>, vector<16x32xf32> -> vector<16x32xf32>
    %265 = arith.addf %264, %236 : vector<16x32xf32>
    %cst_99 = arith.constant dense<0.000000e+00> : vector<16xf32>
    %266 = vector.multi_reduction <add>, %265, %cst_99 [1] : vector<16x32xf32> to vector<16xf32>
    %267 = vector.shape_cast %266 : vector<16xf32> to vector<16x1xf32>
    %cst_100 = arith.constant 3.200000e+01 : f32
    %268 = vector.broadcast %cst_100 : f32 to vector<16x1xf32>
    %269 = arith.divf %267, %268 : vector<16x1xf32>
    %270 = vector.broadcast %269 : vector<16x1xf32> to vector<16x32xf32>
    %271 = arith.subf %265, %270 : vector<16x32xf32>
    %272 = arith.mulf %271, %271 : vector<16x32xf32>
    %cst_101 = arith.constant dense<0.000000e+00> : vector<16xf32>
    %273 = vector.multi_reduction <add>, %272, %cst_101 [1] : vector<16x32xf32> to vector<16xf32>
    %274 = vector.shape_cast %273 : vector<16xf32> to vector<16x1xf32>
    %cst_102 = arith.constant 3.200000e+01 : f32
    %275 = vector.broadcast %cst_102 : f32 to vector<16x1xf32>
    %276 = arith.divf %274, %275 : vector<16x1xf32>
    %cst_103 = arith.constant 9.99999974E-6 : f32
    %277 = vector.broadcast %cst_103 : f32 to vector<16x1xf32>
    %278 = arith.addf %276, %277 : vector<16x1xf32>
    %279 = math.rsqrt %278 : vector<16x1xf32>
    %280 = vector.broadcast %279 : vector<16x1xf32> to vector<16x32xf32>
    %281 = arith.mulf %271, %280 : vector<16x32xf32>
    %282 = vector.broadcast %2 : vector<1x32xf32> to vector<16x32xf32>
    %283 = arith.mulf %281, %282 : vector<16x32xf32>
    %284 = vector.shape_cast %283 : vector<16x32xf32> to vector<2x8x32xf32>
    %c0_104 = arith.constant 0 : index
    %c0_105 = arith.constant 0 : index
    %c0_106 = arith.constant 0 : index
    %285 = vector.load %arg14[%c0_104, %c0_105, %c0_106] : memref<2x8x32xf32, #tpu.memory_space<vmem>>, vector<2x8x32xf32>
    tpu.vector_store %arg14[%c0_104, %c0_105, %c0_106], %284 {strides = array<i32>} : memref<2x8x32xf32, #tpu.memory_space<vmem>>, vector<2x8x32xf32>,
    return
  }
  func.func @transform_0(%arg0: i32) -> (i32, i32, i32) {
    %c0_i32 = arith.constant 0 : i32
    %c0_i32_0 = arith.constant 0 : i32
    %c0_i32_1 = arith.constant 0 : i32
    return %arg0, %c0_i32, %c0_i32_0 : i32, i32, i32
  }
  func.func @transform_1(%arg0: i32) -> (i32, i32, i32) {
    %c0_i32 = arith.constant 0 : i32
    %c0_i32_0 = arith.constant 0 : i32
    %c0_i32_1 = arith.constant 0 : i32
    return %arg0, %c0_i32, %c0_i32_0 : i32, i32, i32
  }
  func.func @transform_2(%arg0: i32) -> (i32, i32) {
    %c0_i32 = arith.constant 0 : i32
    %c0_i32_0 = arith.constant 0 : i32
    %c0_i32_1 = arith.constant 0 : i32
    return %c0_i32, %c0_i32_0 : i32, i32
  }
  func.func @transform_3(%arg0: i32) -> (i32, i32) {
    %c0_i32 = arith.constant 0 : i32
    %c0_i32_0 = arith.constant 0 : i32
    %c0_i32_1 = arith.constant 0 : i32
    return %c0_i32, %c0_i32_0 : i32, i32
  }
  func.func @transform_4(%arg0: i32) -> (i32, i32) {
    %c0_i32 = arith.constant 0 : i32
    %c0_i32_0 = arith.constant 0 : i32
    %c0_i32_1 = arith.constant 0 : i32
    return %c0_i32, %c0_i32_0 : i32, i32
  }
  func.func @transform_5(%arg0: i32) -> (i32, i32) {
    %c0_i32 = arith.constant 0 : i32
    %c0_i32_0 = arith.constant 0 : i32
    %c0_i32_1 = arith.constant 0 : i32
    return %c0_i32, %c0_i32_0 : i32, i32
  }
  func.func @transform_6(%arg0: i32) -> (i32, i32) {
    %c0_i32 = arith.constant 0 : i32
    %c0_i32_0 = arith.constant 0 : i32
    %c0_i32_1 = arith.constant 0 : i32
    return %c0_i32, %c0_i32_0 : i32, i32
  }
  func.func @transform_7(%arg0: i32) -> (i32, i32) {
    %c0_i32 = arith.constant 0 : i32
    %c0_i32_0 = arith.constant 0 : i32
    %c0_i32_1 = arith.constant 0 : i32
    return %c0_i32, %c0_i32_0 : i32, i32
  }
  func.func @transform_8(%arg0: i32) -> (i32, i32) {
    %c0_i32 = arith.constant 0 : i32
    %c0_i32_0 = arith.constant 0 : i32
    %c0_i32_1 = arith.constant 0 : i32
    return %c0_i32, %c0_i32_0 : i32, i32
  }
  func.func @transform_9(%arg0: i32) -> (i32, i32) {
    %c0_i32 = arith.constant 0 : i32
    %c0_i32_0 = arith.constant 0 : i32
    %c0_i32_1 = arith.constant 0 : i32
    return %c0_i32, %c0_i32_0 : i32, i32
  }
  func.func @transform_10(%arg0: i32) -> (i32, i32) {
    %c0_i32 = arith.constant 0 : i32
    %c0_i32_0 = arith.constant 0 : i32
    %c0_i32_1 = arith.constant 0 : i32
    return %c0_i32, %c0_i32_0 : i32, i32
  }
  func.func @transform_11(%arg0: i32) -> (i32, i32) {
    %c0_i32 = arith.constant 0 : i32
    %c0_i32_0 = arith.constant 0 : i32
    %c0_i32_1 = arith.constant 0 : i32
    return %c0_i32, %c0_i32_0 : i32, i32
  }
  func.func @transform_12(%arg0: i32) -> (i32, i32) {
    %c0_i32 = arith.constant 0 : i32
    %c0_i32_0 = arith.constant 0 : i32
    %c0_i32_1 = arith.constant 0 : i32
    return %c0_i32, %c0_i32_0 : i32, i32
  }
  func.func @transform_13(%arg0: i32) -> (i32, i32, i32) {
    %c0_i32 = arith.constant 0 : i32
    %c0_i32_0 = arith.constant 0 : i32
    %c0_i32_1 = arith.constant 0 : i32
    return %arg0, %c0_i32, %c0_i32_0 : i32, i32, i32
  }
}

</mosaic_0001>

<llo_original>
// kernel: tpu_custom_call.1
$region0: #{tpu_custom_call.1}
  #allocation0 [shape = 'u32[]', space=smem, size = 0x4, offset = 0x4, fixed_abs, tag = 'smem constant byte address 0x4 - core index']
  #allocation1 [shape = 'u32[144,128]{1,0:T(1,128)}', space=vmem, size = 0x12000, scoped, tag = 'internal scratch']
  %s0 = inlined_call_operand.vmem [shape: f32[4,8,32], index: 0, kind: input, shape index: {}]
  %s1 = inlined_call_operand.vmem [shape: f32[4,16,32], index: 1, kind: input, shape index: {}]
  %s2 = inlined_call_operand.vmem [shape: f32[1,32], index: 2, kind: input, shape index: {}]
  %s3 = inlined_call_operand.vmem [shape: f32[1,32], index: 3, kind: input, shape index: {}]
  %s4 = inlined_call_operand.hbm [shape: f32[1,32], index: 4, kind: input, shape index: {}]
  %s5 = inlined_call_operand.vmem [shape: f32[32,96], index: 5, kind: input, shape index: {}]
  %s6 = inlined_call_operand.vmem [shape: f32[32,32], index: 6, kind: input, shape index: {}]
  %s7 = inlined_call_operand.hbm [shape: f32[32,32], index: 7, kind: input, shape index: {}]
  %s8 = inlined_call_operand.hbm [shape: f32[32,64], index: 8, kind: input, shape index: {}]
  %s9 = inlined_call_operand.vmem [shape: f32[32,32], index: 9, kind: input, shape index: {}]
  %s10 = inlined_call_operand.hbm [shape: f32[32,128], index: 10, kind: input, shape index: {}]
  %s11 = inlined_call_operand.vmem [shape: f32[1,128], index: 11, kind: input, shape index: {}]
  %s12 = inlined_call_operand.vmem [shape: f32[128,32], index: 12, kind: input, shape index: {}]
  %s13 = inlined_call_operand.hbm [shape: f32[4,8,32], index: 13, kind: output, shape index: {}]
  %s14 = sld [smem:[#allocation0]]
  $region101: #{tpu_custom_call.1} parent=0
    _
  %s16 = ssub.s32 1, %s14
  %s17 = scalar_select 0, %s16, %s14
  $region1: #{tpu_custom_call.1} parent=0
    #allocation2 [shape = 'u8[512]{0}', space=vmem, size = 0x400, scoped, tag = 'input window, operand 4, single buffered']
    #allocation3 [shape = 's32[2]{0}', space=sflag, size = 0x8, scoped, tag = 'scoped memory for tpu_custom_call.1']
    #allocation4 [shape = 's32[2]{0}', space=sflag, size = 0x8, scoped, tag = 'scoped memory for tpu_custom_call.1']
    #allocation5 [shape = 'u8[16384]{0}', space=vmem, size = 0x4000, scoped, tag = 'input window, operand 7, single buffered']
    #allocation6 [shape = 's32[1]{0}', space=sflag, size = 0x4, scoped, tag = 'scoped memory for tpu_custom_call.1']
    #allocation7 [shape = 'u8[16384]{0}', space=vmem, size = 0x4000, scoped, tag = 'input window, operand 8, single buffered']
    #allocation8 [shape = 'u8[16384]{0}', space=vmem, size = 0x4000, scoped, tag = 'input window, operand 10, single buffered']
    #allocation9 [shape = 's32[1]{0}', space=sflag, size = 0x4, scoped, tag = 'scoped memory for tpu_custom_call.1']
    #allocation10 [shape = 'u8[16384]{0}', space=vmem, size = 0x4000, scoped, tag = 'output window, operand 0']
    %18 = vsyncpa [#allocation3], 0
    %19 = vsyncpa [#allocation6], 0
    %20 = vsyncpa [#allocation9], 0
    %21 = vsyncpa [#allocation4], 0
    %s22 = scalar_lea.sflag [#allocation4], 1
    %23 = vsyncpa %s22, 0
    loop: start=0, step=1, limit=4
    $region2: #{tpu_custom_call.1} parent=1 // loop_pre_header
      _
    $region3: #{tpu_custom_call.1} parent=1 // loop_header
      %s25 = sphi 0, %s29
      %p26 = scmp.ge.s32.totalorder %s25, 4
      %s35 = sphi 0, %s37
      %s38 = sphi 0, %s35
      %s39 = sphi 0, %s38
      %s55 = sphi 0, %s39
      %s61 = sphi 0, %s63
      %s64 = sphi 0, %s61
      %s65 = sphi 0, %s64
      %s81 = sphi 0, %s65
      %s85 = sphi 0, %s85
      %s87 = sphi 0, %s85
      %s88 = sphi 0, %s87
      %s102 = sphi 0, %s88
      %s106 = sphi 0, %s106
      %s108 = sphi 0, %s106
      %s109 = sphi 0, %s108
      %s123 = sphi 0, %s109
      %s127 = sphi 0, %s127
      %s129 = sphi 0, %s127
      %s130 = sphi 0, %s129
      %s144 = sphi 0, %s130
      %s148 = sphi 0, %s148
      %s150 = sphi 0, %s148
      %s151 = sphi 0, %s150
      %s165 = sphi 0, %s151
      %s169 = sphi 0, %s169
      %s171 = sphi 0, %s169
      %s172 = sphi 0, %s171
      %s186 = sphi 0, %s172
      %s190 = sphi 0, %s190
      %s192 = sphi 0, %s190
      %s193 = sphi 0, %s192
      %s207 = sphi 0, %s193
      %s211 = sphi 0, %s211
      %s213 = sphi 0, %s211
      %s214 = sphi 0, %s213
      %s228 = sphi 0, %s214
      %s232 = sphi 0, %s232
      %s234 = sphi 0, %s232
      %s235 = sphi 0, %s234
      %s249 = sphi 0, %s235
      %s253 = sphi 0, %s253
      %s255 = sphi 0, %s253
      %s256 = sphi 0, %s255
      %s270 = sphi 0, %s256
      %s274 = sphi 0, %s274
      %s276 = sphi 0, %s274
      %s277 = sphi 0, %s276
      %s291 = sphi 0, %s277
      %s295 = sphi 0, %s295
      %s297 = sphi 0, %s295
      %s298 = sphi 0, %s297
      %s312 = sphi 0, %s298
      %s318 = sphi 0, %s320
      %s321 = sphi 0, %s318
      %s322 = sphi 0, %s321
      %s338 = sphi 0, %s322
    $region4: #{tpu_custom_call.1} parent=1 // loop_header_branch
      %28 = sbr.rel (%p26) target = $region8
    $region5: #{tpu_custom_call.1} parent=1 // loop_body
      %s30 = ssub.s32 %s25, 1
      %s31 = ssub.s32 %s25, 2
      %s32 = sadd.s32 %s25, 1
      %s33 = ssub.s32 %s25, %s32
      %p34 = scmp.eq.s32.totalorder %s33, 0
      %s36 = sadd.s32 %s35, 1
      %s37 = scalar_select %p34, %s35, %s36
      %p40 = pneg %p34
      %p41 = scmp.eq.s32.totalorder %s25, 1
      %p42 = por %p40, %p41
      %p43 = scmp.ne.s32.totalorder %s35, %s38
      %p44 = scmp.eq.s32.totalorder %s25, 0
      %p45 = por %p43, %p44
      %p46 = scmp.ne.s32.totalorder %s35, %s38
      %p47 = scmp.eq.s32.totalorder %s30, 1
      %p48 = por %p46, %p47
      %p49 = scmp.ne.s32.totalorder %s38, %s39
      %p50 = scmp.eq.s32.totalorder %s30, 0
      %p51 = por %p49, %p50
      %p52 = scmp.ne.s32.totalorder %s38, %s39
      %p53 = scmp.eq.s32.totalorder %s31, 1
      %p54 = por %p52, %p53
      %p56 = scmp.ne.s32.totalorder %s39, %s55
      %p57 = scmp.eq.s32.totalorder %s31, 0
      %p58 = por %p56, %p57
      %s59 = ssub.s32 %s25, %s32
      %p60 = scmp.eq.s32.totalorder %s59, 0
      %s62 = sadd.s32 %s61, 1
      %s63 = scalar_select %p60, %s61, %s62
      %p66 = pneg %p60
      %p67 = scmp.eq.s32.totalorder %s25, 1
      %p68 = por %p66, %p67
      %p69 = scmp.ne.s32.totalorder %s61, %s64
      %p70 = scmp.eq.s32.totalorder %s25, 0
      %p71 = por %p69, %p70
      %p72 = scmp.ne.s32.totalorder %s61, %s64
      %p73 = scmp.eq.s32.totalorder %s30, 1
      %p74 = por %p72, %p73
      %p75 = scmp.ne.s32.totalorder %s64, %s65
      %p76 = scmp.eq.s32.totalorder %s30, 0
      %p77 = por %p75, %p76
      %p78 = scmp.ne.s32.totalorder %s64, %s65
      %p79 = scmp.eq.s32.totalorder %s31, 1
      %p80 = por %p78, %p79
      %p82 = scmp.ne.s32.totalorder %s65, %s81
      %p83 = scmp.eq.s32.totalorder %s31, 0
      %p84 = por %p82, %p83
      %s86 = sadd.s32 %s85, 1
      %p89 = scmp.eq.s32.totalorder %s25, 1
      %p90 = scmp.ne.s32.totalorder %s85, %s87
      %p91 = scmp.eq.s32.totalorder %s25, 0
      %p92 = por %p90, %p91
      %p93 = scmp.ne.s32.totalorder %s85, %s87
      %p94 = scmp.eq.s32.totalorder %s30, 1
      %p95 = por %p93, %p94
      %p96 = scmp.ne.s32.totalorder %s87, %s88
      %p97 = scmp.eq.s32.totalorder %s30, 0
      %p98 = por %p96, %p97
      %p99 = scmp.ne.s32.totalorder %s87, %s88
      %p100 = scmp.eq.s32.totalorder %s31, 1
      %p101 = por %p99, %p100
      %p103 = scmp.ne.s32.totalorder %s88, %s102
      %p104 = scmp.eq.s32.totalorder %s31, 0
      %p105 = por %p103, %p104
      %s107 = sadd.s32 %s106, 1
      %p110 = scmp.eq.s32.totalorder %s25, 1
      %p111 = scmp.ne.s32.totalorder %s106, %s108
      %p112 = scmp.eq.s32.totalorder %s25, 0
      %p113 = por %p111, %p112
      %p114 = scmp.ne.s32.totalorder %s106, %s108
      %p115 = scmp.eq.s32.totalorder %s30, 1
      %p116 = por %p114, %p115
      %p117 = scmp.ne.s32.totalorder %s108, %s109
      %p118 = scmp.eq.s32.totalorder %s30, 0
      %p119 = por %p117, %p118
      %p120 = scmp.ne.s32.totalorder %s108, %s109
      %p121 = scmp.eq.s32.totalorder %s31, 1
      %p122 = por %p120, %p121
      %p124 = scmp.ne.s32.totalorder %s109, %s123
      %p125 = scmp.eq.s32.totalorder %s31, 0
      %p126 = por %p124, %p125
      %s128 = sadd.s32 %s127, 1
      %p131 = scmp.eq.s32.totalorder %s25, 1
      %p132 = scmp.ne.s32.totalorder %s127, %s129
      %p133 = scmp.eq.s32.totalorder %s25, 0
      %p134 = por %p132, %p133
      %p135 = scmp.ne.s32.totalorder %s127, %s129
      %p136 = scmp.eq.s32.totalorder %s30, 1
      %p137 = por %p135, %p136
      %p138 = scmp.ne.s32.totalorder %s129, %s130
      %p139 = scmp.eq.s32.totalorder %s30, 0
      %p140 = por %p138, %p139
      %p141 = scmp.ne.s32.totalorder %s129, %s130
      %p142 = scmp.eq.s32.totalorder %s31, 1
      %p143 = por %p141, %p142
      %p145 = scmp.ne.s32.totalorder %s130, %s144
      %p146 = scmp.eq.s32.totalorder %s31, 0
      %p147 = por %p145, %p146
      %s149 = sadd.s32 %s148, 1
      %p152 = scmp.eq.s32.totalorder %s25, 1
      %p153 = scmp.ne.s32.totalorder %s148, %s150
      %p154 = scmp.eq.s32.totalorder %s25, 0
      %p155 = por %p153, %p154
      %p156 = scmp.ne.s32.totalorder %s148, %s150
      %p157 = scmp.eq.s32.totalorder %s30, 1
      %p158 = por %p156, %p157
      %p159 = scmp.ne.s32.totalorder %s150, %s151
      %p160 = scmp.eq.s32.totalorder %s30, 0
      %p161 = por %p159, %p160
      %p162 = scmp.ne.s32.totalorder %s150, %s151
      %p163 = scmp.eq.s32.totalorder %s31, 1
      %p164 = por %p162, %p163
      %p166 = scmp.ne.s32.totalorder %s151, %s165
      %p167 = scmp.eq.s32.totalorder %s31, 0
      %p168 = por %p166, %p167
      %s170 = sadd.s32 %s169, 1
      %p173 = scmp.eq.s32.totalorder %s25, 1
      %p174 = scmp.ne.s32.totalorder %s169, %s171
      %p175 = scmp.eq.s32.totalorder %s25, 0
      %p176 = por %p174, %p175
      %p177 = scmp.ne.s32.totalorder %s169, %s171
      %p178 = scmp.eq.s32.totalorder %s30, 1
      %p179 = por %p177, %p178
      %p180 = scmp.ne.s32.totalorder %s171, %s172
      %p181 = scmp.eq.s32.totalorder %s30, 0
      %p182 = por %p180, %p181
      %p183 = scmp.ne.s32.totalorder %s171, %s172
      %p184 = scmp.eq.s32.totalorder %s31, 1
      %p185 = por %p183, %p184
      %p187 = scmp.ne.s32.totalorder %s172, %s186
      %p188 = scmp.eq.s32.totalorder %s31, 0
      %p189 = por %p187, %p188
      %s191 = sadd.s32 %s190, 1
      %p194 = scmp.eq.s32.totalorder %s25, 1
      %p195 = scmp.ne.s32.totalorder %s190, %s192
      %p196 = scmp.eq.s32.totalorder %s25, 0
      %p197 = por %p195, %p196
      %p198 = scmp.ne.s32.totalorder %s190, %s192
      %p199 = scmp.eq.s32.totalorder %s30, 1
      %p200 = por %p198, %p199
      %p201 = scmp.ne.s32.totalorder %s192, %s193
      %p202 = scmp.eq.s32.totalorder %s30, 0
      %p203 = por %p201, %p202
      %p204 = scmp.ne.s32.totalorder %s192, %s193
      %p205 = scmp.eq.s32.totalorder %s31, 1
      %p206 = por %p204, %p205
      %p208 = scmp.ne.s32.totalorder %s193, %s207
      %p209 = scmp.eq.s32.totalorder %s31, 0
      %p210 = por %p208, %p209
      %s212 = sadd.s32 %s211, 1
      %p215 = scmp.eq.s32.totalorder %s25, 1
      %p216 = scmp.ne.s32.totalorder %s211, %s213
      %p217 = scmp.eq.s32.totalorder %s25, 0
      %p218 = por %p216, %p217
      %p219 = scmp.ne.s32.totalorder %s211, %s213
      %p220 = scmp.eq.s32.totalorder %s30, 1
      %p221 = por %p219, %p220
      %p222 = scmp.ne.s32.totalorder %s213, %s214
      %p223 = scmp.eq.s32.totalorder %s30, 0
      %p224 = por %p222, %p223
      %p225 = scmp.ne.s32.totalorder %s213, %s214
      %p226 = scmp.eq.s32.totalorder %s31, 1
      %p227 = por %p225, %p226
      %p229 = scmp.ne.s32.totalorder %s214, %s228
      %p230 = scmp.eq.s32.totalorder %s31, 0
      %p231 = por %p229, %p230
      %s233 = sadd.s32 %s232, 1
      %p236 = scmp.eq.s32.totalorder %s25, 1
      %p237 = scmp.ne.s32.totalorder %s232, %s234
      %p238 = scmp.eq.s32.totalorder %s25, 0
      %p239 = por %p237, %p238
      %p240 = scmp.ne.s32.totalorder %s232, %s234
      %p241 = scmp.eq.s32.totalorder %s30, 1
      %p242 = por %p240, %p241
      %p243 = scmp.ne.s32.totalorder %s234, %s235
      %p244 = scmp.eq.s32.totalorder %s30, 0
      %p245 = por %p243, %p244
      %p246 = scmp.ne.s32.totalorder %s234, %s235
      %p247 = scmp.eq.s32.totalorder %s31, 1
      %p248 = por %p246, %p247
      %p250 = scmp.ne.s32.totalorder %s235, %s249
      %p251 = scmp.eq.s32.totalorder %s31, 0
      %p252 = por %p250, %p251
      %s254 = sadd.s32 %s253, 1
      %p257 = scmp.eq.s32.totalorder %s25, 1
      %p258 = scmp.ne.s32.totalorder %s253, %s255
      %p259 = scmp.eq.s32.totalorder %s25, 0
      %p260 = por %p258, %p259
      %p261 = scmp.ne.s32.totalorder %s253, %s255
      %p262 = scmp.eq.s32.totalorder %s30, 1
      %p263 = por %p261, %p262
      %p264 = scmp.ne.s32.totalorder %s255, %s256
      %p265 = scmp.eq.s32.totalorder %s30, 0
      %p266 = por %p264, %p265
      %p267 = scmp.ne.s32.totalorder %s255, %s256
      %p268 = scmp.eq.s32.totalorder %s31, 1
      %p269 = por %p267, %p268
      %p271 = scmp.ne.s32.totalorder %s256, %s270
      %p272 = scmp.eq.s32.totalorder %s31, 0
      %p273 = por %p271, %p272
      %s275 = sadd.s32 %s274, 1
      %p278 = scmp.eq.s32.totalorder %s25, 1
      %p279 = scmp.ne.s32.totalorder %s274, %s276
      %p280 = scmp.eq.s32.totalorder %s25, 0
      %p281 = por %p279, %p280
      %p282 = scmp.ne.s32.totalorder %s274, %s276
      %p283 = scmp.eq.s32.totalorder %s30, 1
      %p284 = por %p282, %p283
      %p285 = scmp.ne.s32.totalorder %s276, %s277
      %p286 = scmp.eq.s32.totalorder %s30, 0
      %p287 = por %p285, %p286
      %p288 = scmp.ne.s32.totalorder %s276, %s277
      %p289 = scmp.eq.s32.totalorder %s31, 1
      %p290 = por %p288, %p289
      %p292 = scmp.ne.s32.totalorder %s277, %s291
      %p293 = scmp.eq.s32.totalorder %s31, 0
      %p294 = por %p292, %p293
      %s296 = sadd.s32 %s295, 1
      %p299 = scmp.eq.s32.totalorder %s25, 1
      %p300 = scmp.ne.s32.totalorder %s295, %s297
      %p301 = scmp.eq.s32.totalorder %s25, 0
      %p302 = por %p300, %p301
      %p303 = scmp.ne.s32.totalorder %s295, %s297
      %p304 = scmp.eq.s32.totalorder %s30, 1
      %p305 = por %p303, %p304
      %p306 = scmp.ne.s32.totalorder %s297, %s298
      %p307 = scmp.eq.s32.totalorder %s30, 0
      %p308 = por %p306, %p307
      %p309 = scmp.ne.s32.totalorder %s297, %s298
      %p310 = scmp.eq.s32.totalorder %s31, 1
      %p311 = por %p309, %p310
      %p313 = scmp.ne.s32.totalorder %s298, %s312
      %p314 = scmp.eq.s32.totalorder %s31, 0
      %p315 = por %p313, %p314
      %s316 = ssub.s32 %s25, %s32
      %p317 = scmp.eq.s32.totalorder %s316, 0
      %s319 = sadd.s32 %s318, 1
      %s320 = scalar_select %p317, %s318, %s319
      %p323 = pneg %p317
      %p324 = scmp.eq.s32.totalorder %s25, 1
      %p325 = por %p323, %p324
      %p326 = scmp.ne.s32.totalorder %s318, %s321
      %p327 = scmp.eq.s32.totalorder %s25, 0
      %p328 = por %p326, %p327
      %p329 = scmp.ne.s32.totalorder %s318, %s321
      %p330 = scmp.eq.s32.totalorder %s30, 1
      %p331 = por %p329, %p330
      %p332 = scmp.ne.s32.totalorder %s321, %s322
      %p333 = scmp.eq.s32.totalorder %s30, 0
      %p334 = por %p332, %p333
      %p335 = scmp.ne.s32.totalorder %s321, %s322
      %p336 = scmp.eq.s32.totalorder %s31, 1
      %p337 = por %p335, %p336
      %p339 = scmp.ne.s32.totalorder %s322, %s338
      %p340 = scmp.eq.s32.totalorder %s31, 0
      %p341 = por %p339, %p340
      %p342 = scmp.le.s32.totalorder 1, %s25
      %p343 = scmp.lt.s32.totalorder %s25, 3
      %p344 = pnand %p342, %p343
      %p345 = pneg %p344
      // Predicated region
      $region9: #{tpu_custom_call.1} parent=5 // pred_check
        _
      $region10: #{tpu_custom_call.1} parent=5 // pred_check_branch
        %347 = sbr.rel (%p344) target = $region12
      $region11: #{tpu_custom_call.1} parent=5 // pred_region
        %s348 = ssub.s32 %s25, 1
        // Predicated region
        $region13: #{tpu_custom_call.1} parent=11 // pred_check
          %p349 = pneg %p98
        $region14: #{tpu_custom_call.1} parent=11 // pred_check_branch
          %351 = sbr.rel (%p349) target = $region16
        $region15: #{tpu_custom_call.1} parent=11 // pred_region
          _
        $region16: #{tpu_custom_call.1} parent=11 // pred_fallthru
          _
        // Predicated region
        $region17: #{tpu_custom_call.1} parent=11 // pred_check
          %p352 = pneg %p119
        $region18: #{tpu_custom_call.1} parent=11 // pred_check_branch
          %354 = sbr.rel (%p352) target = $region20
        $region19: #{tpu_custom_call.1} parent=11 // pred_region
          _
        $region20: #{tpu_custom_call.1} parent=11 // pred_fallthru
          _
        // Predicated region
        $region21: #{tpu_custom_call.1} parent=11 // pred_check
          %p355 = pneg %p140
        $region22: #{tpu_custom_call.1} parent=11 // pred_check_branch
          %357 = sbr.rel (%p355) target = $region24
        $region23: #{tpu_custom_call.1} parent=11 // pred_region
          %s359 = ssub.s32 16, 16
          %360 = vsyncadd [#allocation3], %s359
          %s362 = sshll.u32 [#allocation2], 4
          %s363 = int_to_ptr.vmem [resolvable:$true] %s362
          %365 = dma.hbm_to_vmem [thread:$0]  %s4, 16, %s363, [#allocation3]
        $region24: #{tpu_custom_call.1} parent=11 // pred_fallthru
          _
        // Predicated region
        $region25: #{tpu_custom_call.1} parent=11 // pred_check
          %p366 = pneg %p161
        $region26: #{tpu_custom_call.1} parent=11 // pred_check_branch
          %368 = sbr.rel (%p366) target = $region28
        $region27: #{tpu_custom_call.1} parent=11 // pred_region
          _
        $region28: #{tpu_custom_call.1} parent=11 // pred_fallthru
          _
        // Predicated region
        $region29: #{tpu_custom_call.1} parent=11 // pred_check
          %p369 = pneg %p182
        $region30: #{tpu_custom_call.1} parent=11 // pred_check_branch
          %371 = sbr.rel (%p369) target = $region32
        $region31: #{tpu_custom_call.1} parent=11 // pred_region
          _
        $region32: #{tpu_custom_call.1} parent=11 // pred_fallthru
          _
        // Predicated region
        $region33: #{tpu_custom_call.1} parent=11 // pred_check
          %p372 = pneg %p203
        $region34: #{tpu_custom_call.1} parent=11 // pred_check_branch
          %374 = sbr.rel (%p372) target = $region36
        $region35: #{tpu_custom_call.1} parent=11 // pred_region
          %s376 = ssub.s32 512, 512
          %377 = vsyncadd [#allocation6], %s376
          %s378 = sshll.u32 [#allocation5], 4
          %s379 = int_to_ptr.vmem [resolvable:$true] %s378
          %384 = dma.hbm_to_vmem [thread:$0]  %s7, 512, %s379, [#allocation6], 128, 128, 8
        $region36: #{tpu_custom_call.1} parent=11 // pred_fallthru
          _
        // Predicated region
        $region37: #{tpu_custom_call.1} parent=11 // pred_check
          %p385 = pneg %p224
        $region38: #{tpu_custom_call.1} parent=11 // pred_check_branch
          %387 = sbr.rel (%p385) target = $region40
        $region39: #{tpu_custom_call.1} parent=11 // pred_region
          %s389 = ssub.s32 512, 512
          %390 = vsyncadd [#allocation6], %s389
          %s391 = sshll.u32 [#allocation7], 4
          %s392 = int_to_ptr.vmem [resolvable:$true] %s391
          %397 = dma.hbm_to_vmem [thread:$0]  %s8, 512, %s392, [#allocation6], 128, 128, 8
        $region40: #{tpu_custom_call.1} parent=11 // pred_fallthru
          _
        // Predicated region
        $region41: #{tpu_custom_call.1} parent=11 // pred_check
          %p398 = pneg %p245
        $region42: #{tpu_custom_call.1} parent=11 // pred_check_branch
          %400 = sbr.rel (%p398) target = $region44
        $region43: #{tpu_custom_call.1} parent=11 // pred_region
          _
        $region44: #{tpu_custom_call.1} parent=11 // pred_fallthru
          _
        // Predicated region
        $region45: #{tpu_custom_call.1} parent=11 // pred_check
          %p401 = pneg %p266
        $region46: #{tpu_custom_call.1} parent=11 // pred_check_branch
          %403 = sbr.rel (%p401) target = $region48
        $region47: #{tpu_custom_call.1} parent=11 // pred_region
          %s405 = ssub.s32 512, 512
          %406 = vsyncadd [#allocation9], %s405
          %s407 = sshll.u32 [#allocation8], 4
          %s408 = int_to_ptr.vmem [resolvable:$true] %s407
          %413 = dma.hbm_to_vmem [thread:$0]  %s10, 512, %s408, [#allocation9], 128, 128, 8
        $region48: #{tpu_custom_call.1} parent=11 // pred_fallthru
          _
        // Predicated region
        $region49: #{tpu_custom_call.1} parent=11 // pred_check
          %p414 = pneg %p287
        $region50: #{tpu_custom_call.1} parent=11 // pred_check_branch
          %416 = sbr.rel (%p414) target = $region52
        $region51: #{tpu_custom_call.1} parent=11 // pred_region
          _
        $region52: #{tpu_custom_call.1} parent=11 // pred_fallthru
          _
        // Predicated region
        $region53: #{tpu_custom_call.1} parent=11 // pred_check
          %p417 = pneg %p308
        $region54: #{tpu_custom_call.1} parent=11 // pred_check_branch
          %419 = sbr.rel (%p417) target = $region56
        $region55: #{tpu_custom_call.1} parent=11 // pred_region
          _
        $region56: #{tpu_custom_call.1} parent=11 // pred_fallthru
          _
      $region12: #{tpu_custom_call.1} parent=5 // pred_fallthru
        _
      %p420 = scmp.lt.s32.totalorder %s25, 2
      // Predicated region
      $region57: #{tpu_custom_call.1} parent=5 // pred_check
        %p421 = pneg %p420
      $region58: #{tpu_custom_call.1} parent=5 // pred_check_branch
        %423 = sbr.rel (%p421) target = $region60
      $region59: #{tpu_custom_call.1} parent=5 // pred_region
        // Predicated region
        $region61: #{tpu_custom_call.1} parent=59 // pred_check
          %p424 = pneg %p45
        $region62: #{tpu_custom_call.1} parent=59 // pred_check_branch
          %426 = sbr.rel (%p424) target = $region64
        $region63: #{tpu_custom_call.1} parent=59 // pred_region
          %s427 = smul.u32 2, %s25
          %p428 = scmp.lt.s32.totalorder %s427, 3
          %s429 = scalar_select %p428, %s427, 3
          %s430 = smul.addr %s429, 8
          %s431 = scalar_lea.vmem %s0, %s430
          %s432 = smul.u32 2, %s25
        $region64: #{tpu_custom_call.1} parent=59 // pred_fallthru
          _
        // Predicated region
        $region65: #{tpu_custom_call.1} parent=59 // pred_check
          %p433 = pneg %p71
        $region66: #{tpu_custom_call.1} parent=59 // pred_check_branch
          %435 = sbr.rel (%p433) target = $region68
        $region67: #{tpu_custom_call.1} parent=59 // pred_region
          %s436 = smul.u32 2, %s25
          %p437 = scmp.lt.s32.totalorder %s436, 3
          %s438 = scalar_select %p437, %s436, 3
          %s439 = smul.addr %s438, 2
          %s440 = smul.addr %s439, 8
          %s441 = scalar_lea.vmem %s1, %s440
          %s442 = smul.u32 2, %s25
        $region68: #{tpu_custom_call.1} parent=59 // pred_fallthru
          _
      $region60: #{tpu_custom_call.1} parent=5 // pred_fallthru
        _
      %p443 = scmp.le.s32.totalorder 1, %s25
      %p444 = scmp.lt.s32.totalorder %s25, 3
      %p445 = pnand %p443, %p444
      %p446 = pneg %p445
      // Predicated region
      $region69: #{tpu_custom_call.1} parent=5 // pred_check
        _
      $region70: #{tpu_custom_call.1} parent=5 // pred_check_branch
        %448 = sbr.rel (%p445) target = $region72
      $region71: #{tpu_custom_call.1} parent=5 // pred_region
        %s449 = ssub.s32 %s25, 1
        // Predicated region
        $region73: #{tpu_custom_call.1} parent=71 // pred_check
          %p450 = pneg %p140
        $region74: #{tpu_custom_call.1} parent=71 // pred_check_branch
          %452 = sbr.rel (%p450) target = $region76
        $region75: #{tpu_custom_call.1} parent=71 // pred_region
          %453 = dma.done [#allocation3], 16
        $region76: #{tpu_custom_call.1} parent=71 // pred_fallthru
          _
        // Predicated region
        $region77: #{tpu_custom_call.1} parent=71 // pred_check
          %p454 = pneg %p203
        $region78: #{tpu_custom_call.1} parent=71 // pred_check_branch
          %456 = sbr.rel (%p454) target = $region80
        $region79: #{tpu_custom_call.1} parent=71 // pred_region
          %457 = dma.done [#allocation6], 512
        $region80: #{tpu_custom_call.1} parent=71 // pred_fallthru
          _
        // Predicated region
        $region81: #{tpu_custom_call.1} parent=71 // pred_check
          %p458 = pneg %p224
        $region82: #{tpu_custom_call.1} parent=71 // pred_check_branch
          %460 = sbr.rel (%p458) target = $region84
        $region83: #{tpu_custom_call.1} parent=71 // pred_region
          %461 = dma.done [#allocation6], 512
        $region84: #{tpu_custom_call.1} parent=71 // pred_fallthru
          _
        // Predicated region
        $region85: #{tpu_custom_call.1} parent=71 // pred_check
          %p462 = pneg %p266
        $region86: #{tpu_custom_call.1} parent=71 // pred_check_branch
          %464 = sbr.rel (%p462) target = $region88
        $region87: #{tpu_custom_call.1} parent=71 // pred_region
          %465 = dma.done [#allocation9], 512
        $region88: #{tpu_custom_call.1} parent=71 // pred_fallthru
          _
        %s466 = smul.u32 2, %s30
        %p467 = scmp.lt.s32.totalorder %s466, 3
        %s468 = scalar_select %p467, %s466, 3
        %s469 = smul.addr %s468, 8
        %s470 = scalar_lea.vmem %s0, %s469
        %p471 = pneg %p51
        %p472 = pneg %p48
        %s473 = smul.u32 2, %s30
        %p474 = scmp.lt.s32.totalorder %s473, 3
        %s475 = scalar_select %p474, %s473, 3
        %s476 = smul.addr %s475, 2
        %s477 = smul.addr %s476, 8
        %s478 = scalar_lea.vmem %s1, %s477
        %p479 = pneg %p77
        %p480 = pneg %p74
        %p481 = pneg %p98
        %p482 = pneg %p95
        %p483 = pneg %p119
        %p484 = pneg %p116
        %p485 = pneg %p140
        %p486 = pneg %p137
        %p487 = pneg %p161
        %p488 = pneg %p158
        %p489 = pneg %p182
        %p490 = pneg %p179
        %p491 = pneg %p203
        %p492 = pneg %p200
        %p493 = pneg %p224
        %p494 = pneg %p221
        %p495 = pneg %p245
        %p496 = pneg %p242
        %p497 = pneg %p266
        %p498 = pneg %p263
        %p499 = pneg %p287
        %p500 = pneg %p284
        %p501 = pneg %p308
        %p502 = pneg %p305
        %p503 = pneg %p334
        %p504 = pneg %p331
        %s505 = sand.u32 %s321, 1
        %s506 = scalar_lea.sflag [#allocation4], %s505
        %s507 = sand.u32 %s321, 1
        %s508 = smul.addr %s507, 16
        %s509 = scalar_lea.vmem [#allocation10], %s508
        %s510 = smul.u32 2, %s30
        %p511 = scmp.lt.s32.totalorder %s510, 3
        %s512 = scalar_select %p511, %s510, 3
        %s513 = smul.addr %s512, 8
        %s514 = scalar_lea.vmem %s0, %s513
        %s515 = smul.u32 2, %s30
        %s516 = smul.u32 2, %s30
        %p517 = scmp.lt.s32.totalorder %s516, 3
        %s518 = scalar_select %p517, %s516, 3
        %s519 = smul.addr %s518, 2
        %s520 = smul.addr %s519, 8
        %s521 = scalar_lea.vmem %s1, %s520
        %s522 = smul.u32 2, %s30
        %s523 = smul.u32 2, %s30
        %v524 = vld [vmem:[%s2] sm:$0x1]
        %v525 = vld [vmem:[%s3] sm:$0x1]
        %v526 = vld [vmem:[#allocation2] sm:$0x1]
        %v527 = vld [vmem:[%s11] sm:$0x1]
        %v528 = vld [vmem:[%s5] sm:$0xff]
        %v529 = vld [vmem:[%s5 + $0x8] sm:$0xff]
        %v530 = vld [vmem:[%s5 + $0x10] sm:$0xff]
        %v531 = vld [vmem:[%s5 + $0x18] sm:$0xff]
        %v532 = vld [vmem:[%s6] sm:$0xff]
        %v533 = vld [vmem:[%s6 + $0x8] sm:$0xff]
        %v534 = vld [vmem:[%s6 + $0x10] sm:$0xff]
        %v535 = vld [vmem:[%s6 + $0x18] sm:$0xff]
        %v536 = vld [vmem:[#allocation5] sm:$0xff]
        %v537 = vld [vmem:[#allocation5 + $0x8] sm:$0xff]
        %v538 = vld [vmem:[#allocation5 + $0x10] sm:$0xff]
        %v539 = vld [vmem:[#allocation5 + $0x18] sm:$0xff]
        %v540 = vld [vmem:[#allocation7] sm:$0xff]
        %v541 = vld [vmem:[#allocation7 + $0x8] sm:$0xff]
        %v542 = vld [vmem:[#allocation7 + $0x10] sm:$0xff]
        %v543 = vld [vmem:[#allocation7 + $0x18] sm:$0xff]
        %v544 = vld [vmem:[%s9] sm:$0xff]
        %v545 = vld [vmem:[%s9 + $0x8] sm:$0xff]
        %v546 = vld [vmem:[%s9 + $0x10] sm:$0xff]
        %v547 = vld [vmem:[%s9 + $0x18] sm:$0xff]
        %v548 = vld [vmem:[#allocation8] sm:$0xff]
        %v549 = vld [vmem:[#allocation8 + $0x8] sm:$0xff]
        %v550 = vld [vmem:[#allocation8 + $0x10] sm:$0xff]
        %v551 = vld [vmem:[#allocation8 + $0x18] sm:$0xff]
        %v552 = vld [vmem:[%s12] sm:$0xff]
        %v553 = vld [vmem:[%s12 + $0x8] sm:$0xff]
        %v554 = vld [vmem:[%s12 + $0x10] sm:$0xff]
        %v555 = vld [vmem:[%s12 + $0x18] sm:$0xff]
        %v556 = vld [vmem:[%s12 + $0x20] sm:$0xff]
        %v557 = vld [vmem:[%s12 + $0x28] sm:$0xff]
        %v558 = vld [vmem:[%s12 + $0x30] sm:$0xff]
        %v559 = vld [vmem:[%s12 + $0x38] sm:$0xff]
        %v560 = vld [vmem:[%s12 + $0x40] sm:$0xff]
        %v561 = vld [vmem:[%s12 + $0x48] sm:$0xff]
        %v562 = vld [vmem:[%s12 + $0x50] sm:$0xff]
        %v563 = vld [vmem:[%s12 + $0x58] sm:$0xff]
        %v564 = vld [vmem:[%s12 + $0x60] sm:$0xff]
        %v565 = vld [vmem:[%s12 + $0x68] sm:$0xff]
        %v566 = vld [vmem:[%s12 + $0x70] sm:$0xff]
        %v567 = vld [vmem:[%s12 + $0x78] sm:$0xff]
        %v568 = vld [vmem:[%s514] sm:$0xff]
        %v569 = vld [vmem:[%s514 + $0x8] sm:$0xff]
        %v570 = vld [vmem:[%s521] sm:$0xff]
        %v571 = vld [vmem:[%s521 + $0x8] sm:$0xff]
        %v572 = vld [vmem:[%s521 + $0x10] sm:$0xff]
        %v573 = vld [vmem:[%s521 + $0x18] sm:$0xff]
        %vm574 = vcmask 261120
        %v575 = vsel %vm574, %v568, 0.0
        %576 = vadd.xlane.f32.xlu0 %v575
        %v577 = vpop.xlane.xlu0 %576
        %v578 = vsel %vm574, %v569, 0.0
        %579 = vadd.xlane.f32.xlu0 %v578
        %v580 = vpop.xlane.xlu0 %579
        %v581 = vrcp.pop 32.0
        %v582 = vmul.f32 %v577, %v581
        %v583 = vmul.f32 %v580, %v581
        %v584 = vsub.f32 %v568, %v582
        %v585 = vsub.f32 %v569, %v583
        %v586 = vmul.f32 %v584, %v584
        %v587 = vmul.f32 %v585, %v585
        %v588 = vsel %vm574, %v586, 0.0
        %589 = vadd.xlane.f32.xlu0 %v588
        %v590 = vpop.xlane.xlu0 %589
        %v591 = vsel %vm574, %v587, 0.0
        %592 = vadd.xlane.f32.xlu0 %v591
        %v593 = vpop.xlane.xlu0 %592
        %v594 = vmul.f32 %v590, %v581
        %v595 = vmul.f32 %v593, %v581
        %v596 = vadd.f32 %v594, 1e-05
        %v597 = vadd.f32 %v595, 1e-05
        %v598 = vrsqrt.pop %v596
        %v599 = vrsqrt.pop %v597
        %v600 = vmul.f32 %v584, %v598
        %v601 = vmul.f32 %v585, %v599
        %v603 = vlaneseq
        %v604 = vshrl.u32 %v603, 7
        %v605 = vsub.s32 0, %v604
        %v606 = vrot.slane %v524, %v605
        %v608 = vmul.f32 %v600, %v606
        %v609 = vmul.f32 %v601, %v606
        %v611 = vsel %vm574, %v608, 0
        %v614 = vsel %vm574, %v609, 0
        %616 = vmatprep.subr.mxu0 0.0
        %617 = vmatpush1.msra.mxu0 %v528
        %618 = vmatprep.subr.mxu0 0.0
        %619 = vmatpush1.msra.mxu0 %v529
        %620 = vmatprep.subr.mxu0 0.0
        %621 = vmatpush1.msra.mxu0 %v530
        %622 = vmatprep.subr.mxu0 0.0
        %623 = vmatpush1.msra.mxu0 %v531
        %624 = vmatprep.subr.mxu0 0.0
        %625 = vmatpush1.msra.mxu0 0.0
        %626 = vmatprep.subr.mxu0 0.0
        %627 = vmatpush1.msra.mxu0 0.0
        %628 = vmatprep.subr.mxu0 0.0
        %629 = vmatpush1.msra.mxu0 0.0
        %630 = vmatprep.subr.mxu0 0.0
        %631 = vmatpush1.msra.mxu0 0.0
        %632 = vmatprep.subr.mxu0 0.0
        %633 = vmatpush1.msra.mxu0 0.0
        %634 = vmatprep.subr.mxu0 0.0
        %635 = vmatpush1.msra.mxu0 0.0
        %636 = vmatprep.subr.mxu0 0.0
        %637 = vmatpush1.msra.mxu0 0.0
        %638 = vmatprep.subr.mxu0 0.0
        %639 = vmatpush1.msra.mxu0 0.0
        %640 = vmatprep.subr.mxu0 0.0
        %641 = vmatpush1.msra.mxu0 0.0
        %642 = vmatprep.subr.mxu0 0.0
        %643 = vmatpush1.msra.mxu0 0.0
        %644 = vmatprep.subr.mxu0 0.0
        %645 = vmatpush1.msra.mxu0 0.0
        %646 = vmatprep.subr.mxu0 0.0
        %647 = vmatpush1.msra.mxu0 0.0
        %648 = vmatprep.subr.mxu0 0.0
        %649 = vmatpush1.msra.mxu0 0.0
        %650 = vmatprep.subr.mxu0 0.0
        %651 = vmatpush1.msra.mxu0 0.0
        %652 = vmatprep.subr.mxu0 0.0
        %653 = vmatpush1.msra.mxu0 0.0
        %654 = vmatprep.subr.mxu0 0.0
        %655 = vmatpush1.msra.mxu0 0.0
        %656 = vmatprep.subr.mxu0 0.0
        %657 = vmatpush1.msra.mxu0 0.0
        %658 = vmatprep.subr.mxu0 0.0
        %659 = vmatpush1.msra.mxu0 0.0
        %660 = vmatprep.subr.mxu0 0.0
        %661 = vmatpush1.msra.mxu0 0.0
        %662 = vmatprep.subr.mxu0 0.0
        %663 = vmatpush1.msra.mxu0 0.0
        %664 = vmatprep.subr.mxu0 0.0
        %665 = vmatpush1.msra.mxu0 0.0
        %666 = vmatprep.subr.mxu0 0.0
        %667 = vmatpush1.msra.mxu0 0.0
        %668 = vmatprep.subr.mxu0 0.0
        %669 = vmatpush1.msra.mxu0 0.0
        %670 = vmatprep.subr.mxu0 0.0
        %671 = vmatpush1.msra.mxu0 0.0
        %672 = vmatprep.subr.mxu0 0.0
        %673 = vmatpush1.msra.mxu0 0.0
        %674 = vmatprep.subr.mxu0 0.0
        %675 = vmatpush1.msra.mxu0 0.0
        %676 = vmatprep.subr.mxu0 0.0
        %677 = vmatpush1.msra.mxu0 0.0
        %678 = vmatprep.subr.mxu0 0.0
        %679 = vmatpush1.msra.mxu0 0.0
        %680 = vmatprep.mubr.f32.mxu0 0.0
        %681 = vmatmul.mubr.f32.gmra.mrb[0].mxu0 %v611
        %v682 = vpop.f32.mrb[0].mxu0
        %v683 = vadd.f32 0.0, %v682
        %v684 = vpop.f32.mrb[0].mxu0
        %685 = vmatprep.mubr.f32.mxu0 0.0
        %686 = vmatmul.mubr.f32.gmra.mrb[0].mxu0 %v614
        %v687 = vpop.f32.mrb[0].mxu0
        %v688 = vadd.f32 0.0, %v687
        %v689 = vpop.f32.mrb[0].mxu0
        %690 = vdwg.mxu0
        %692 = vrot.lane.b32.xlu0 %v683, 96
        %v693 = vpop.permute.xlu0 %692
        %vm694 = vcmask 64512
        %v695 = vsel %vm694, %v683, 0
        %v697 = vsel %vm694, %v693, 0
        %699 = vmatprep.subr.mxu0 0.0
        %700 = vmatpush1.xpose.msra.mxu0 %v697
        %701 = vmatprep.subr.mxu0 0.0
        %702 = vmatpush1.xpose.msra.mxu0 0.0
        %703 = vmatprep.subr.mxu0 0.0
        %704 = vmatpush1.xpose.msra.mxu0 0.0
        %705 = vmatprep.subr.mxu0 0.0
        %706 = vmatpush1.xpose.msra.mxu0 0.0
        %707 = vmatprep.subr.mxu0 0.0
        %708 = vmatpush1.xpose.msra.mxu0 0.0
        %709 = vmatprep.subr.mxu0 0.0
        %710 = vmatpush1.xpose.msra.mxu0 0.0
        %711 = vmatprep.subr.mxu0 0.0
        %712 = vmatpush1.xpose.msra.mxu0 0.0
        %713 = vmatprep.subr.mxu0 0.0
        %714 = vmatpush1.xpose.msra.mxu0 0.0
        %715 = vmatprep.subr.mxu0 0.0
        %716 = vmatpush1.xpose.msra.mxu0 0.0
        %717 = vmatprep.subr.mxu0 0.0
        %718 = vmatpush1.xpose.msra.mxu0 0.0
        %719 = vmatprep.subr.mxu0 0.0
        %720 = vmatpush1.xpose.msra.mxu0 0.0
        %721 = vmatprep.subr.mxu0 0.0
        %722 = vmatpush1.xpose.msra.mxu0 0.0
        %723 = vmatprep.subr.mxu0 0.0
        %724 = vmatpush1.xpose.msra.mxu0 0.0
        %725 = vmatprep.subr.mxu0 0.0
        %726 = vmatpush1.xpose.msra.mxu0 0.0
        %727 = vmatprep.subr.mxu0 0.0
        %728 = vmatpush1.xpose.msra.mxu0 0.0
        %729 = vmatprep.subr.mxu0 0.0
        %730 = vmatpush1.xpose.msra.mxu0 0.0
        %731 = vmatprep.subr.mxu0 0.0
        %732 = vmatpush1.xpose.msra.mxu0 0.0
        %733 = vmatprep.subr.mxu0 0.0
        %734 = vmatpush1.xpose.msra.mxu0 0.0
        %735 = vmatprep.subr.mxu0 0.0
        %736 = vmatpush1.xpose.msra.mxu0 0.0
        %737 = vmatprep.subr.mxu0 0.0
        %738 = vmatpush1.xpose.msra.mxu0 0.0
        %739 = vmatprep.subr.mxu0 0.0
        %740 = vmatpush1.xpose.msra.mxu0 0.0
        %741 = vmatprep.subr.mxu0 0.0
        %742 = vmatpush1.xpose.msra.mxu0 0.0
        %743 = vmatprep.subr.mxu0 0.0
        %744 = vmatpush1.xpose.msra.mxu0 0.0
        %745 = vmatprep.subr.mxu0 0.0
        %746 = vmatpush1.xpose.msra.mxu0 0.0
        %747 = vmatprep.subr.mxu0 0.0
        %748 = vmatpush1.xpose.msra.mxu0 0.0
        %749 = vmatprep.subr.mxu0 0.0
        %750 = vmatpush1.xpose.msra.mxu0 0.0
        %751 = vmatprep.subr.mxu0 0.0
        %752 = vmatpush1.xpose.msra.mxu0 0.0
        %753 = vmatprep.subr.mxu0 0.0
        %754 = vmatpush1.xpose.msra.mxu0 0.0
        %755 = vmatprep.subr.mxu0 0.0
        %756 = vmatpush1.xpose.msra.mxu0 0.0
        %757 = vmatprep.subr.mxu0 0.0
        %758 = vmatpush1.xpose.msra.mxu0 0.0
        %759 = vmatprep.subr.mxu0 0.0
        %760 = vmatpush1.xpose.msra.mxu0 0.0
        %761 = vmatprep.subr.mxu0 0.0
        %762 = vmatpush1.xpose.msra.mxu0 0.0
        %763 = vmatprep.mubr.f32.mxu0 0.0
        %764 = vmatmul.mubr.f32.gmra.mrb[0].mxu0 %v695
        %v765 = vpop.f32.mrb[0].mxu0
        %v766 = vadd.f32 0.0, %v765
        %v767 = vpop.f32.mrb[0].mxu0
        %768 = vdwg.mxu0
        %770 = vrot.lane.b32.xlu0 %v688, 96
        %v771 = vpop.permute.xlu0 %770
        %v772 = vsel %vm694, %v688, 0
        %v774 = vsel %vm694, %v771, 0
        %776 = vmatprep.subr.mxu0 0.0
        %777 = vmatpush1.xpose.msra.mxu0 %v774
        %778 = vmatprep.subr.mxu0 0.0
        %779 = vmatpush1.xpose.msra.mxu0 0.0
        %780 = vmatprep.subr.mxu0 0.0
        %781 = vmatpush1.xpose.msra.mxu0 0.0
        %782 = vmatprep.subr.mxu0 0.0
        %783 = vmatpush1.xpose.msra.mxu0 0.0
        %784 = vmatprep.subr.mxu0 0.0
        %785 = vmatpush1.xpose.msra.mxu0 0.0
        %786 = vmatprep.subr.mxu0 0.0
        %787 = vmatpush1.xpose.msra.mxu0 0.0
        %788 = vmatprep.subr.mxu0 0.0
        %789 = vmatpush1.xpose.msra.mxu0 0.0
        %790 = vmatprep.subr.mxu0 0.0
        %791 = vmatpush1.xpose.msra.mxu0 0.0
        %792 = vmatprep.subr.mxu0 0.0
        %793 = vmatpush1.xpose.msra.mxu0 0.0
        %794 = vmatprep.subr.mxu0 0.0
        %795 = vmatpush1.xpose.msra.mxu0 0.0
        %796 = vmatprep.subr.mxu0 0.0
        %797 = vmatpush1.xpose.msra.mxu0 0.0
        %798 = vmatprep.subr.mxu0 0.0
        %799 = vmatpush1.xpose.msra.mxu0 0.0
        %800 = vmatprep.subr.mxu0 0.0
        %801 = vmatpush1.xpose.msra.mxu0 0.0
        %802 = vmatprep.subr.mxu0 0.0
        %803 = vmatpush1.xpose.msra.mxu0 0.0
        %804 = vmatprep.subr.mxu0 0.0
        %805 = vmatpush1.xpose.msra.mxu0 0.0
        %806 = vmatprep.subr.mxu0 0.0
        %807 = vmatpush1.xpose.msra.mxu0 0.0
        %808 = vmatprep.subr.mxu0 0.0
        %809 = vmatpush1.xpose.msra.mxu0 0.0
        %810 = vmatprep.subr.mxu0 0.0
        %811 = vmatpush1.xpose.msra.mxu0 0.0
        %812 = vmatprep.subr.mxu0 0.0
        %813 = vmatpush1.xpose.msra.mxu0 0.0
        %814 = vmatprep.subr.mxu0 0.0
        %815 = vmatpush1.xpose.msra.mxu0 0.0
        %816 = vmatprep.subr.mxu0 0.0
        %817 = vmatpush1.xpose.msra.mxu0 0.0
        %818 = vmatprep.subr.mxu0 0.0
        %819 = vmatpush1.xpose.msra.mxu0 0.0
        %820 = vmatprep.subr.mxu0 0.0
        %821 = vmatpush1.xpose.msra.mxu0 0.0
        %822 = vmatprep.subr.mxu0 0.0
        %823 = vmatpush1.xpose.msra.mxu0 0.0
        %824 = vmatprep.subr.mxu0 0.0
        %825 = vmatpush1.xpose.msra.mxu0 0.0
        %826 = vmatprep.subr.mxu0 0.0
        %827 = vmatpush1.xpose.msra.mxu0 0.0
        %828 = vmatprep.subr.mxu0 0.0
        %829 = vmatpush1.xpose.msra.mxu0 0.0
        %830 = vmatprep.subr.mxu0 0.0
        %831 = vmatpush1.xpose.msra.mxu0 0.0
        %832 = vmatprep.subr.mxu0 0.0
        %833 = vmatpush1.xpose.msra.mxu0 0.0
        %834 = vmatprep.subr.mxu0 0.0
        %835 = vmatpush1.xpose.msra.mxu0 0.0
        %836 = vmatprep.subr.mxu0 0.0
        %837 = vmatpush1.xpose.msra.mxu0 0.0
        %838 = vmatprep.subr.mxu0 0.0
        %839 = vmatpush1.xpose.msra.mxu0 0.0
        %840 = vmatprep.mubr.f32.mxu0 0.0
        %841 = vmatmul.mubr.f32.gmra.mrb[0].mxu0 %v772
        %v842 = vpop.f32.mrb[0].mxu0
        %v843 = vadd.f32 0.0, %v842
        %v844 = vpop.f32.mrb[0].mxu0
        %845 = vdwg.mxu0
        %v846 = vmul.f32 %v766, 0.35355338
        %v847 = vmul.f32 %v843, 0.35355338
        %v848 = vsel %vm694, %v846, -inf
        %849 = vmax.xlane.f32.xlu0 %v848
        %v850 = vpop.xlane.xlu0 %849
        %v851 = vsel %vm694, %v847, -inf
        %852 = vmax.xlane.f32.xlu0 %v851
        %v853 = vpop.xlane.xlu0 %852
        %v854 = vsub.f32 %v846, %v850
        %v855 = vsub.f32 %v847, %v853
        %v856 = vmul.f32 %v854, 1.442695
        %v857 = vpow.pop %v856
        %v858 = vmul.f32 %v855, 1.442695
        %v859 = vpow.pop %v858
        %v860 = vsel %vm694, %v857, 0.0
        %861 = vadd.xlane.f32.xlu0 %v860
        %v862 = vpop.xlane.xlu0 %861
        %v863 = vsel %vm694, %v859, 0.0
        %864 = vadd.xlane.f32.xlu0 %v863
        %v865 = vpop.xlane.xlu0 %864
        %v866 = vrcp.pop %v862
        %v867 = vrcp.pop %v865
        %v868 = vmul.f32 %v857, %v866
        %v869 = vmul.f32 %v859, %v867
        %870 = vrot.lane.b32.xlu0 %v683, 64
        %v871 = vpop.permute.xlu0 %870
        %v874 = vsel %vm694, %v868, 0
        %876 = vmatprep.subr.mxu0 0.0
        %877 = vmatpush1.msra.mxu0 %v871
        %878 = vmatprep.subr.mxu0 0.0
        %879 = vmatpush1.msra.mxu0 0.0
        %880 = vmatprep.subr.mxu0 0.0
        %881 = vmatpush1.msra.mxu0 0.0
        %882 = vmatprep.subr.mxu0 0.0
        %883 = vmatpush1.msra.mxu0 0.0
        %884 = vmatprep.subr.mxu0 0.0
        %885 = vmatpush1.msra.mxu0 0.0
        %886 = vmatprep.subr.mxu0 0.0
        %887 = vmatpush1.msra.mxu0 0.0
        %888 = vmatprep.subr.mxu0 0.0
        %889 = vmatpush1.msra.mxu0 0.0
        %890 = vmatprep.subr.mxu0 0.0
        %891 = vmatpush1.msra.mxu0 0.0
        %892 = vmatprep.subr.mxu0 0.0
        %893 = vmatpush1.msra.mxu0 0.0
        %894 = vmatprep.subr.mxu0 0.0
        %895 = vmatpush1.msra.mxu0 0.0
        %896 = vmatprep.subr.mxu0 0.0
        %897 = vmatpush1.msra.mxu0 0.0
        %898 = vmatprep.subr.mxu0 0.0
        %899 = vmatpush1.msra.mxu0 0.0
        %900 = vmatprep.subr.mxu0 0.0
        %901 = vmatpush1.msra.mxu0 0.0
        %902 = vmatprep.subr.mxu0 0.0
        %903 = vmatpush1.msra.mxu0 0.0
        %904 = vmatprep.subr.mxu0 0.0
        %905 = vmatpush1.msra.mxu0 0.0
        %906 = vmatprep.subr.mxu0 0.0
        %907 = vmatpush1.msra.mxu0 0.0
        %908 = vmatprep.subr.mxu0 0.0
        %909 = vmatpush1.msra.mxu0 0.0
        %910 = vmatprep.subr.mxu0 0.0
        %911 = vmatpush1.msra.mxu0 0.0
        %912 = vmatprep.subr.mxu0 0.0
        %913 = vmatpush1.msra.mxu0 0.0
        %914 = vmatprep.subr.mxu0 0.0
        %915 = vmatpush1.msra.mxu0 0.0
        %916 = vmatprep.subr.mxu0 0.0
        %917 = vmatpush1.msra.mxu0 0.0
        %918 = vmatprep.subr.mxu0 0.0
        %919 = vmatpush1.msra.mxu0 0.0
        %920 = vmatprep.subr.mxu0 0.0
        %921 = vmatpush1.msra.mxu0 0.0
        %922 = vmatprep.subr.mxu0 0.0
        %923 = vmatpush1.msra.mxu0 0.0
        %924 = vmatprep.subr.mxu0 0.0
        %925 = vmatpush1.msra.mxu0 0.0
        %926 = vmatprep.subr.mxu0 0.0
        %927 = vmatpush1.msra.mxu0 0.0
        %928 = vmatprep.subr.mxu0 0.0
        %929 = vmatpush1.msra.mxu0 0.0
        %930 = vmatprep.subr.mxu0 0.0
        %931 = vmatpush1.msra.mxu0 0.0
        %932 = vmatprep.subr.mxu0 0.0
        %933 = vmatpush1.msra.mxu0 0.0
        %934 = vmatprep.subr.mxu0 0.0
        %935 = vmatpush1.msra.mxu0 0.0
        %936 = vmatprep.subr.mxu0 0.0
        %937 = vmatpush1.msra.mxu0 0.0
        %938 = vmatprep.subr.mxu0 0.0
        %939 = vmatpush1.msra.mxu0 0.0
        %940 = vmatprep.mubr.f32.mxu0 0.0
        %941 = vmatmul.mubr.f32.gmra.mrb[0].mxu0 %v874
        %v942 = vpop.f32.mrb[0].mxu0
        %v943 = vadd.f32 0.0, %v942
        %v944 = vpop.f32.mrb[0].mxu0
        %945 = vdwg.mxu0
        %946 = vrot.lane.b32.xlu0 %v688, 64
        %v947 = vpop.permute.xlu0 %946
        %v950 = vsel %vm694, %v869, 0
        %952 = vmatprep.subr.mxu0 0.0
        %953 = vmatpush1.msra.mxu0 %v947
        %954 = vmatprep.subr.mxu0 0.0
        %955 = vmatpush1.msra.mxu0 0.0
        %956 = vmatprep.subr.mxu0 0.0
        %957 = vmatpush1.msra.mxu0 0.0
        %958 = vmatprep.subr.mxu0 0.0
        %959 = vmatpush1.msra.mxu0 0.0
        %960 = vmatprep.subr.mxu0 0.0
        %961 = vmatpush1.msra.mxu0 0.0
        %962 = vmatprep.subr.mxu0 0.0
        %963 = vmatpush1.msra.mxu0 0.0
        %964 = vmatprep.subr.mxu0 0.0
        %965 = vmatpush1.msra.mxu0 0.0
        %966 = vmatprep.subr.mxu0 0.0
        %967 = vmatpush1.msra.mxu0 0.0
        %968 = vmatprep.subr.mxu0 0.0
        %969 = vmatpush1.msra.mxu0 0.0
        %970 = vmatprep.subr.mxu0 0.0
        %971 = vmatpush1.msra.mxu0 0.0
        %972 = vmatprep.subr.mxu0 0.0
        %973 = vmatpush1.msra.mxu0 0.0
        %974 = vmatprep.subr.mxu0 0.0
        %975 = vmatpush1.msra.mxu0 0.0
        %976 = vmatprep.subr.mxu0 0.0
        %977 = vmatpush1.msra.mxu0 0.0
        %978 = vmatprep.subr.mxu0 0.0
        %979 = vmatpush1.msra.mxu0 0.0
        %980 = vmatprep.subr.mxu0 0.0
        %981 = vmatpush1.msra.mxu0 0.0
        %982 = vmatprep.subr.mxu0 0.0
        %983 = vmatpush1.msra.mxu0 0.0
        %984 = vmatprep.subr.mxu0 0.0
        %985 = vmatpush1.msra.mxu0 0.0
        %986 = vmatprep.subr.mxu0 0.0
        %987 = vmatpush1.msra.mxu0 0.0
        %988 = vmatprep.subr.mxu0 0.0
        %989 = vmatpush1.msra.mxu0 0.0
        %990 = vmatprep.subr.mxu0 0.0
        %991 = vmatpush1.msra.mxu0 0.0
        %992 = vmatprep.subr.mxu0 0.0
        %993 = vmatpush1.msra.mxu0 0.0
        %994 = vmatprep.subr.mxu0 0.0
        %995 = vmatpush1.msra.mxu0 0.0
        %996 = vmatprep.subr.mxu0 0.0
        %997 = vmatpush1.msra.mxu0 0.0
        %998 = vmatprep.subr.mxu0 0.0
        %999 = vmatpush1.msra.mxu0 0.0
        %1000 = vmatprep.subr.mxu0 0.0
        %1001 = vmatpush1.msra.mxu0 0.0
        %1002 = vmatprep.subr.mxu0 0.0
        %1003 = vmatpush1.msra.mxu0 0.0
        %1004 = vmatprep.subr.mxu0 0.0
        %1005 = vmatpush1.msra.mxu0 0.0
        %1006 = vmatprep.subr.mxu0 0.0
        %1007 = vmatpush1.msra.mxu0 0.0
        %1008 = vmatprep.subr.mxu0 0.0
        %1009 = vmatpush1.msra.mxu0 0.0
        %1010 = vmatprep.subr.mxu0 0.0
        %1011 = vmatpush1.msra.mxu0 0.0
        %1012 = vmatprep.subr.mxu0 0.0
        %1013 = vmatpush1.msra.mxu0 0.0
        %1014 = vmatprep.subr.mxu0 0.0
        %1015 = vmatpush1.msra.mxu0 0.0
        %1016 = vmatprep.mubr.f32.mxu0 0.0
        %1017 = vmatmul.mubr.f32.gmra.mrb[0].mxu0 %v950
        %v1018 = vpop.f32.mrb[0].mxu0
        %v1019 = vadd.f32 0.0, %v1018
        %v1020 = vpop.f32.mrb[0].mxu0
        %1021 = vdwg.mxu0
        %1022 = vrot.lane.b32.xlu0 %v683, 120
        %v1023 = vpop.permute.xlu0 %1022
        %1024 = vrot.lane.b32.xlu0 %v683, 88
        %v1025 = vpop.permute.xlu0 %1024
        %v1026 = vsel %vm694, %v1023, 0
        %v1028 = vsel %vm694, %v1025, 0
        %1030 = vmatprep.subr.mxu0 0.0
        %1031 = vmatpush1.xpose.msra.mxu0 %v1028
        %1032 = vmatprep.subr.mxu0 0.0
        %1033 = vmatpush1.xpose.msra.mxu0 0.0
        %1034 = vmatprep.subr.mxu0 0.0
        %1035 = vmatpush1.xpose.msra.mxu0 0.0
        %1036 = vmatprep.subr.mxu0 0.0
        %1037 = vmatpush1.xpose.msra.mxu0 0.0
        %1038 = vmatprep.subr.mxu0 0.0
        %1039 = vmatpush1.xpose.msra.mxu0 0.0
        %1040 = vmatprep.subr.mxu0 0.0
        %1041 = vmatpush1.xpose.msra.mxu0 0.0
        %1042 = vmatprep.subr.mxu0 0.0
        %1043 = vmatpush1.xpose.msra.mxu0 0.0
        %1044 = vmatprep.subr.mxu0 0.0
        %1045 = vmatpush1.xpose.msra.mxu0 0.0
        %1046 = vmatprep.subr.mxu0 0.0
        %1047 = vmatpush1.xpose.msra.mxu0 0.0
        %1048 = vmatprep.subr.mxu0 0.0
        %1049 = vmatpush1.xpose.msra.mxu0 0.0
        %1050 = vmatprep.subr.mxu0 0.0
        %1051 = vmatpush1.xpose.msra.mxu0 0.0
        %1052 = vmatprep.subr.mxu0 0.0
        %1053 = vmatpush1.xpose.msra.mxu0 0.0
        %1054 = vmatprep.subr.mxu0 0.0
        %1055 = vmatpush1.xpose.msra.mxu0 0.0
        %1056 = vmatprep.subr.mxu0 0.0
        %1057 = vmatpush1.xpose.msra.mxu0 0.0
        %1058 = vmatprep.subr.mxu0 0.0
        %1059 = vmatpush1.xpose.msra.mxu0 0.0
        %1060 = vmatprep.subr.mxu0 0.0
        %1061 = vmatpush1.xpose.msra.mxu0 0.0
        %1062 = vmatprep.subr.mxu0 0.0
        %1063 = vmatpush1.xpose.msra.mxu0 0.0
        %1064 = vmatprep.subr.mxu0 0.0
        %1065 = vmatpush1.xpose.msra.mxu0 0.0
        %1066 = vmatprep.subr.mxu0 0.0
        %1067 = vmatpush1.xpose.msra.mxu0 0.0
        %1068 = vmatprep.subr.mxu0 0.0
        %1069 = vmatpush1.xpose.msra.mxu0 0.0
        %1070 = vmatprep.subr.mxu0 0.0
        %1071 = vmatpush1.xpose.msra.mxu0 0.0
        %1072 = vmatprep.subr.mxu0 0.0
        %1073 = vmatpush1.xpose.msra.mxu0 0.0
        %1074 = vmatprep.subr.mxu0 0.0
        %1075 = vmatpush1.xpose.msra.mxu0 0.0
        %1076 = vmatprep.subr.mxu0 0.0
        %1077 = vmatpush1.xpose.msra.mxu0 0.0
        %1078 = vmatprep.subr.mxu0 0.0
        %1079 = vmatpush1.xpose.msra.mxu0 0.0
        %1080 = vmatprep.subr.mxu0 0.0
        %1081 = vmatpush1.xpose.msra.mxu0 0.0
        %1082 = vmatprep.subr.mxu0 0.0
        %1083 = vmatpush1.xpose.msra.mxu0 0.0
        %1084 = vmatprep.subr.mxu0 0.0
        %1085 = vmatpush1.xpose.msra.mxu0 0.0
        %1086 = vmatprep.subr.mxu0 0.0
        %1087 = vmatpush1.xpose.msra.mxu0 0.0
        %1088 = vmatprep.subr.mxu0 0.0
        %1089 = vmatpush1.xpose.msra.mxu0 0.0
        %1090 = vmatprep.subr.mxu0 0.0
        %1091 = vmatpush1.xpose.msra.mxu0 0.0
        %1092 = vmatprep.subr.mxu0 0.0
        %1093 = vmatpush1.xpose.msra.mxu0 0.0
        %1094 = vmatprep.mubr.f32.mxu0 0.0
        %1095 = vmatmul.mubr.f32.gmra.mrb[0].mxu0 %v1026
        %v1096 = vpop.f32.mrb[0].mxu0
        %v1097 = vadd.f32 0.0, %v1096
        %v1098 = vpop.f32.mrb[0].mxu0
        %1099 = vdwg.mxu0
        %1100 = vrot.lane.b32.xlu0 %v688, 120
        %v1101 = vpop.permute.xlu0 %1100
        %1102 = vrot.lane.b32.xlu0 %v688, 88
        %v1103 = vpop.permute.xlu0 %1102
        %v1104 = vsel %vm694, %v1101, 0
        %v1106 = vsel %vm694, %v1103, 0
        %1108 = vmatprep.subr.mxu0 0.0
        %1109 = vmatpush1.xpose.msra.mxu0 %v1106
        %1110 = vmatprep.subr.mxu0 0.0
        %1111 = vmatpush1.xpose.msra.mxu0 0.0
        %1112 = vmatprep.subr.mxu0 0.0
        %1113 = vmatpush1.xpose.msra.mxu0 0.0
        %1114 = vmatprep.subr.mxu0 0.0
        %1115 = vmatpush1.xpose.msra.mxu0 0.0
        %1116 = vmatprep.subr.mxu0 0.0
        %1117 = vmatpush1.xpose.msra.mxu0 0.0
        %1118 = vmatprep.subr.mxu0 0.0
        %1119 = vmatpush1.xpose.msra.mxu0 0.0
        %1120 = vmatprep.subr.mxu0 0.0
        %1121 = vmatpush1.xpose.msra.mxu0 0.0
        %1122 = vmatprep.subr.mxu0 0.0
        %1123 = vmatpush1.xpose.msra.mxu0 0.0
        %1124 = vmatprep.subr.mxu0 0.0
        %1125 = vmatpush1.xpose.msra.mxu0 0.0
        %1126 = vmatprep.subr.mxu0 0.0
        %1127 = vmatpush1.xpose.msra.mxu0 0.0
        %1128 = vmatprep.subr.mxu0 0.0
        %1129 = vmatpush1.xpose.msra.mxu0 0.0
        %1130 = vmatprep.subr.mxu0 0.0
        %1131 = vmatpush1.xpose.msra.mxu0 0.0
        %1132 = vmatprep.subr.mxu0 0.0
        %1133 = vmatpush1.xpose.msra.mxu0 0.0
        %1134 = vmatprep.subr.mxu0 0.0
        %1135 = vmatpush1.xpose.msra.mxu0 0.0
        %1136 = vmatprep.subr.mxu0 0.0
        %1137 = vmatpush1.xpose.msra.mxu0 0.0
        %1138 = vmatprep.subr.mxu0 0.0
        %1139 = vmatpush1.xpose.msra.mxu0 0.0
        %1140 = vmatprep.subr.mxu0 0.0
        %1141 = vmatpush1.xpose.msra.mxu0 0.0
        %1142 = vmatprep.subr.mxu0 0.0
        %1143 = vmatpush1.xpose.msra.mxu0 0.0
        %1144 = vmatprep.subr.mxu0 0.0
        %1145 = vmatpush1.xpose.msra.mxu0 0.0
        %1146 = vmatprep.subr.mxu0 0.0
        %1147 = vmatpush1.xpose.msra.mxu0 0.0
        %1148 = vmatprep.subr.mxu0 0.0
        %1149 = vmatpush1.xpose.msra.mxu0 0.0
        %1150 = vmatprep.subr.mxu0 0.0
        %1151 = vmatpush1.xpose.msra.mxu0 0.0
        %1152 = vmatprep.subr.mxu0 0.0
        %1153 = vmatpush1.xpose.msra.mxu0 0.0
        %1154 = vmatprep.subr.mxu0 0.0
        %1155 = vmatpush1.xpose.msra.mxu0 0.0
        %1156 = vmatprep.subr.mxu0 0.0
        %1157 = vmatpush1.xpose.msra.mxu0 0.0
        %1158 = vmatprep.subr.mxu0 0.0
        %1159 = vmatpush1.xpose.msra.mxu0 0.0
        %1160 = vmatprep.subr.mxu0 0.0
        %1161 = vmatpush1.xpose.msra.mxu0 0.0
        %1162 = vmatprep.subr.mxu0 0.0
        %1163 = vmatpush1.xpose.msra.mxu0 0.0
        %1164 = vmatprep.subr.mxu0 0.0
        %1165 = vmatpush1.xpose.msra.mxu0 0.0
        %1166 = vmatprep.subr.mxu0 0.0
        %1167 = vmatpush1.xpose.msra.mxu0 0.0
        %1168 = vmatprep.subr.mxu0 0.0
        %1169 = vmatpush1.xpose.msra.mxu0 0.0
        %1170 = vmatprep.subr.mxu0 0.0
        %1171 = vmatpush1.xpose.msra.mxu0 0.0
        %1172 = vmatprep.mubr.f32.mxu0 0.0
        %1173 = vmatmul.mubr.f32.gmra.mrb[0].mxu0 %v1104
        %v1174 = vpop.f32.mrb[0].mxu0
        %v1175 = vadd.f32 0.0, %v1174
        %v1176 = vpop.f32.mrb[0].mxu0
        %1177 = vdwg.mxu0
        %v1178 = vmul.f32 %v1097, 0.35355338
        %v1179 = vmul.f32 %v1175, 0.35355338
        %v1180 = vsel %vm694, %v1178, -inf
        %1181 = vmax.xlane.f32.xlu0 %v1180
        %v1182 = vpop.xlane.xlu0 %1181
        %v1183 = vsel %vm694, %v1179, -inf
        %1184 = vmax.xlane.f32.xlu0 %v1183
        %v1185 = vpop.xlane.xlu0 %1184
        %v1186 = vsub.f32 %v1178, %v1182
        %v1187 = vsub.f32 %v1179, %v1185
        %v1188 = vmul.f32 %v1186, 1.442695
        %v1189 = vpow.pop %v1188
        %v1190 = vmul.f32 %v1187, 1.442695
        %v1191 = vpow.pop %v1190
        %v1192 = vsel %vm694, %v1189, 0.0
        %1193 = vadd.xlane.f32.xlu0 %v1192
        %v1194 = vpop.xlane.xlu0 %1193
        %v1195 = vsel %vm694, %v1191, 0.0
        %1196 = vadd.xlane.f32.xlu0 %v1195
        %v1197 = vpop.xlane.xlu0 %1196
        %v1198 = vrcp.pop %v1194
        %v1199 = vrcp.pop %v1197
        %v1200 = vmul.f32 %v1189, %v1198
        %v1201 = vmul.f32 %v1191, %v1199
        %1202 = vrot.lane.b32.xlu0 %v683, 56
        %v1203 = vpop.permute.xlu0 %1202
        %v1206 = vsel %vm694, %v1200, 0
        %1208 = vmatprep.subr.mxu0 0.0
        %1209 = vmatpush1.msra.mxu0 %v1203
        %1210 = vmatprep.subr.mxu0 0.0
        %1211 = vmatpush1.msra.mxu0 0.0
        %1212 = vmatprep.subr.mxu0 0.0
        %1213 = vmatpush1.msra.mxu0 0.0
        %1214 = vmatprep.subr.mxu0 0.0
        %1215 = vmatpush1.msra.mxu0 0.0
        %1216 = vmatprep.subr.mxu0 0.0
        %1217 = vmatpush1.msra.mxu0 0.0
        %1218 = vmatprep.subr.mxu0 0.0
        %1219 = vmatpush1.msra.mxu0 0.0
        %1220 = vmatprep.subr.mxu0 0.0
        %1221 = vmatpush1.msra.mxu0 0.0
        %1222 = vmatprep.subr.mxu0 0.0
        %1223 = vmatpush1.msra.mxu0 0.0
        %1224 = vmatprep.subr.mxu0 0.0
        %1225 = vmatpush1.msra.mxu0 0.0
        %1226 = vmatprep.subr.mxu0 0.0
        %1227 = vmatpush1.msra.mxu0 0.0
        %1228 = vmatprep.subr.mxu0 0.0
        %1229 = vmatpush1.msra.mxu0 0.0
        %1230 = vmatprep.subr.mxu0 0.0
        %1231 = vmatpush1.msra.mxu0 0.0
        %1232 = vmatprep.subr.mxu0 0.0
        %1233 = vmatpush1.msra.mxu0 0.0
        %1234 = vmatprep.subr.mxu0 0.0
        %1235 = vmatpush1.msra.mxu0 0.0
        %1236 = vmatprep.subr.mxu0 0.0
        %1237 = vmatpush1.msra.mxu0 0.0
        %1238 = vmatprep.subr.mxu0 0.0
        %1239 = vmatpush1.msra.mxu0 0.0
        %1240 = vmatprep.subr.mxu0 0.0
        %1241 = vmatpush1.msra.mxu0 0.0
        %1242 = vmatprep.subr.mxu0 0.0
        %1243 = vmatpush1.msra.mxu0 0.0
        %1244 = vmatprep.subr.mxu0 0.0
        %1245 = vmatpush1.msra.mxu0 0.0
        %1246 = vmatprep.subr.mxu0 0.0
        %1247 = vmatpush1.msra.mxu0 0.0
        %1248 = vmatprep.subr.mxu0 0.0
        %1249 = vmatpush1.msra.mxu0 0.0
        %1250 = vmatprep.subr.mxu0 0.0
        %1251 = vmatpush1.msra.mxu0 0.0
        %1252 = vmatprep.subr.mxu0 0.0
        %1253 = vmatpush1.msra.mxu0 0.0
        %1254 = vmatprep.subr.mxu0 0.0
        %1255 = vmatpush1.msra.mxu0 0.0
        %1256 = vmatprep.subr.mxu0 0.0
        %1257 = vmatpush1.msra.mxu0 0.0
        %1258 = vmatprep.subr.mxu0 0.0
        %1259 = vmatpush1.msra.mxu0 0.0
        %1260 = vmatprep.subr.mxu0 0.0
        %1261 = vmatpush1.msra.mxu0 0.0
        %1262 = vmatprep.subr.mxu0 0.0
        %1263 = vmatpush1.msra.mxu0 0.0
        %1264 = vmatprep.subr.mxu0 0.0
        %1265 = vmatpush1.msra.mxu0 0.0
        %1266 = vmatprep.subr.mxu0 0.0
        %1267 = vmatpush1.msra.mxu0 0.0
        %1268 = vmatprep.subr.mxu0 0.0
        %1269 = vmatpush1.msra.mxu0 0.0
        %1270 = vmatprep.subr.mxu0 0.0
        %1271 = vmatpush1.msra.mxu0 0.0
        %1272 = vmatprep.mubr.f32.mxu0 0.0
        %1273 = vmatmul.mubr.f32.gmra.mrb[0].mxu0 %v1206
        %v1274 = vpop.f32.mrb[0].mxu0
        %v1275 = vadd.f32 0.0, %v1274
        %v1276 = vpop.f32.mrb[0].mxu0
        %1277 = vdwg.mxu0
        %1278 = vrot.lane.b32.xlu0 %v688, 56
        %v1279 = vpop.permute.xlu0 %1278
        %v1282 = vsel %vm694, %v1201, 0
        %1284 = vmatprep.subr.mxu0 0.0
        %1285 = vmatpush1.msra.mxu0 %v1279
        %1286 = vmatprep.subr.mxu0 0.0
        %1287 = vmatpush1.msra.mxu0 0.0
        %1288 = vmatprep.subr.mxu0 0.0
        %1289 = vmatpush1.msra.mxu0 0.0
        %1290 = vmatprep.subr.mxu0 0.0
        %1291 = vmatpush1.msra.mxu0 0.0
        %1292 = vmatprep.subr.mxu0 0.0
        %1293 = vmatpush1.msra.mxu0 0.0
        %1294 = vmatprep.subr.mxu0 0.0
        %1295 = vmatpush1.msra.mxu0 0.0
        %1296 = vmatprep.subr.mxu0 0.0
        %1297 = vmatpush1.msra.mxu0 0.0
        %1298 = vmatprep.subr.mxu0 0.0
        %1299 = vmatpush1.msra.mxu0 0.0
        %1300 = vmatprep.subr.mxu0 0.0
        %1301 = vmatpush1.msra.mxu0 0.0
        %1302 = vmatprep.subr.mxu0 0.0
        %1303 = vmatpush1.msra.mxu0 0.0
        %1304 = vmatprep.subr.mxu0 0.0
        %1305 = vmatpush1.msra.mxu0 0.0
        %1306 = vmatprep.subr.mxu0 0.0
        %1307 = vmatpush1.msra.mxu0 0.0
        %1308 = vmatprep.subr.mxu0 0.0
        %1309 = vmatpush1.msra.mxu0 0.0
        %1310 = vmatprep.subr.mxu0 0.0
        %1311 = vmatpush1.msra.mxu0 0.0
        %1312 = vmatprep.subr.mxu0 0.0
        %1313 = vmatpush1.msra.mxu0 0.0
        %1314 = vmatprep.subr.mxu0 0.0
        %1315 = vmatpush1.msra.mxu0 0.0
        %1316 = vmatprep.subr.mxu0 0.0
        %1317 = vmatpush1.msra.mxu0 0.0
        %1318 = vmatprep.subr.mxu0 0.0
        %1319 = vmatpush1.msra.mxu0 0.0
        %1320 = vmatprep.subr.mxu0 0.0
        %1321 = vmatpush1.msra.mxu0 0.0
        %1322 = vmatprep.subr.mxu0 0.0
        %1323 = vmatpush1.msra.mxu0 0.0
        %1324 = vmatprep.subr.mxu0 0.0
        %1325 = vmatpush1.msra.mxu0 0.0
        %1326 = vmatprep.subr.mxu0 0.0
        %1327 = vmatpush1.msra.mxu0 0.0
        %1328 = vmatprep.subr.mxu0 0.0
        %1329 = vmatpush1.msra.mxu0 0.0
        %1330 = vmatprep.subr.mxu0 0.0
        %1331 = vmatpush1.msra.mxu0 0.0
        %1332 = vmatprep.subr.mxu0 0.0
        %1333 = vmatpush1.msra.mxu0 0.0
        %1334 = vmatprep.subr.mxu0 0.0
        %1335 = vmatpush1.msra.mxu0 0.0
        %1336 = vmatprep.subr.mxu0 0.0
        %1337 = vmatpush1.msra.mxu0 0.0
        %1338 = vmatprep.subr.mxu0 0.0
        %1339 = vmatpush1.msra.mxu0 0.0
        %1340 = vmatprep.subr.mxu0 0.0
        %1341 = vmatpush1.msra.mxu0 0.0
        %1342 = vmatprep.subr.mxu0 0.0
        %1343 = vmatpush1.msra.mxu0 0.0
        %1344 = vmatprep.subr.mxu0 0.0
        %1345 = vmatpush1.msra.mxu0 0.0
        %1346 = vmatprep.subr.mxu0 0.0
        %1347 = vmatpush1.msra.mxu0 0.0
        %1348 = vmatprep.mubr.f32.mxu0 0.0
        %1349 = vmatmul.mubr.f32.gmra.mrb[0].mxu0 %v1282
        %v1350 = vpop.f32.mrb[0].mxu0
        %v1351 = vadd.f32 0.0, %v1350
        %v1352 = vpop.f32.mrb[0].mxu0
        %1353 = vdwg.mxu0
        %v1355 = vsel %vm694, %v1275, 0
        %v1358 = vsel %vm694, %v1351, 0
        %1360 = vmatprep.subr.mxu0 0.0
        %1361 = vmatpush1.msra.mxu0 %v533
        %1362 = vmatprep.subr.mxu0 0.0
        %1363 = vmatpush1.msra.mxu0 0.0
        %1364 = vmatprep.subr.mxu0 0.0
        %1365 = vmatpush1.msra.mxu0 0.0
        %1366 = vmatprep.subr.mxu0 0.0
        %1367 = vmatpush1.msra.mxu0 0.0
        %1368 = vmatprep.subr.mxu0 0.0
        %1369 = vmatpush1.msra.mxu0 0.0
        %1370 = vmatprep.subr.mxu0 0.0
        %1371 = vmatpush1.msra.mxu0 0.0
        %1372 = vmatprep.subr.mxu0 0.0
        %1373 = vmatpush1.msra.mxu0 0.0
        %1374 = vmatprep.subr.mxu0 0.0
        %1375 = vmatpush1.msra.mxu0 0.0
        %1376 = vmatprep.subr.mxu0 0.0
        %1377 = vmatpush1.msra.mxu0 0.0
        %1378 = vmatprep.subr.mxu0 0.0
        %1379 = vmatpush1.msra.mxu0 0.0
        %1380 = vmatprep.subr.mxu0 0.0
        %1381 = vmatpush1.msra.mxu0 0.0
        %1382 = vmatprep.subr.mxu0 0.0
        %1383 = vmatpush1.msra.mxu0 0.0
        %1384 = vmatprep.subr.mxu0 0.0
        %1385 = vmatpush1.msra.mxu0 0.0
        %1386 = vmatprep.subr.mxu0 0.0
        %1387 = vmatpush1.msra.mxu0 0.0
        %1388 = vmatprep.subr.mxu0 0.0
        %1389 = vmatpush1.msra.mxu0 0.0
        %1390 = vmatprep.subr.mxu0 0.0
        %1391 = vmatpush1.msra.mxu0 0.0
        %1392 = vmatprep.subr.mxu0 0.0
        %1393 = vmatpush1.msra.mxu0 0.0
        %1394 = vmatprep.subr.mxu0 0.0
        %1395 = vmatpush1.msra.mxu0 0.0
        %1396 = vmatprep.subr.mxu0 0.0
        %1397 = vmatpush1.msra.mxu0 0.0
        %1398 = vmatprep.subr.mxu0 0.0
        %1399 = vmatpush1.msra.mxu0 0.0
        %1400 = vmatprep.subr.mxu0 0.0
        %1401 = vmatpush1.msra.mxu0 0.0
        %1402 = vmatprep.subr.mxu0 0.0
        %1403 = vmatpush1.msra.mxu0 0.0
        %1404 = vmatprep.subr.mxu0 0.0
        %1405 = vmatpush1.msra.mxu0 0.0
        %1406 = vmatprep.subr.mxu0 0.0
        %1407 = vmatpush1.msra.mxu0 0.0
        %1408 = vmatprep.subr.mxu0 0.0
        %1409 = vmatpush1.msra.mxu0 0.0
        %1410 = vmatprep.subr.mxu0 0.0
        %1411 = vmatpush1.msra.mxu0 0.0
        %1412 = vmatprep.subr.mxu0 0.0
        %1413 = vmatpush1.msra.mxu0 0.0
        %1414 = vmatprep.subr.mxu0 0.0
        %1415 = vmatpush1.msra.mxu0 0.0
        %1416 = vmatprep.subr.mxu0 0.0
        %1417 = vmatpush1.msra.mxu0 0.0
        %1418 = vmatprep.subr.mxu0 0.0
        %1419 = vmatpush1.msra.mxu0 0.0
        %1420 = vmatprep.subr.mxu0 0.0
        %1421 = vmatpush1.msra.mxu0 0.0
        %1422 = vmatprep.subr.mxu0 0.0
        %1423 = vmatpush1.msra.mxu0 0.0
        %1424 = vmatprep.mubr.f32.mxu0 0.0
        %1425 = vmatmul.mubr.f32.gmra.mrb[0].mxu0 %v1355
        %v1426 = vpop.f32.mrb[0].mxu0
        %v1427 = vadd.f32 0.0, %v1426
        %v1428 = vpop.f32.mrb[0].mxu0
        %1429 = vmatprep.mubr.f32.mxu0 0.0
        %1430 = vmatmul.mubr.f32.gmra.mrb[0].mxu0 %v1358
        %v1431 = vpop.f32.mrb[0].mxu0
        %v1432 = vadd.f32 0.0, %v1431
        %v1433 = vpop.f32.mrb[0].mxu0
        %1434 = vdwg.mxu0
        %v1436 = vsel %vm694, %v943, 0
        %v1439 = vsel %vm694, %v1019, 0
        %1441 = vmatprep.subr.mxu0 0.0
        %1442 = vmatpush1.msra.mxu0 %v532
        %1443 = vmatprep.subr.mxu0 0.0
        %1444 = vmatpush1.msra.mxu0 0.0
        %1445 = vmatprep.subr.mxu0 0.0
        %1446 = vmatpush1.msra.mxu0 0.0
        %1447 = vmatprep.subr.mxu0 0.0
        %1448 = vmatpush1.msra.mxu0 0.0
        %1449 = vmatprep.subr.mxu0 0.0
        %1450 = vmatpush1.msra.mxu0 0.0
        %1451 = vmatprep.subr.mxu0 0.0
        %1452 = vmatpush1.msra.mxu0 0.0
        %1453 = vmatprep.subr.mxu0 0.0
        %1454 = vmatpush1.msra.mxu0 0.0
        %1455 = vmatprep.subr.mxu0 0.0
        %1456 = vmatpush1.msra.mxu0 0.0
        %1457 = vmatprep.subr.mxu0 0.0
        %1458 = vmatpush1.msra.mxu0 0.0
        %1459 = vmatprep.subr.mxu0 0.0
        %1460 = vmatpush1.msra.mxu0 0.0
        %1461 = vmatprep.subr.mxu0 0.0
        %1462 = vmatpush1.msra.mxu0 0.0
        %1463 = vmatprep.subr.mxu0 0.0
        %1464 = vmatpush1.msra.mxu0 0.0
        %1465 = vmatprep.subr.mxu0 0.0
        %1466 = vmatpush1.msra.mxu0 0.0
        %1467 = vmatprep.subr.mxu0 0.0
        %1468 = vmatpush1.msra.mxu0 0.0
        %1469 = vmatprep.subr.mxu0 0.0
        %1470 = vmatpush1.msra.mxu0 0.0
        %1471 = vmatprep.subr.mxu0 0.0
        %1472 = vmatpush1.msra.mxu0 0.0
        %1473 = vmatprep.subr.mxu0 0.0
        %1474 = vmatpush1.msra.mxu0 0.0
        %1475 = vmatprep.subr.mxu0 0.0
        %1476 = vmatpush1.msra.mxu0 0.0
        %1477 = vmatprep.subr.mxu0 0.0
        %1478 = vmatpush1.msra.mxu0 0.0
        %1479 = vmatprep.subr.mxu0 0.0
        %1480 = vmatpush1.msra.mxu0 0.0
        %1481 = vmatprep.subr.mxu0 0.0
        %1482 = vmatpush1.msra.mxu0 0.0
        %1483 = vmatprep.subr.mxu0 0.0
        %1484 = vmatpush1.msra.mxu0 0.0
        %1485 = vmatprep.subr.mxu0 0.0
        %1486 = vmatpush1.msra.mxu0 0.0
        %1487 = vmatprep.subr.mxu0 0.0
        %1488 = vmatpush1.msra.mxu0 0.0
        %1489 = vmatprep.subr.mxu0 0.0
        %1490 = vmatpush1.msra.mxu0 0.0
        %1491 = vmatprep.subr.mxu0 0.0
        %1492 = vmatpush1.msra.mxu0 0.0
        %1493 = vmatprep.subr.mxu0 0.0
        %1494 = vmatpush1.msra.mxu0 0.0
        %1495 = vmatprep.subr.mxu0 0.0
        %1496 = vmatpush1.msra.mxu0 0.0
        %1497 = vmatprep.subr.mxu0 0.0
        %1498 = vmatpush1.msra.mxu0 0.0
        %1499 = vmatprep.subr.mxu0 0.0
        %1500 = vmatpush1.msra.mxu0 0.0
        %1501 = vmatprep.subr.mxu0 0.0
        %1502 = vmatpush1.msra.mxu0 0.0
        %1503 = vmatprep.subr.mxu0 0.0
        %1504 = vmatpush1.msra.mxu0 0.0
        %1505 = vmatprep.mubr.f32.mxu0 0.0
        %1506 = vmatmul.mubr.f32.gmra.mrb[0].mxu0 %v1436
        %v1507 = vpop.f32.mrb[0].mxu0
        %v1508 = vadd.f32 %v1427, %v1507
        %v1509 = vpop.f32.mrb[0].mxu0
        %1510 = vmatprep.mubr.f32.mxu0 0.0
        %1511 = vmatmul.mubr.f32.gmra.mrb[0].mxu0 %v1439
        %v1512 = vpop.f32.mrb[0].mxu0
        %v1513 = vadd.f32 %v1432, %v1512
        %v1514 = vpop.f32.mrb[0].mxu0
        %1515 = vdwg.mxu0
        %1516 = vrot.lane.b32.xlu0 %v683, 112
        %v1517 = vpop.permute.xlu0 %1516
        %1518 = vrot.lane.b32.xlu0 %v683, 80
        %v1519 = vpop.permute.xlu0 %1518
        %v1520 = vsel %vm694, %v1517, 0
        %v1522 = vsel %vm694, %v1519, 0
        %1524 = vmatprep.subr.mxu0 0.0
        %1525 = vmatpush1.xpose.msra.mxu0 %v1522
        %1526 = vmatprep.subr.mxu0 0.0
        %1527 = vmatpush1.xpose.msra.mxu0 0.0
        %1528 = vmatprep.subr.mxu0 0.0
        %1529 = vmatpush1.xpose.msra.mxu0 0.0
        %1530 = vmatprep.subr.mxu0 0.0
        %1531 = vmatpush1.xpose.msra.mxu0 0.0
        %1532 = vmatprep.subr.mxu0 0.0
        %1533 = vmatpush1.xpose.msra.mxu0 0.0
        %1534 = vmatprep.subr.mxu0 0.0
        %1535 = vmatpush1.xpose.msra.mxu0 0.0
        %1536 = vmatprep.subr.mxu0 0.0
        %1537 = vmatpush1.xpose.msra.mxu0 0.0
        %1538 = vmatprep.subr.mxu0 0.0
        %1539 = vmatpush1.xpose.msra.mxu0 0.0
        %1540 = vmatprep.subr.mxu0 0.0
        %1541 = vmatpush1.xpose.msra.mxu0 0.0
        %1542 = vmatprep.subr.mxu0 0.0
        %1543 = vmatpush1.xpose.msra.mxu0 0.0
        %1544 = vmatprep.subr.mxu0 0.0
        %1545 = vmatpush1.xpose.msra.mxu0 0.0
        %1546 = vmatprep.subr.mxu0 0.0
        %1547 = vmatpush1.xpose.msra.mxu0 0.0
        %1548 = vmatprep.subr.mxu0 0.0
        %1549 = vmatpush1.xpose.msra.mxu0 0.0
        %1550 = vmatprep.subr.mxu0 0.0
        %1551 = vmatpush1.xpose.msra.mxu0 0.0
        %1552 = vmatprep.subr.mxu0 0.0
        %1553 = vmatpush1.xpose.msra.mxu0 0.0
        %1554 = vmatprep.subr.mxu0 0.0
        %1555 = vmatpush1.xpose.msra.mxu0 0.0
        %1556 = vmatprep.subr.mxu0 0.0
        %1557 = vmatpush1.xpose.msra.mxu0 0.0
        %1558 = vmatprep.subr.mxu0 0.0
        %1559 = vmatpush1.xpose.msra.mxu0 0.0
        %1560 = vmatprep.subr.mxu0 0.0
        %1561 = vmatpush1.xpose.msra.mxu0 0.0
        %1562 = vmatprep.subr.mxu0 0.0
        %1563 = vmatpush1.xpose.msra.mxu0 0.0
        %1564 = vmatprep.subr.mxu0 0.0
        %1565 = vmatpush1.xpose.msra.mxu0 0.0
        %1566 = vmatprep.subr.mxu0 0.0
        %1567 = vmatpush1.xpose.msra.mxu0 0.0
        %1568 = vmatprep.subr.mxu0 0.0
        %1569 = vmatpush1.xpose.msra.mxu0 0.0
        %1570 = vmatprep.subr.mxu0 0.0
        %1571 = vmatpush1.xpose.msra.mxu0 0.0
        %1572 = vmatprep.subr.mxu0 0.0
        %1573 = vmatpush1.xpose.msra.mxu0 0.0
        %1574 = vmatprep.subr.mxu0 0.0
        %1575 = vmatpush1.xpose.msra.mxu0 0.0
        %1576 = vmatprep.subr.mxu0 0.0
        %1577 = vmatpush1.xpose.msra.mxu0 0.0
        %1578 = vmatprep.subr.mxu0 0.0
        %1579 = vmatpush1.xpose.msra.mxu0 0.0
        %1580 = vmatprep.subr.mxu0 0.0
        %1581 = vmatpush1.xpose.msra.mxu0 0.0
        %1582 = vmatprep.subr.mxu0 0.0
        %1583 = vmatpush1.xpose.msra.mxu0 0.0
        %1584 = vmatprep.subr.mxu0 0.0
        %1585 = vmatpush1.xpose.msra.mxu0 0.0
        %1586 = vmatprep.subr.mxu0 0.0
        %1587 = vmatpush1.xpose.msra.mxu0 0.0
        %1588 = vmatprep.mubr.f32.mxu0 0.0
        %1589 = vmatmul.mubr.f32.gmra.mrb[0].mxu0 %v1520
        %v1590 = vpop.f32.mrb[0].mxu0
        %v1591 = vadd.f32 0.0, %v1590
        %v1592 = vpop.f32.mrb[0].mxu0
        %1593 = vdwg.mxu0
        %1594 = vrot.lane.b32.xlu0 %v688, 112
        %v1595 = vpop.permute.xlu0 %1594
        %1596 = vrot.lane.b32.xlu0 %v688, 80
        %v1597 = vpop.permute.xlu0 %1596
        %v1598 = vsel %vm694, %v1595, 0
        %v1600 = vsel %vm694, %v1597, 0
        %1602 = vmatprep.subr.mxu0 0.0
        %1603 = vmatpush1.xpose.msra.mxu0 %v1600
        %1604 = vmatprep.subr.mxu0 0.0
        %1605 = vmatpush1.xpose.msra.mxu0 0.0
        %1606 = vmatprep.subr.mxu0 0.0
        %1607 = vmatpush1.xpose.msra.mxu0 0.0
        %1608 = vmatprep.subr.mxu0 0.0
        %1609 = vmatpush1.xpose.msra.mxu0 0.0
        %1610 = vmatprep.subr.mxu0 0.0
        %1611 = vmatpush1.xpose.msra.mxu0 0.0
        %1612 = vmatprep.subr.mxu0 0.0
        %1613 = vmatpush1.xpose.msra.mxu0 0.0
        %1614 = vmatprep.subr.mxu0 0.0
        %1615 = vmatpush1.xpose.msra.mxu0 0.0
        %1616 = vmatprep.subr.mxu0 0.0
        %1617 = vmatpush1.xpose.msra.mxu0 0.0
        %1618 = vmatprep.subr.mxu0 0.0
        %1619 = vmatpush1.xpose.msra.mxu0 0.0
        %1620 = vmatprep.subr.mxu0 0.0
        %1621 = vmatpush1.xpose.msra.mxu0 0.0
        %1622 = vmatprep.subr.mxu0 0.0
        %1623 = vmatpush1.xpose.msra.mxu0 0.0
        %1624 = vmatprep.subr.mxu0 0.0
        %1625 = vmatpush1.xpose.msra.mxu0 0.0
        %1626 = vmatprep.subr.mxu0 0.0
        %1627 = vmatpush1.xpose.msra.mxu0 0.0
        %1628 = vmatprep.subr.mxu0 0.0
        %1629 = vmatpush1.xpose.msra.mxu0 0.0
        %1630 = vmatprep.subr.mxu0 0.0
        %1631 = vmatpush1.xpose.msra.mxu0 0.0
        %1632 = vmatprep.subr.mxu0 0.0
        %1633 = vmatpush1.xpose.msra.mxu0 0.0
        %1634 = vmatprep.subr.mxu0 0.0
        %1635 = vmatpush1.xpose.msra.mxu0 0.0
        %1636 = vmatprep.subr.mxu0 0.0
        %1637 = vmatpush1.xpose.msra.mxu0 0.0
        %1638 = vmatprep.subr.mxu0 0.0
        %1639 = vmatpush1.xpose.msra.mxu0 0.0
        %1640 = vmatprep.subr.mxu0 0.0
        %1641 = vmatpush1.xpose.msra.mxu0 0.0
        %1642 = vmatprep.subr.mxu0 0.0
        %1643 = vmatpush1.xpose.msra.mxu0 0.0
        %1644 = vmatprep.subr.mxu0 0.0
        %1645 = vmatpush1.xpose.msra.mxu0 0.0
        %1646 = vmatprep.subr.mxu0 0.0
        %1647 = vmatpush1.xpose.msra.mxu0 0.0
        %1648 = vmatprep.subr.mxu0 0.0
        %1649 = vmatpush1.xpose.msra.mxu0 0.0
        %1650 = vmatprep.subr.mxu0 0.0
        %1651 = vmatpush1.xpose.msra.mxu0 0.0
        %1652 = vmatprep.subr.mxu0 0.0
        %1653 = vmatpush1.xpose.msra.mxu0 0.0
        %1654 = vmatprep.subr.mxu0 0.0
        %1655 = vmatpush1.xpose.msra.mxu0 0.0
        %1656 = vmatprep.subr.mxu0 0.0
        %1657 = vmatpush1.xpose.msra.mxu0 0.0
        %1658 = vmatprep.subr.mxu0 0.0
        %1659 = vmatpush1.xpose.msra.mxu0 0.0
        %1660 = vmatprep.subr.mxu0 0.0
        %1661 = vmatpush1.xpose.msra.mxu0 0.0
        %1662 = vmatprep.subr.mxu0 0.0
        %1663 = vmatpush1.xpose.msra.mxu0 0.0
        %1664 = vmatprep.subr.mxu0 0.0
        %1665 = vmatpush1.xpose.msra.mxu0 0.0
        %1666 = vmatprep.mubr.f32.mxu0 0.0
        %1667 = vmatmul.mubr.f32.gmra.mrb[0].mxu0 %v1598
        %v1668 = vpop.f32.mrb[0].mxu0
        %v1669 = vadd.f32 0.0, %v1668
        %v1670 = vpop.f32.mrb[0].mxu0
        %1671 = vdwg.mxu0
        %v1672 = vmul.f32 %v1591, 0.35355338
        %v1673 = vmul.f32 %v1669, 0.35355338
        %v1674 = vsel %vm694, %v1672, -inf
        %1675 = vmax.xlane.f32.xlu0 %v1674
        %v1676 = vpop.xlane.xlu0 %1675
        %v1677 = vsel %vm694, %v1673, -inf
        %1678 = vmax.xlane.f32.xlu0 %v1677
        %v1679 = vpop.xlane.xlu0 %1678
        %v1680 = vsub.f32 %v1672, %v1676
        %v1681 = vsub.f32 %v1673, %v1679
        %v1682 = vmul.f32 %v1680, 1.442695
        %v1683 = vpow.pop %v1682
        %v1684 = vmul.f32 %v1681, 1.442695
        %v1685 = vpow.pop %v1684
        %v1686 = vsel %vm694, %v1683, 0.0
        %1687 = vadd.xlane.f32.xlu0 %v1686
        %v1688 = vpop.xlane.xlu0 %1687
        %v1689 = vsel %vm694, %v1685, 0.0
        %1690 = vadd.xlane.f32.xlu0 %v1689
        %v1691 = vpop.xlane.xlu0 %1690
        %v1692 = vrcp.pop %v1688
        %v1693 = vrcp.pop %v1691
        %v1694 = vmul.f32 %v1683, %v1692
        %v1695 = vmul.f32 %v1685, %v1693
        %1696 = vrot.lane.b32.xlu0 %v683, 48
        %v1697 = vpop.permute.xlu0 %1696
        %v1700 = vsel %vm694, %v1694, 0
        %1702 = vmatprep.subr.mxu0 0.0
        %1703 = vmatpush1.msra.mxu0 %v1697
        %1704 = vmatprep.subr.mxu0 0.0
        %1705 = vmatpush1.msra.mxu0 0.0
        %1706 = vmatprep.subr.mxu0 0.0
        %1707 = vmatpush1.msra.mxu0 0.0
        %1708 = vmatprep.subr.mxu0 0.0
        %1709 = vmatpush1.msra.mxu0 0.0
        %1710 = vmatprep.subr.mxu0 0.0
        %1711 = vmatpush1.msra.mxu0 0.0
        %1712 = vmatprep.subr.mxu0 0.0
        %1713 = vmatpush1.msra.mxu0 0.0
        %1714 = vmatprep.subr.mxu0 0.0
        %1715 = vmatpush1.msra.mxu0 0.0
        %1716 = vmatprep.subr.mxu0 0.0
        %1717 = vmatpush1.msra.mxu0 0.0
        %1718 = vmatprep.subr.mxu0 0.0
        %1719 = vmatpush1.msra.mxu0 0.0
        %1720 = vmatprep.subr.mxu0 0.0
        %1721 = vmatpush1.msra.mxu0 0.0
        %1722 = vmatprep.subr.mxu0 0.0
        %1723 = vmatpush1.msra.mxu0 0.0
        %1724 = vmatprep.subr.mxu0 0.0
        %1725 = vmatpush1.msra.mxu0 0.0
        %1726 = vmatprep.subr.mxu0 0.0
        %1727 = vmatpush1.msra.mxu0 0.0
        %1728 = vmatprep.subr.mxu0 0.0
        %1729 = vmatpush1.msra.mxu0 0.0
        %1730 = vmatprep.subr.mxu0 0.0
        %1731 = vmatpush1.msra.mxu0 0.0
        %1732 = vmatprep.subr.mxu0 0.0
        %1733 = vmatpush1.msra.mxu0 0.0
        %1734 = vmatprep.subr.mxu0 0.0
        %1735 = vmatpush1.msra.mxu0 0.0
        %1736 = vmatprep.subr.mxu0 0.0
        %1737 = vmatpush1.msra.mxu0 0.0
        %1738 = vmatprep.subr.mxu0 0.0
        %1739 = vmatpush1.msra.mxu0 0.0
        %1740 = vmatprep.subr.mxu0 0.0
        %1741 = vmatpush1.msra.mxu0 0.0
        %1742 = vmatprep.subr.mxu0 0.0
        %1743 = vmatpush1.msra.mxu0 0.0
        %1744 = vmatprep.subr.mxu0 0.0
        %1745 = vmatpush1.msra.mxu0 0.0
        %1746 = vmatprep.subr.mxu0 0.0
        %1747 = vmatpush1.msra.mxu0 0.0
        %1748 = vmatprep.subr.mxu0 0.0
        %1749 = vmatpush1.msra.mxu0 0.0
        %1750 = vmatprep.subr.mxu0 0.0
        %1751 = vmatpush1.msra.mxu0 0.0
        %1752 = vmatprep.subr.mxu0 0.0
        %1753 = vmatpush1.msra.mxu0 0.0
        %1754 = vmatprep.subr.mxu0 0.0
        %1755 = vmatpush1.msra.mxu0 0.0
        %1756 = vmatprep.subr.mxu0 0.0
        %1757 = vmatpush1.msra.mxu0 0.0
        %1758 = vmatprep.subr.mxu0 0.0
        %1759 = vmatpush1.msra.mxu0 0.0
        %1760 = vmatprep.subr.mxu0 0.0
        %1761 = vmatpush1.msra.mxu0 0.0
        %1762 = vmatprep.subr.mxu0 0.0
        %1763 = vmatpush1.msra.mxu0 0.0
        %1764 = vmatprep.subr.mxu0 0.0
        %1765 = vmatpush1.msra.mxu0 0.0
        %1766 = vmatprep.mubr.f32.mxu0 0.0
        %1767 = vmatmul.mubr.f32.gmra.mrb[0].mxu0 %v1700
        %v1768 = vpop.f32.mrb[0].mxu0
        %v1769 = vadd.f32 0.0, %v1768
        %v1770 = vpop.f32.mrb[0].mxu0
        %1771 = vdwg.mxu0
        %1772 = vrot.lane.b32.xlu0 %v688, 48
        %v1773 = vpop.permute.xlu0 %1772
        %v1776 = vsel %vm694, %v1695, 0
        %1778 = vmatprep.subr.mxu0 0.0
        %1779 = vmatpush1.msra.mxu0 %v1773
        %1780 = vmatprep.subr.mxu0 0.0
        %1781 = vmatpush1.msra.mxu0 0.0
        %1782 = vmatprep.subr.mxu0 0.0
        %1783 = vmatpush1.msra.mxu0 0.0
        %1784 = vmatprep.subr.mxu0 0.0
        %1785 = vmatpush1.msra.mxu0 0.0
        %1786 = vmatprep.subr.mxu0 0.0
        %1787 = vmatpush1.msra.mxu0 0.0
        %1788 = vmatprep.subr.mxu0 0.0
        %1789 = vmatpush1.msra.mxu0 0.0
        %1790 = vmatprep.subr.mxu0 0.0
        %1791 = vmatpush1.msra.mxu0 0.0
        %1792 = vmatprep.subr.mxu0 0.0
        %1793 = vmatpush1.msra.mxu0 0.0
        %1794 = vmatprep.subr.mxu0 0.0
        %1795 = vmatpush1.msra.mxu0 0.0
        %1796 = vmatprep.subr.mxu0 0.0
        %1797 = vmatpush1.msra.mxu0 0.0
        %1798 = vmatprep.subr.mxu0 0.0
        %1799 = vmatpush1.msra.mxu0 0.0
        %1800 = vmatprep.subr.mxu0 0.0
        %1801 = vmatpush1.msra.mxu0 0.0
        %1802 = vmatprep.subr.mxu0 0.0
        %1803 = vmatpush1.msra.mxu0 0.0
        %1804 = vmatprep.subr.mxu0 0.0
        %1805 = vmatpush1.msra.mxu0 0.0
        %1806 = vmatprep.subr.mxu0 0.0
        %1807 = vmatpush1.msra.mxu0 0.0
        %1808 = vmatprep.subr.mxu0 0.0
        %1809 = vmatpush1.msra.mxu0 0.0
        %1810 = vmatprep.subr.mxu0 0.0
        %1811 = vmatpush1.msra.mxu0 0.0
        %1812 = vmatprep.subr.mxu0 0.0
        %1813 = vmatpush1.msra.mxu0 0.0
        %1814 = vmatprep.subr.mxu0 0.0
        %1815 = vmatpush1.msra.mxu0 0.0
        %1816 = vmatprep.subr.mxu0 0.0
        %1817 = vmatpush1.msra.mxu0 0.0
        %1818 = vmatprep.subr.mxu0 0.0
        %1819 = vmatpush1.msra.mxu0 0.0
        %1820 = vmatprep.subr.mxu0 0.0
        %1821 = vmatpush1.msra.mxu0 0.0
        %1822 = vmatprep.subr.mxu0 0.0
        %1823 = vmatpush1.msra.mxu0 0.0
        %1824 = vmatprep.subr.mxu0 0.0
        %1825 = vmatpush1.msra.mxu0 0.0
        %1826 = vmatprep.subr.mxu0 0.0
        %1827 = vmatpush1.msra.mxu0 0.0
        %1828 = vmatprep.subr.mxu0 0.0
        %1829 = vmatpush1.msra.mxu0 0.0
        %1830 = vmatprep.subr.mxu0 0.0
        %1831 = vmatpush1.msra.mxu0 0.0
        %1832 = vmatprep.subr.mxu0 0.0
        %1833 = vmatpush1.msra.mxu0 0.0
        %1834 = vmatprep.subr.mxu0 0.0
        %1835 = vmatpush1.msra.mxu0 0.0
        %1836 = vmatprep.subr.mxu0 0.0
        %1837 = vmatpush1.msra.mxu0 0.0
        %1838 = vmatprep.subr.mxu0 0.0
        %1839 = vmatpush1.msra.mxu0 0.0
        %1840 = vmatprep.subr.mxu0 0.0
        %1841 = vmatpush1.msra.mxu0 0.0
        %1842 = vmatprep.mubr.f32.mxu0 0.0
        %1843 = vmatmul.mubr.f32.gmra.mrb[0].mxu0 %v1776
        %v1844 = vpop.f32.mrb[0].mxu0
        %v1845 = vadd.f32 0.0, %v1844
        %v1846 = vpop.f32.mrb[0].mxu0
        %1847 = vdwg.mxu0
        %v1849 = vsel %vm694, %v1769, 0
        %v1852 = vsel %vm694, %v1845, 0
        %1854 = vmatprep.subr.mxu0 0.0
        %1855 = vmatpush1.msra.mxu0 %v534
        %1856 = vmatprep.subr.mxu0 0.0
        %1857 = vmatpush1.msra.mxu0 0.0
        %1858 = vmatprep.subr.mxu0 0.0
        %1859 = vmatpush1.msra.mxu0 0.0
        %1860 = vmatprep.subr.mxu0 0.0
        %1861 = vmatpush1.msra.mxu0 0.0
        %1862 = vmatprep.subr.mxu0 0.0
        %1863 = vmatpush1.msra.mxu0 0.0
        %1864 = vmatprep.subr.mxu0 0.0
        %1865 = vmatpush1.msra.mxu0 0.0
        %1866 = vmatprep.subr.mxu0 0.0
        %1867 = vmatpush1.msra.mxu0 0.0
        %1868 = vmatprep.subr.mxu0 0.0
        %1869 = vmatpush1.msra.mxu0 0.0
        %1870 = vmatprep.subr.mxu0 0.0
        %1871 = vmatpush1.msra.mxu0 0.0
        %1872 = vmatprep.subr.mxu0 0.0
        %1873 = vmatpush1.msra.mxu0 0.0
        %1874 = vmatprep.subr.mxu0 0.0
        %1875 = vmatpush1.msra.mxu0 0.0
        %1876 = vmatprep.subr.mxu0 0.0
        %1877 = vmatpush1.msra.mxu0 0.0
        %1878 = vmatprep.subr.mxu0 0.0
        %1879 = vmatpush1.msra.mxu0 0.0
        %1880 = vmatprep.subr.mxu0 0.0
        %1881 = vmatpush1.msra.mxu0 0.0
        %1882 = vmatprep.subr.mxu0 0.0
        %1883 = vmatpush1.msra.mxu0 0.0
        %1884 = vmatprep.subr.mxu0 0.0
        %1885 = vmatpush1.msra.mxu0 0.0
        %1886 = vmatprep.subr.mxu0 0.0
        %1887 = vmatpush1.msra.mxu0 0.0
        %1888 = vmatprep.subr.mxu0 0.0
        %1889 = vmatpush1.msra.mxu0 0.0
        %1890 = vmatprep.subr.mxu0 0.0
        %1891 = vmatpush1.msra.mxu0 0.0
        %1892 = vmatprep.subr.mxu0 0.0
        %1893 = vmatpush1.msra.mxu0 0.0
        %1894 = vmatprep.subr.mxu0 0.0
        %1895 = vmatpush1.msra.mxu0 0.0
        %1896 = vmatprep.subr.mxu0 0.0
        %1897 = vmatpush1.msra.mxu0 0.0
        %1898 = vmatprep.subr.mxu0 0.0
        %1899 = vmatpush1.msra.mxu0 0.0
        %1900 = vmatprep.subr.mxu0 0.0
        %1901 = vmatpush1.msra.mxu0 0.0
        %1902 = vmatprep.subr.mxu0 0.0
        %1903 = vmatpush1.msra.mxu0 0.0
        %1904 = vmatprep.subr.mxu0 0.0
        %1905 = vmatpush1.msra.mxu0 0.0
        %1906 = vmatprep.subr.mxu0 0.0
        %1907 = vmatpush1.msra.mxu0 0.0
        %1908 = vmatprep.subr.mxu0 0.0
        %1909 = vmatpush1.msra.mxu0 0.0
        %1910 = vmatprep.subr.mxu0 0.0
        %1911 = vmatpush1.msra.mxu0 0.0
        %1912 = vmatprep.subr.mxu0 0.0
        %1913 = vmatpush1.msra.mxu0 0.0
        %1914 = vmatprep.subr.mxu0 0.0
        %1915 = vmatpush1.msra.mxu0 0.0
        %1916 = vmatprep.subr.mxu0 0.0
        %1917 = vmatpush1.msra.mxu0 0.0
        %1918 = vmatprep.mubr.f32.mxu0 0.0
        %1919 = vmatmul.mubr.f32.gmra.mrb[0].mxu0 %v1849
        %v1920 = vpop.f32.mrb[0].mxu0
        %v1921 = vadd.f32 0.0, %v1920
        %v1922 = vpop.f32.mrb[0].mxu0
        %1923 = vmatprep.mubr.f32.mxu0 0.0
        %1924 = vmatmul.mubr.f32.gmra.mrb[0].mxu0 %v1852
        %v1925 = vpop.f32.mrb[0].mxu0
        %v1926 = vadd.f32 0.0, %v1925
        %v1927 = vpop.f32.mrb[0].mxu0
        %1928 = vdwg.mxu0
        %v1929 = vadd.f32 %v1508, %v1921
        %v1930 = vadd.f32 %v1513, %v1926
        %1931 = vrot.lane.b32.xlu0 %v683, 104
        %v1932 = vpop.permute.xlu0 %1931
        %1933 = vrot.lane.b32.xlu0 %v683, 72
        %v1934 = vpop.permute.xlu0 %1933
        %v1935 = vsel %vm694, %v1932, 0
        %v1937 = vsel %vm694, %v1934, 0
        %1939 = vmatprep.subr.mxu0 0.0
        %1940 = vmatpush1.xpose.msra.mxu0 %v1937
        %1941 = vmatprep.subr.mxu0 0.0
        %1942 = vmatpush1.xpose.msra.mxu0 0.0
        %1943 = vmatprep.subr.mxu0 0.0
        %1944 = vmatpush1.xpose.msra.mxu0 0.0
        %1945 = vmatprep.subr.mxu0 0.0
        %1946 = vmatpush1.xpose.msra.mxu0 0.0
        %1947 = vmatprep.subr.mxu0 0.0
        %1948 = vmatpush1.xpose.msra.mxu0 0.0
        %1949 = vmatprep.subr.mxu0 0.0
        %1950 = vmatpush1.xpose.msra.mxu0 0.0
        %1951 = vmatprep.subr.mxu0 0.0
        %1952 = vmatpush1.xpose.msra.mxu0 0.0
        %1953 = vmatprep.subr.mxu0 0.0
        %1954 = vmatpush1.xpose.msra.mxu0 0.0
        %1955 = vmatprep.subr.mxu0 0.0
        %1956 = vmatpush1.xpose.msra.mxu0 0.0
        %1957 = vmatprep.subr.mxu0 0.0
        %1958 = vmatpush1.xpose.msra.mxu0 0.0
        %1959 = vmatprep.subr.mxu0 0.0
        %1960 = vmatpush1.xpose.msra.mxu0 0.0
        %1961 = vmatprep.subr.mxu0 0.0
        %1962 = vmatpush1.xpose.msra.mxu0 0.0
        %1963 = vmatprep.subr.mxu0 0.0
        %1964 = vmatpush1.xpose.msra.mxu0 0.0
        %1965 = vmatprep.subr.mxu0 0.0
        %1966 = vmatpush1.xpose.msra.mxu0 0.0
        %1967 = vmatprep.subr.mxu0 0.0
        %1968 = vmatpush1.xpose.msra.mxu0 0.0
        %1969 = vmatprep.subr.mxu0 0.0
        %1970 = vmatpush1.xpose.msra.mxu0 0.0
        %1971 = vmatprep.subr.mxu0 0.0
        %1972 = vmatpush1.xpose.msra.mxu0 0.0
        %1973 = vmatprep.subr.mxu0 0.0
        %1974 = vmatpush1.xpose.msra.mxu0 0.0
        %1975 = vmatprep.subr.mxu0 0.0
        %1976 = vmatpush1.xpose.msra.mxu0 0.0
        %1977 = vmatprep.subr.mxu0 0.0
        %1978 = vmatpush1.xpose.msra.mxu0 0.0
        %1979 = vmatprep.subr.mxu0 0.0
        %1980 = vmatpush1.xpose.msra.mxu0 0.0
        %1981 = vmatprep.subr.mxu0 0.0
        %1982 = vmatpush1.xpose.msra.mxu0 0.0
        %1983 = vmatprep.subr.mxu0 0.0
        %1984 = vmatpush1.xpose.msra.mxu0 0.0
        %1985 = vmatprep.subr.mxu0 0.0
        %1986 = vmatpush1.xpose.msra.mxu0 0.0
        %1987 = vmatprep.subr.mxu0 0.0
        %1988 = vmatpush1.xpose.msra.mxu0 0.0
        %1989 = vmatprep.subr.mxu0 0.0
        %1990 = vmatpush1.xpose.msra.mxu0 0.0
        %1991 = vmatprep.subr.mxu0 0.0
        %1992 = vmatpush1.xpose.msra.mxu0 0.0
        %1993 = vmatprep.subr.mxu0 0.0
        %1994 = vmatpush1.xpose.msra.mxu0 0.0
        %1995 = vmatprep.subr.mxu0 0.0
        %1996 = vmatpush1.xpose.msra.mxu0 0.0
        %1997 = vmatprep.subr.mxu0 0.0
        %1998 = vmatpush1.xpose.msra.mxu0 0.0
        %1999 = vmatprep.subr.mxu0 0.0
        %2000 = vmatpush1.xpose.msra.mxu0 0.0
        %2001 = vmatprep.subr.mxu0 0.0
        %2002 = vmatpush1.xpose.msra.mxu0 0.0
        %2003 = vmatprep.mubr.f32.mxu0 0.0
        %2004 = vmatmul.mubr.f32.gmra.mrb[0].mxu0 %v1935
        %v2005 = vpop.f32.mrb[0].mxu0
        %v2006 = vadd.f32 0.0, %v2005
        %v2007 = vpop.f32.mrb[0].mxu0
        %2008 = vdwg.mxu0
        %2009 = vrot.lane.b32.xlu0 %v688, 104
        %v2010 = vpop.permute.xlu0 %2009
        %2011 = vrot.lane.b32.xlu0 %v688, 72
        %v2012 = vpop.permute.xlu0 %2011
        %v2013 = vsel %vm694, %v2010, 0
        %v2015 = vsel %vm694, %v2012, 0
        %2017 = vmatprep.subr.mxu0 0.0
        %2018 = vmatpush1.xpose.msra.mxu0 %v2015
        %2019 = vmatprep.subr.mxu0 0.0
        %2020 = vmatpush1.xpose.msra.mxu0 0.0
        %2021 = vmatprep.subr.mxu0 0.0
        %2022 = vmatpush1.xpose.msra.mxu0 0.0
        %2023 = vmatprep.subr.mxu0 0.0
        %2024 = vmatpush1.xpose.msra.mxu0 0.0
        %2025 = vmatprep.subr.mxu0 0.0
        %2026 = vmatpush1.xpose.msra.mxu0 0.0
        %2027 = vmatprep.subr.mxu0 0.0
        %2028 = vmatpush1.xpose.msra.mxu0 0.0
        %2029 = vmatprep.subr.mxu0 0.0
        %2030 = vmatpush1.xpose.msra.mxu0 0.0
        %2031 = vmatprep.subr.mxu0 0.0
        %2032 = vmatpush1.xpose.msra.mxu0 0.0
        %2033 = vmatprep.subr.mxu0 0.0
        %2034 = vmatpush1.xpose.msra.mxu0 0.0
        %2035 = vmatprep.subr.mxu0 0.0
        %2036 = vmatpush1.xpose.msra.mxu0 0.0
        %2037 = vmatprep.subr.mxu0 0.0
        %2038 = vmatpush1.xpose.msra.mxu0 0.0
        %2039 = vmatprep.subr.mxu0 0.0
        %2040 = vmatpush1.xpose.msra.mxu0 0.0
        %2041 = vmatprep.subr.mxu0 0.0
        %2042 = vmatpush1.xpose.msra.mxu0 0.0
        %2043 = vmatprep.subr.mxu0 0.0
        %2044 = vmatpush1.xpose.msra.mxu0 0.0
        %2045 = vmatprep.subr.mxu0 0.0
        %2046 = vmatpush1.xpose.msra.mxu0 0.0
        %2047 = vmatprep.subr.mxu0 0.0
        %2048 = vmatpush1.xpose.msra.mxu0 0.0
        %2049 = vmatprep.subr.mxu0 0.0
        %2050 = vmatpush1.xpose.msra.mxu0 0.0
        %2051 = vmatprep.subr.mxu0 0.0
        %2052 = vmatpush1.xpose.msra.mxu0 0.0
        %2053 = vmatprep.subr.mxu0 0.0
        %2054 = vmatpush1.xpose.msra.mxu0 0.0
        %2055 = vmatprep.subr.mxu0 0.0
        %2056 = vmatpush1.xpose.msra.mxu0 0.0
        %2057 = vmatprep.subr.mxu0 0.0
        %2058 = vmatpush1.xpose.msra.mxu0 0.0
        %2059 = vmatprep.subr.mxu0 0.0
        %2060 = vmatpush1.xpose.msra.mxu0 0.0
        %2061 = vmatprep.subr.mxu0 0.0
        %2062 = vmatpush1.xpose.msra.mxu0 0.0
        %2063 = vmatprep.subr.mxu0 0.0
        %2064 = vmatpush1.xpose.msra.mxu0 0.0
        %2065 = vmatprep.subr.mxu0 0.0
        %2066 = vmatpush1.xpose.msra.mxu0 0.0
        %2067 = vmatprep.subr.mxu0 0.0
        %2068 = vmatpush1.xpose.msra.mxu0 0.0
        %2069 = vmatprep.subr.mxu0 0.0
        %2070 = vmatpush1.xpose.msra.mxu0 0.0
        %2071 = vmatprep.subr.mxu0 0.0
        %2072 = vmatpush1.xpose.msra.mxu0 0.0
        %2073 = vmatprep.subr.mxu0 0.0
        %2074 = vmatpush1.xpose.msra.mxu0 0.0
        %2075 = vmatprep.subr.mxu0 0.0
        %2076 = vmatpush1.xpose.msra.mxu0 0.0
        %2077 = vmatprep.subr.mxu0 0.0
        %2078 = vmatpush1.xpose.msra.mxu0 0.0
        %2079 = vmatprep.subr.mxu0 0.0
        %2080 = vmatpush1.xpose.msra.mxu0 0.0
        %2081 = vmatprep.mubr.f32.mxu0 0.0
        %2082 = vmatmul.mubr.f32.gmra.mrb[0].mxu0 %v2013
        %v2083 = vpop.f32.mrb[0].mxu0
        %v2084 = vadd.f32 0.0, %v2083
        %v2085 = vpop.f32.mrb[0].mxu0
        %2086 = vdwg.mxu0
        %v2087 = vmul.f32 %v2006, 0.35355338
        %v2088 = vmul.f32 %v2084, 0.35355338
        %v2089 = vsel %vm694, %v2087, -inf
        %2090 = vmax.xlane.f32.xlu0 %v2089
        %v2091 = vpop.xlane.xlu0 %2090
        %v2092 = vsel %vm694, %v2088, -inf
        %2093 = vmax.xlane.f32.xlu0 %v2092
        %v2094 = vpop.xlane.xlu0 %2093
        %v2095 = vsub.f32 %v2087, %v2091
        %v2096 = vsub.f32 %v2088, %v2094
        %v2097 = vmul.f32 %v2095, 1.442695
        %v2098 = vpow.pop %v2097
        %v2099 = vmul.f32 %v2096, 1.442695
        %v2100 = vpow.pop %v2099
        %v2101 = vsel %vm694, %v2098, 0.0
        %2102 = vadd.xlane.f32.xlu0 %v2101
        %v2103 = vpop.xlane.xlu0 %2102
        %v2104 = vsel %vm694, %v2100, 0.0
        %2105 = vadd.xlane.f32.xlu0 %v2104
        %v2106 = vpop.xlane.xlu0 %2105
        %v2107 = vrcp.pop %v2103
        %v2108 = vrcp.pop %v2106
        %v2109 = vmul.f32 %v2098, %v2107
        %v2110 = vmul.f32 %v2100, %v2108
        %2111 = vrot.lane.b32.xlu0 %v683, 40
        %v2112 = vpop.permute.xlu0 %2111
        %v2115 = vsel %vm694, %v2109, 0
        %2117 = vmatprep.subr.mxu0 0.0
        %2118 = vmatpush1.msra.mxu0 %v2112
        %2119 = vmatprep.subr.mxu0 0.0
        %2120 = vmatpush1.msra.mxu0 0.0
        %2121 = vmatprep.subr.mxu0 0.0
        %2122 = vmatpush1.msra.mxu0 0.0
        %2123 = vmatprep.subr.mxu0 0.0
        %2124 = vmatpush1.msra.mxu0 0.0
        %2125 = vmatprep.subr.mxu0 0.0
        %2126 = vmatpush1.msra.mxu0 0.0
        %2127 = vmatprep.subr.mxu0 0.0
        %2128 = vmatpush1.msra.mxu0 0.0
        %2129 = vmatprep.subr.mxu0 0.0
        %2130 = vmatpush1.msra.mxu0 0.0
        %2131 = vmatprep.subr.mxu0 0.0
        %2132 = vmatpush1.msra.mxu0 0.0
        %2133 = vmatprep.subr.mxu0 0.0
        %2134 = vmatpush1.msra.mxu0 0.0
        %2135 = vmatprep.subr.mxu0 0.0
        %2136 = vmatpush1.msra.mxu0 0.0
        %2137 = vmatprep.subr.mxu0 0.0
        %2138 = vmatpush1.msra.mxu0 0.0
        %2139 = vmatprep.subr.mxu0 0.0
        %2140 = vmatpush1.msra.mxu0 0.0
        %2141 = vmatprep.subr.mxu0 0.0
        %2142 = vmatpush1.msra.mxu0 0.0
        %2143 = vmatprep.subr.mxu0 0.0
        %2144 = vmatpush1.msra.mxu0 0.0
        %2145 = vmatprep.subr.mxu0 0.0
        %2146 = vmatpush1.msra.mxu0 0.0
        %2147 = vmatprep.subr.mxu0 0.0
        %2148 = vmatpush1.msra.mxu0 0.0
        %2149 = vmatprep.subr.mxu0 0.0
        %2150 = vmatpush1.msra.mxu0 0.0
        %2151 = vmatprep.subr.mxu0 0.0
        %2152 = vmatpush1.msra.mxu0 0.0
        %2153 = vmatprep.subr.mxu0 0.0
        %2154 = vmatpush1.msra.mxu0 0.0
        %2155 = vmatprep.subr.mxu0 0.0
        %2156 = vmatpush1.msra.mxu0 0.0
        %2157 = vmatprep.subr.mxu0 0.0
        %2158 = vmatpush1.msra.mxu0 0.0
        %2159 = vmatprep.subr.mxu0 0.0
        %2160 = vmatpush1.msra.mxu0 0.0
        %2161 = vmatprep.subr.mxu0 0.0
        %2162 = vmatpush1.msra.mxu0 0.0
        %2163 = vmatprep.subr.mxu0 0.0
        %2164 = vmatpush1.msra.mxu0 0.0
        %2165 = vmatprep.subr.mxu0 0.0
        %2166 = vmatpush1.msra.mxu0 0.0
        %2167 = vmatprep.subr.mxu0 0.0
        %2168 = vmatpush1.msra.mxu0 0.0
        %2169 = vmatprep.subr.mxu0 0.0
        %2170 = vmatpush1.msra.mxu0 0.0
        %2171 = vmatprep.subr.mxu0 0.0
        %2172 = vmatpush1.msra.mxu0 0.0
        %2173 = vmatprep.subr.mxu0 0.0
        %2174 = vmatpush1.msra.mxu0 0.0
        %2175 = vmatprep.subr.mxu0 0.0
        %2176 = vmatpush1.msra.mxu0 0.0
        %2177 = vmatprep.subr.mxu0 0.0
        %2178 = vmatpush1.msra.mxu0 0.0
        %2179 = vmatprep.subr.mxu0 0.0
        %2180 = vmatpush1.msra.mxu0 0.0
        %2181 = vmatprep.mubr.f32.mxu0 0.0
        %2182 = vmatmul.mubr.f32.gmra.mrb[0].mxu0 %v2115
        %v2183 = vpop.f32.mrb[0].mxu0
        %v2184 = vadd.f32 0.0, %v2183
        %v2185 = vpop.f32.mrb[0].mxu0
        %2186 = vdwg.mxu0
        %2187 = vrot.lane.b32.xlu0 %v688, 40
        %v2188 = vpop.permute.xlu0 %2187
        %v2191 = vsel %vm694, %v2110, 0
        %2193 = vmatprep.subr.mxu0 0.0
        %2194 = vmatpush1.msra.mxu0 %v2188
        %2195 = vmatprep.subr.mxu0 0.0
        %2196 = vmatpush1.msra.mxu0 0.0
        %2197 = vmatprep.subr.mxu0 0.0
        %2198 = vmatpush1.msra.mxu0 0.0
        %2199 = vmatprep.subr.mxu0 0.0
        %2200 = vmatpush1.msra.mxu0 0.0
        %2201 = vmatprep.subr.mxu0 0.0
        %2202 = vmatpush1.msra.mxu0 0.0
        %2203 = vmatprep.subr.mxu0 0.0
        %2204 = vmatpush1.msra.mxu0 0.0
        %2205 = vmatprep.subr.mxu0 0.0
        %2206 = vmatpush1.msra.mxu0 0.0
        %2207 = vmatprep.subr.mxu0 0.0
        %2208 = vmatpush1.msra.mxu0 0.0
        %2209 = vmatprep.subr.mxu0 0.0
        %2210 = vmatpush1.msra.mxu0 0.0
        %2211 = vmatprep.subr.mxu0 0.0
        %2212 = vmatpush1.msra.mxu0 0.0
        %2213 = vmatprep.subr.mxu0 0.0
        %2214 = vmatpush1.msra.mxu0 0.0
        %2215 = vmatprep.subr.mxu0 0.0
        %2216 = vmatpush1.msra.mxu0 0.0
        %2217 = vmatprep.subr.mxu0 0.0
        %2218 = vmatpush1.msra.mxu0 0.0
        %2219 = vmatprep.subr.mxu0 0.0
        %2220 = vmatpush1.msra.mxu0 0.0
        %2221 = vmatprep.subr.mxu0 0.0
        %2222 = vmatpush1.msra.mxu0 0.0
        %2223 = vmatprep.subr.mxu0 0.0
        %2224 = vmatpush1.msra.mxu0 0.0
        %2225 = vmatprep.subr.mxu0 0.0
        %2226 = vmatpush1.msra.mxu0 0.0
        %2227 = vmatprep.subr.mxu0 0.0
        %2228 = vmatpush1.msra.mxu0 0.0
        %2229 = vmatprep.subr.mxu0 0.0
        %2230 = vmatpush1.msra.mxu0 0.0
        %2231 = vmatprep.subr.mxu0 0.0
        %2232 = vmatpush1.msra.mxu0 0.0
        %2233 = vmatprep.subr.mxu0 0.0
        %2234 = vmatpush1.msra.mxu0 0.0
        %2235 = vmatprep.subr.mxu0 0.0
        %2236 = vmatpush1.msra.mxu0 0.0
        %2237 = vmatprep.subr.mxu0 0.0
        %2238 = vmatpush1.msra.mxu0 0.0
        %2239 = vmatprep.subr.mxu0 0.0
        %2240 = vmatpush1.msra.mxu0 0.0
        %2241 = vmatprep.subr.mxu0 0.0
        %2242 = vmatpush1.msra.mxu0 0.0
        %2243 = vmatprep.subr.mxu0 0.0
        %2244 = vmatpush1.msra.mxu0 0.0
        %2245 = vmatprep.subr.mxu0 0.0
        %2246 = vmatpush1.msra.mxu0 0.0
        %2247 = vmatprep.subr.mxu0 0.0
        %2248 = vmatpush1.msra.mxu0 0.0
        %2249 = vmatprep.subr.mxu0 0.0
        %2250 = vmatpush1.msra.mxu0 0.0
        %2251 = vmatprep.subr.mxu0 0.0
        %2252 = vmatpush1.msra.mxu0 0.0
        %2253 = vmatprep.subr.mxu0 0.0
        %2254 = vmatpush1.msra.mxu0 0.0
        %2255 = vmatprep.subr.mxu0 0.0
        %2256 = vmatpush1.msra.mxu0 0.0
        %2257 = vmatprep.mubr.f32.mxu0 0.0
        %2258 = vmatmul.mubr.f32.gmra.mrb[0].mxu0 %v2191
        %v2259 = vpop.f32.mrb[0].mxu0
        %v2260 = vadd.f32 0.0, %v2259
        %v2261 = vpop.f32.mrb[0].mxu0
        %2262 = vdwg.mxu0
        %v2264 = vsel %vm694, %v2184, 0
        %v2267 = vsel %vm694, %v2260, 0
        %2269 = vmatprep.subr.mxu0 0.0
        %2270 = vmatpush1.msra.mxu0 %v535
        %2271 = vmatprep.subr.mxu0 0.0
        %2272 = vmatpush1.msra.mxu0 0.0
        %2273 = vmatprep.subr.mxu0 0.0
        %2274 = vmatpush1.msra.mxu0 0.0
        %2275 = vmatprep.subr.mxu0 0.0
        %2276 = vmatpush1.msra.mxu0 0.0
        %2277 = vmatprep.subr.mxu0 0.0
        %2278 = vmatpush1.msra.mxu0 0.0
        %2279 = vmatprep.subr.mxu0 0.0
        %2280 = vmatpush1.msra.mxu0 0.0
        %2281 = vmatprep.subr.mxu0 0.0
        %2282 = vmatpush1.msra.mxu0 0.0
        %2283 = vmatprep.subr.mxu0 0.0
        %2284 = vmatpush1.msra.mxu0 0.0
        %2285 = vmatprep.subr.mxu0 0.0
        %2286 = vmatpush1.msra.mxu0 0.0
        %2287 = vmatprep.subr.mxu0 0.0
        %2288 = vmatpush1.msra.mxu0 0.0
        %2289 = vmatprep.subr.mxu0 0.0
        %2290 = vmatpush1.msra.mxu0 0.0
        %2291 = vmatprep.subr.mxu0 0.0
        %2292 = vmatpush1.msra.mxu0 0.0
        %2293 = vmatprep.subr.mxu0 0.0
        %2294 = vmatpush1.msra.mxu0 0.0
        %2295 = vmatprep.subr.mxu0 0.0
        %2296 = vmatpush1.msra.mxu0 0.0
        %2297 = vmatprep.subr.mxu0 0.0
        %2298 = vmatpush1.msra.mxu0 0.0
        %2299 = vmatprep.subr.mxu0 0.0
        %2300 = vmatpush1.msra.mxu0 0.0
        %2301 = vmatprep.subr.mxu0 0.0
        %2302 = vmatpush1.msra.mxu0 0.0
        %2303 = vmatprep.subr.mxu0 0.0
        %2304 = vmatpush1.msra.mxu0 0.0
        %2305 = vmatprep.subr.mxu0 0.0
        %2306 = vmatpush1.msra.mxu0 0.0
        %2307 = vmatprep.subr.mxu0 0.0
        %2308 = vmatpush1.msra.mxu0 0.0
        %2309 = vmatprep.subr.mxu0 0.0
        %2310 = vmatpush1.msra.mxu0 0.0
        %2311 = vmatprep.subr.mxu0 0.0
        %2312 = vmatpush1.msra.mxu0 0.0
        %2313 = vmatprep.subr.mxu0 0.0
        %2314 = vmatpush1.msra.mxu0 0.0
        %2315 = vmatprep.subr.mxu0 0.0
        %2316 = vmatpush1.msra.mxu0 0.0
        %2317 = vmatprep.subr.mxu0 0.0
        %2318 = vmatpush1.msra.mxu0 0.0
        %2319 = vmatprep.subr.mxu0 0.0
        %2320 = vmatpush1.msra.mxu0 0.0
        %2321 = vmatprep.subr.mxu0 0.0
        %2322 = vmatpush1.msra.mxu0 0.0
        %2323 = vmatprep.subr.mxu0 0.0
        %2324 = vmatpush1.msra.mxu0 0.0
        %2325 = vmatprep.subr.mxu0 0.0
        %2326 = vmatpush1.msra.mxu0 0.0
        %2327 = vmatprep.subr.mxu0 0.0
        %2328 = vmatpush1.msra.mxu0 0.0
        %2329 = vmatprep.subr.mxu0 0.0
        %2330 = vmatpush1.msra.mxu0 0.0
        %2331 = vmatprep.subr.mxu0 0.0
        %2332 = vmatpush1.msra.mxu0 0.0
        %2333 = vmatprep.mubr.f32.mxu0 0.0
        %2334 = vmatmul.mubr.f32.gmra.mrb[0].mxu0 %v2264
        %v2335 = vpop.f32.mrb[0].mxu0
        %v2336 = vadd.f32 0.0, %v2335
        %v2337 = vpop.f32.mrb[0].mxu0
        %2338 = vmatprep.mubr.f32.mxu0 0.0
        %2339 = vmatmul.mubr.f32.gmra.mrb[0].mxu0 %v2267
        %v2340 = vpop.f32.mrb[0].mxu0
        %v2341 = vadd.f32 0.0, %v2340
        %v2342 = vpop.f32.mrb[0].mxu0
        %2343 = vdwg.mxu0
        %v2344 = vadd.f32 %v1929, %v2336
        %v2345 = vadd.f32 %v1930, %v2341
        %v2346 = vadd.f32 %v2344, %v608
        %v2347 = vadd.f32 %v2345, %v609
        %v2348 = vsel %vm574, %v2346, 0.0
        %2349 = vadd.xlane.f32.xlu0 %v2348
        %v2350 = vpop.xlane.xlu0 %2349
        %v2351 = vsel %vm574, %v2347, 0.0
        %2352 = vadd.xlane.f32.xlu0 %v2351
        %v2353 = vpop.xlane.xlu0 %2352
        %v2354 = vmul.f32 %v2350, %v581
        %v2355 = vmul.f32 %v2353, %v581
        %v2356 = vsub.f32 %v2346, %v2354
        %v2357 = vsub.f32 %v2347, %v2355
        %v2358 = vmul.f32 %v2356, %v2356
        %v2359 = vmul.f32 %v2357, %v2357
        %v2360 = vsel %vm574, %v2358, 0.0
        %2361 = vadd.xlane.f32.xlu0 %v2360
        %v2362 = vpop.xlane.xlu0 %2361
        %v2363 = vsel %vm574, %v2359, 0.0
        %2364 = vadd.xlane.f32.xlu0 %v2363
        %v2365 = vpop.xlane.xlu0 %2364
        %v2366 = vmul.f32 %v2362, %v581
        %v2367 = vmul.f32 %v2365, %v581
        %v2368 = vadd.f32 %v2366, 1e-05
        %v2369 = vadd.f32 %v2367, 1e-05
        %v2370 = vrsqrt.pop %v2368
        %v2371 = vrsqrt.pop %v2369
        %v2372 = vmul.f32 %v2356, %v2370
        %v2373 = vmul.f32 %v2357, %v2371
        %v2375 = vlaneseq
        %v2376 = vshrl.u32 %v2375, 7
        %v2377 = vsub.s32 0, %v2376
        %v2378 = vrot.slane %v525, %v2377
        %v2380 = vmul.f32 %v2372, %v2378
        %v2381 = vmul.f32 %v2373, %v2378
        %v2383 = vsel %vm574, %v2380, 0
        %v2386 = vsel %vm574, %v2381, 0
        %2388 = vmatprep.subr.mxu0 0.0
        %2389 = vmatpush1.msra.mxu0 %v536
        %2390 = vmatprep.subr.mxu0 0.0
        %2391 = vmatpush1.msra.mxu0 %v537
        %2392 = vmatprep.subr.mxu0 0.0
        %2393 = vmatpush1.msra.mxu0 %v538
        %2394 = vmatprep.subr.mxu0 0.0
        %2395 = vmatpush1.msra.mxu0 %v539
        %2396 = vmatprep.subr.mxu0 0.0
        %2397 = vmatpush1.msra.mxu0 0.0
        %2398 = vmatprep.subr.mxu0 0.0
        %2399 = vmatpush1.msra.mxu0 0.0
        %2400 = vmatprep.subr.mxu0 0.0
        %2401 = vmatpush1.msra.mxu0 0.0
        %2402 = vmatprep.subr.mxu0 0.0
        %2403 = vmatpush1.msra.mxu0 0.0
        %2404 = vmatprep.subr.mxu0 0.0
        %2405 = vmatpush1.msra.mxu0 0.0
        %2406 = vmatprep.subr.mxu0 0.0
        %2407 = vmatpush1.msra.mxu0 0.0
        %2408 = vmatprep.subr.mxu0 0.0
        %2409 = vmatpush1.msra.mxu0 0.0
        %2410 = vmatprep.subr.mxu0 0.0
        %2411 = vmatpush1.msra.mxu0 0.0
        %2412 = vmatprep.subr.mxu0 0.0
        %2413 = vmatpush1.msra.mxu0 0.0
        %2414 = vmatprep.subr.mxu0 0.0
        %2415 = vmatpush1.msra.mxu0 0.0
        %2416 = vmatprep.subr.mxu0 0.0
        %2417 = vmatpush1.msra.mxu0 0.0
        %2418 = vmatprep.subr.mxu0 0.0
        %2419 = vmatpush1.msra.mxu0 0.0
        %2420 = vmatprep.subr.mxu0 0.0
        %2421 = vmatpush1.msra.mxu0 0.0
        %2422 = vmatprep.subr.mxu0 0.0
        %2423 = vmatpush1.msra.mxu0 0.0
        %2424 = vmatprep.subr.mxu0 0.0
        %2425 = vmatpush1.msra.mxu0 0.0
        %2426 = vmatprep.subr.mxu0 0.0
        %2427 = vmatpush1.msra.mxu0 0.0
        %2428 = vmatprep.subr.mxu0 0.0
        %2429 = vmatpush1.msra.mxu0 0.0
        %2430 = vmatprep.subr.mxu0 0.0
        %2431 = vmatpush1.msra.mxu0 0.0
        %2432 = vmatprep.subr.mxu0 0.0
        %2433 = vmatpush1.msra.mxu0 0.0
        %2434 = vmatprep.subr.mxu0 0.0
        %2435 = vmatpush1.msra.mxu0 0.0
        %2436 = vmatprep.subr.mxu0 0.0
        %2437 = vmatpush1.msra.mxu0 0.0
        %2438 = vmatprep.subr.mxu0 0.0
        %2439 = vmatpush1.msra.mxu0 0.0
        %2440 = vmatprep.subr.mxu0 0.0
        %2441 = vmatpush1.msra.mxu0 0.0
        %2442 = vmatprep.subr.mxu0 0.0
        %2443 = vmatpush1.msra.mxu0 0.0
        %2444 = vmatprep.subr.mxu0 0.0
        %2445 = vmatpush1.msra.mxu0 0.0
        %2446 = vmatprep.subr.mxu0 0.0
        %2447 = vmatpush1.msra.mxu0 0.0
        %2448 = vmatprep.subr.mxu0 0.0
        %2449 = vmatpush1.msra.mxu0 0.0
        %2450 = vmatprep.subr.mxu0 0.0
        %2451 = vmatpush1.msra.mxu0 0.0
        %2452 = vmatprep.mubr.f32.mxu0 0.0
        %2453 = vmatmul.mubr.f32.gmra.mrb[0].mxu0 %v2383
        %v2454 = vpop.f32.mrb[0].mxu0
        %v2455 = vadd.f32 0.0, %v2454
        %v2456 = vpop.f32.mrb[0].mxu0
        %2457 = vmatprep.mubr.f32.mxu0 0.0
        %2458 = vmatmul.mubr.f32.gmra.mrb[0].mxu0 %v2386
        %v2459 = vpop.f32.mrb[0].mxu0
        %v2460 = vadd.f32 0.0, %v2459
        %v2461 = vpop.f32.mrb[0].mxu0
        %2462 = vdwg.mxu0
        %v2464 = vsel %vm574, %v570, 0
        %v2467 = vsel %vm574, %v571, 0
        %v2470 = vsel %vm574, %v572, 0
        %v2473 = vsel %vm574, %v573, 0
        %2475 = vmatprep.subr.mxu0 0.0
        %2476 = vmatpush1.msra.mxu0 %v540
        %2477 = vmatprep.subr.mxu0 0.0
        %2478 = vmatpush1.msra.mxu0 %v541
        %2479 = vmatprep.subr.mxu0 0.0
        %2480 = vmatpush1.msra.mxu0 %v542
        %2481 = vmatprep.subr.mxu0 0.0
        %2482 = vmatpush1.msra.mxu0 %v543
        %2483 = vmatprep.subr.mxu0 0.0
        %2484 = vmatpush1.msra.mxu0 0.0
        %2485 = vmatprep.subr.mxu0 0.0
        %2486 = vmatpush1.msra.mxu0 0.0
        %2487 = vmatprep.subr.mxu0 0.0
        %2488 = vmatpush1.msra.mxu0 0.0
        %2489 = vmatprep.subr.mxu0 0.0
        %2490 = vmatpush1.msra.mxu0 0.0
        %2491 = vmatprep.subr.mxu0 0.0
        %2492 = vmatpush1.msra.mxu0 0.0
        %2493 = vmatprep.subr.mxu0 0.0
        %2494 = vmatpush1.msra.mxu0 0.0
        %2495 = vmatprep.subr.mxu0 0.0
        %2496 = vmatpush1.msra.mxu0 0.0
        %2497 = vmatprep.subr.mxu0 0.0
        %2498 = vmatpush1.msra.mxu0 0.0
        %2499 = vmatprep.subr.mxu0 0.0
        %2500 = vmatpush1.msra.mxu0 0.0
        %2501 = vmatprep.subr.mxu0 0.0
        %2502 = vmatpush1.msra.mxu0 0.0
        %2503 = vmatprep.subr.mxu0 0.0
        %2504 = vmatpush1.msra.mxu0 0.0
        %2505 = vmatprep.subr.mxu0 0.0
        %2506 = vmatpush1.msra.mxu0 0.0
        %2507 = vmatprep.subr.mxu0 0.0
        %2508 = vmatpush1.msra.mxu0 0.0
        %2509 = vmatprep.subr.mxu0 0.0
        %2510 = vmatpush1.msra.mxu0 0.0
        %2511 = vmatprep.subr.mxu0 0.0
        %2512 = vmatpush1.msra.mxu0 0.0
        %2513 = vmatprep.subr.mxu0 0.0
        %2514 = vmatpush1.msra.mxu0 0.0
        %2515 = vmatprep.subr.mxu0 0.0
        %2516 = vmatpush1.msra.mxu0 0.0
        %2517 = vmatprep.subr.mxu0 0.0
        %2518 = vmatpush1.msra.mxu0 0.0
        %2519 = vmatprep.subr.mxu0 0.0
        %2520 = vmatpush1.msra.mxu0 0.0
        %2521 = vmatprep.subr.mxu0 0.0
        %2522 = vmatpush1.msra.mxu0 0.0
        %2523 = vmatprep.subr.mxu0 0.0
        %2524 = vmatpush1.msra.mxu0 0.0
        %2525 = vmatprep.subr.mxu0 0.0
        %2526 = vmatpush1.msra.mxu0 0.0
        %2527 = vmatprep.subr.mxu0 0.0
        %2528 = vmatpush1.msra.mxu0 0.0
        %2529 = vmatprep.subr.mxu0 0.0
        %2530 = vmatpush1.msra.mxu0 0.0
        %2531 = vmatprep.subr.mxu0 0.0
        %2532 = vmatpush1.msra.mxu0 0.0
        %2533 = vmatprep.subr.mxu0 0.0
        %2534 = vmatpush1.msra.mxu0 0.0
        %2535 = vmatprep.subr.mxu0 0.0
        %2536 = vmatpush1.msra.mxu0 0.0
        %2537 = vmatprep.subr.mxu0 0.0
        %2538 = vmatpush1.msra.mxu0 0.0
        %2539 = vmatprep.mubr.f32.mxu0 0.0
        %2540 = vmatmul.mubr.f32.gmra.mrb[0].mxu0 %v2464
        %v2541 = vpop.f32.mrb[0].mxu0
        %v2542 = vadd.f32 0.0, %v2541
        %v2543 = vpop.f32.mrb[0].mxu0
        %2544 = vmatprep.mubr.f32.mxu0 0.0
        %2545 = vmatmul.mubr.f32.gmra.mrb[0].mxu0 %v2467
        %v2546 = vpop.f32.mrb[0].mxu0
        %v2547 = vadd.f32 0.0, %v2546
        %v2548 = vpop.f32.mrb[0].mxu0
        %2549 = vmatprep.mubr.f32.mxu0 0.0
        %2550 = vmatmul.mubr.f32.gmra.mrb[0].mxu0 %v2470
        %v2551 = vpop.f32.mrb[0].mxu0
        %v2552 = vadd.f32 0.0, %v2551
        %v2553 = vpop.f32.mrb[0].mxu0
        %2554 = vmatprep.mubr.f32.mxu0 0.0
        %2555 = vmatmul.mubr.f32.gmra.mrb[0].mxu0 %v2473
        %v2556 = vpop.f32.mrb[0].mxu0
        %v2557 = vadd.f32 0.0, %v2556
        %v2558 = vpop.f32.mrb[0].mxu0
        %2559 = vdwg.mxu0
        %v2561 = vsel %vm694, %v2455, 0
        %v2564 = vsel %vm694, %v2542, 0
        %v2567 = vsel %vm694, %v2547, 0
        %2569 = vmatprep.subr.mxu0 0.0
        %2570 = vmatpush1.xpose.msra.mxu0 %v2564
        %2571 = vmatprep.subr.mxu0 0.0
        %2572 = vmatpush1.xpose.msra.mxu0 %v2567
        %2573 = vmatprep.subr.mxu0 0.0
        %2574 = vmatpush1.xpose.msra.mxu0 0.0
        %2575 = vmatprep.subr.mxu0 0.0
        %2576 = vmatpush1.xpose.msra.mxu0 0.0
        %2577 = vmatprep.subr.mxu0 0.0
        %2578 = vmatpush1.xpose.msra.mxu0 0.0
        %2579 = vmatprep.subr.mxu0 0.0
        %2580 = vmatpush1.xpose.msra.mxu0 0.0
        %2581 = vmatprep.subr.mxu0 0.0
        %2582 = vmatpush1.xpose.msra.mxu0 0.0
        %2583 = vmatprep.subr.mxu0 0.0
        %2584 = vmatpush1.xpose.msra.mxu0 0.0
        %2585 = vmatprep.subr.mxu0 0.0
        %2586 = vmatpush1.xpose.msra.mxu0 0.0
        %2587 = vmatprep.subr.mxu0 0.0
        %2588 = vmatpush1.xpose.msra.mxu0 0.0
        %2589 = vmatprep.subr.mxu0 0.0
        %2590 = vmatpush1.xpose.msra.mxu0 0.0
        %2591 = vmatprep.subr.mxu0 0.0
        %2592 = vmatpush1.xpose.msra.mxu0 0.0
        %2593 = vmatprep.subr.mxu0 0.0
        %2594 = vmatpush1.xpose.msra.mxu0 0.0
        %2595 = vmatprep.subr.mxu0 0.0
        %2596 = vmatpush1.xpose.msra.mxu0 0.0
        %2597 = vmatprep.subr.mxu0 0.0
        %2598 = vmatpush1.xpose.msra.mxu0 0.0
        %2599 = vmatprep.subr.mxu0 0.0
        %2600 = vmatpush1.xpose.msra.mxu0 0.0
        %2601 = vmatprep.subr.mxu0 0.0
        %2602 = vmatpush1.xpose.msra.mxu0 0.0
        %2603 = vmatprep.subr.mxu0 0.0
        %2604 = vmatpush1.xpose.msra.mxu0 0.0
        %2605 = vmatprep.subr.mxu0 0.0
        %2606 = vmatpush1.xpose.msra.mxu0 0.0
        %2607 = vmatprep.subr.mxu0 0.0
        %2608 = vmatpush1.xpose.msra.mxu0 0.0
        %2609 = vmatprep.subr.mxu0 0.0
        %2610 = vmatpush1.xpose.msra.mxu0 0.0
        %2611 = vmatprep.subr.mxu0 0.0
        %2612 = vmatpush1.xpose.msra.mxu0 0.0
        %2613 = vmatprep.subr.mxu0 0.0
        %2614 = vmatpush1.xpose.msra.mxu0 0.0
        %2615 = vmatprep.subr.mxu0 0.0
        %2616 = vmatpush1.xpose.msra.mxu0 0.0
        %2617 = vmatprep.subr.mxu0 0.0
        %2618 = vmatpush1.xpose.msra.mxu0 0.0
        %2619 = vmatprep.subr.mxu0 0.0
        %2620 = vmatpush1.xpose.msra.mxu0 0.0
        %2621 = vmatprep.subr.mxu0 0.0
        %2622 = vmatpush1.xpose.msra.mxu0 0.0
        %2623 = vmatprep.subr.mxu0 0.0
        %2624 = vmatpush1.xpose.msra.mxu0 0.0
        %2625 = vmatprep.subr.mxu0 0.0
        %2626 = vmatpush1.xpose.msra.mxu0 0.0
        %2627 = vmatprep.subr.mxu0 0.0
        %2628 = vmatpush1.xpose.msra.mxu0 0.0
        %2629 = vmatprep.subr.mxu0 0.0
        %2630 = vmatpush1.xpose.msra.mxu0 0.0
        %2631 = vmatprep.subr.mxu0 0.0
        %2632 = vmatpush1.xpose.msra.mxu0 0.0
        %2633 = vmatprep.mubr.f32.mxu0 0.0
        %2634 = vmatmul.mubr.f32.gmra.mrb[0].mxu0 %v2561
        %v2635 = vpop.f32.mrb[0].mxu0
        %v2636 = vadd.f32 0.0, %v2635
        %v2637 = vpop.f32.mrb[0].mxu0
        %2638 = vdwg.mxu0
        %v2640 = vsel %vm694, %v2460, 0
        %v2643 = vsel %vm694, %v2552, 0
        %v2646 = vsel %vm694, %v2557, 0
        %2648 = vmatprep.subr.mxu0 0.0
        %2649 = vmatpush1.xpose.msra.mxu0 %v2643
        %2650 = vmatprep.subr.mxu0 0.0
        %2651 = vmatpush1.xpose.msra.mxu0 %v2646
        %2652 = vmatprep.subr.mxu0 0.0
        %2653 = vmatpush1.xpose.msra.mxu0 0.0
        %2654 = vmatprep.subr.mxu0 0.0
        %2655 = vmatpush1.xpose.msra.mxu0 0.0
        %2656 = vmatprep.subr.mxu0 0.0
        %2657 = vmatpush1.xpose.msra.mxu0 0.0
        %2658 = vmatprep.subr.mxu0 0.0
        %2659 = vmatpush1.xpose.msra.mxu0 0.0
        %2660 = vmatprep.subr.mxu0 0.0
        %2661 = vmatpush1.xpose.msra.mxu0 0.0
        %2662 = vmatprep.subr.mxu0 0.0
        %2663 = vmatpush1.xpose.msra.mxu0 0.0
        %2664 = vmatprep.subr.mxu0 0.0
        %2665 = vmatpush1.xpose.msra.mxu0 0.0
        %2666 = vmatprep.subr.mxu0 0.0
        %2667 = vmatpush1.xpose.msra.mxu0 0.0
        %2668 = vmatprep.subr.mxu0 0.0
        %2669 = vmatpush1.xpose.msra.mxu0 0.0
        %2670 = vmatprep.subr.mxu0 0.0
        %2671 = vmatpush1.xpose.msra.mxu0 0.0
        %2672 = vmatprep.subr.mxu0 0.0
        %2673 = vmatpush1.xpose.msra.mxu0 0.0
        %2674 = vmatprep.subr.mxu0 0.0
        %2675 = vmatpush1.xpose.msra.mxu0 0.0
        %2676 = vmatprep.subr.mxu0 0.0
        %2677 = vmatpush1.xpose.msra.mxu0 0.0
        %2678 = vmatprep.subr.mxu0 0.0
        %2679 = vmatpush1.xpose.msra.mxu0 0.0
        %2680 = vmatprep.subr.mxu0 0.0
        %2681 = vmatpush1.xpose.msra.mxu0 0.0
        %2682 = vmatprep.subr.mxu0 0.0
        %2683 = vmatpush1.xpose.msra.mxu0 0.0
        %2684 = vmatprep.subr.mxu0 0.0
        %2685 = vmatpush1.xpose.msra.mxu0 0.0
        %2686 = vmatprep.subr.mxu0 0.0
        %2687 = vmatpush1.xpose.msra.mxu0 0.0
        %2688 = vmatprep.subr.mxu0 0.0
        %2689 = vmatpush1.xpose.msra.mxu0 0.0
        %2690 = vmatprep.subr.mxu0 0.0
        %2691 = vmatpush1.xpose.msra.mxu0 0.0
        %2692 = vmatprep.subr.mxu0 0.0
        %2693 = vmatpush1.xpose.msra.mxu0 0.0
        %2694 = vmatprep.subr.mxu0 0.0
        %2695 = vmatpush1.xpose.msra.mxu0 0.0
        %2696 = vmatprep.subr.mxu0 0.0
        %2697 = vmatpush1.xpose.msra.mxu0 0.0
        %2698 = vmatprep.subr.mxu0 0.0
        %2699 = vmatpush1.xpose.msra.mxu0 0.0
        %2700 = vmatprep.subr.mxu0 0.0
        %2701 = vmatpush1.xpose.msra.mxu0 0.0
        %2702 = vmatprep.subr.mxu0 0.0
        %2703 = vmatpush1.xpose.msra.mxu0 0.0
        %2704 = vmatprep.subr.mxu0 0.0
        %2705 = vmatpush1.xpose.msra.mxu0 0.0
        %2706 = vmatprep.subr.mxu0 0.0
        %2707 = vmatpush1.xpose.msra.mxu0 0.0
        %2708 = vmatprep.subr.mxu0 0.0
        %2709 = vmatpush1.xpose.msra.mxu0 0.0
        %2710 = vmatprep.subr.mxu0 0.0
        %2711 = vmatpush1.xpose.msra.mxu0 0.0
        %2712 = vmatprep.mubr.f32.mxu0 0.0
        %2713 = vmatmul.mubr.f32.gmra.mrb[0].mxu0 %v2640
        %v2714 = vpop.f32.mrb[0].mxu0
        %v2715 = vadd.f32 0.0, %v2714
        %v2716 = vpop.f32.mrb[0].mxu0
        %2717 = vdwg.mxu0
        %v2718 = vmul.f32 %v2636, 0.35355338
        %v2719 = vmul.f32 %v2715, 0.35355338
        %vm2720 = vcmask 130048
        %v2721 = vsel %vm2720, %v2718, -inf
        %2722 = vmax.xlane.f32.xlu0 %v2721
        %v2723 = vpop.xlane.xlu0 %2722
        %v2724 = vsel %vm2720, %v2719, -inf
        %2725 = vmax.xlane.f32.xlu0 %v2724
        %v2726 = vpop.xlane.xlu0 %2725
        %v2727 = vsub.f32 %v2718, %v2723
        %v2728 = vsub.f32 %v2719, %v2726
        %v2729 = vmul.f32 %v2727, 1.442695
        %v2730 = vpow.pop %v2729
        %v2731 = vmul.f32 %v2728, 1.442695
        %v2732 = vpow.pop %v2731
        %v2733 = vsel %vm2720, %v2730, 0.0
        %2734 = vadd.xlane.f32.xlu0 %v2733
        %v2735 = vpop.xlane.xlu0 %2734
        %v2736 = vsel %vm2720, %v2732, 0.0
        %2737 = vadd.xlane.f32.xlu0 %v2736
        %v2738 = vpop.xlane.xlu0 %2737
        %v2739 = vrcp.pop %v2735
        %v2740 = vrcp.pop %v2738
        %v2741 = vmul.f32 %v2730, %v2739
        %v2742 = vmul.f32 %v2732, %v2740
        %2743 = vrot.lane.b32.xlu0 %v2542, 96
        %v2744 = vpop.permute.xlu0 %2743
        %2745 = vrot.lane.b32.xlu0 %v2547, 96
        %v2746 = vpop.permute.xlu0 %2745
        %v2750 = vsel %vm2720, %v2741, 0
        %2752 = vmatprep.subr.mxu0 0.0
        %2753 = vmatpush1.msra.mxu0 %v2744
        %2754 = vmatprep.subr.mxu0 0.0
        %2755 = vmatpush1.msra.mxu0 %v2746
        %2756 = vmatprep.subr.mxu0 0.0
        %2757 = vmatpush1.msra.mxu0 0.0
        %2758 = vmatprep.subr.mxu0 0.0
        %2759 = vmatpush1.msra.mxu0 0.0
        %2760 = vmatprep.subr.mxu0 0.0
        %2761 = vmatpush1.msra.mxu0 0.0
        %2762 = vmatprep.subr.mxu0 0.0
        %2763 = vmatpush1.msra.mxu0 0.0
        %2764 = vmatprep.subr.mxu0 0.0
        %2765 = vmatpush1.msra.mxu0 0.0
        %2766 = vmatprep.subr.mxu0 0.0
        %2767 = vmatpush1.msra.mxu0 0.0
        %2768 = vmatprep.subr.mxu0 0.0
        %2769 = vmatpush1.msra.mxu0 0.0
        %2770 = vmatprep.subr.mxu0 0.0
        %2771 = vmatpush1.msra.mxu0 0.0
        %2772 = vmatprep.subr.mxu0 0.0
        %2773 = vmatpush1.msra.mxu0 0.0
        %2774 = vmatprep.subr.mxu0 0.0
        %2775 = vmatpush1.msra.mxu0 0.0
        %2776 = vmatprep.subr.mxu0 0.0
        %2777 = vmatpush1.msra.mxu0 0.0
        %2778 = vmatprep.subr.mxu0 0.0
        %2779 = vmatpush1.msra.mxu0 0.0
        %2780 = vmatprep.subr.mxu0 0.0
        %2781 = vmatpush1.msra.mxu0 0.0
        %2782 = vmatprep.subr.mxu0 0.0
        %2783 = vmatpush1.msra.mxu0 0.0
        %2784 = vmatprep.subr.mxu0 0.0
        %2785 = vmatpush1.msra.mxu0 0.0
        %2786 = vmatprep.subr.mxu0 0.0
        %2787 = vmatpush1.msra.mxu0 0.0
        %2788 = vmatprep.subr.mxu0 0.0
        %2789 = vmatpush1.msra.mxu0 0.0
        %2790 = vmatprep.subr.mxu0 0.0
        %2791 = vmatpush1.msra.mxu0 0.0
        %2792 = vmatprep.subr.mxu0 0.0
        %2793 = vmatpush1.msra.mxu0 0.0
        %2794 = vmatprep.subr.mxu0 0.0
        %2795 = vmatpush1.msra.mxu0 0.0
        %2796 = vmatprep.subr.mxu0 0.0
        %2797 = vmatpush1.msra.mxu0 0.0
        %2798 = vmatprep.subr.mxu0 0.0
        %2799 = vmatpush1.msra.mxu0 0.0
        %2800 = vmatprep.subr.mxu0 0.0
        %2801 = vmatpush1.msra.mxu0 0.0
        %2802 = vmatprep.subr.mxu0 0.0
        %2803 = vmatpush1.msra.mxu0 0.0
        %2804 = vmatprep.subr.mxu0 0.0
        %2805 = vmatpush1.msra.mxu0 0.0
        %2806 = vmatprep.subr.mxu0 0.0
        %2807 = vmatpush1.msra.mxu0 0.0
        %2808 = vmatprep.subr.mxu0 0.0
        %2809 = vmatpush1.msra.mxu0 0.0
        %2810 = vmatprep.subr.mxu0 0.0
        %2811 = vmatpush1.msra.mxu0 0.0
        %2812 = vmatprep.subr.mxu0 0.0
        %2813 = vmatpush1.msra.mxu0 0.0
        %2814 = vmatprep.subr.mxu0 0.0
        %2815 = vmatpush1.msra.mxu0 0.0
        %2816 = vmatprep.mubr.f32.mxu0 0.0
        %2817 = vmatmul.mubr.f32.gmra.mrb[0].mxu0 %v2750
        %v2818 = vpop.f32.mrb[0].mxu0
        %v2819 = vadd.f32 0.0, %v2818
        %v2820 = vpop.f32.mrb[0].mxu0
        %2821 = vdwg.mxu0
        %2822 = vrot.lane.b32.xlu0 %v2552, 96
        %v2823 = vpop.permute.xlu0 %2822
        %2824 = vrot.lane.b32.xlu0 %v2557, 96
        %v2825 = vpop.permute.xlu0 %2824
        %v2829 = vsel %vm2720, %v2742, 0
        %2831 = vmatprep.subr.mxu0 0.0
        %2832 = vmatpush1.msra.mxu0 %v2823
        %2833 = vmatprep.subr.mxu0 0.0
        %2834 = vmatpush1.msra.mxu0 %v2825
        %2835 = vmatprep.subr.mxu0 0.0
        %2836 = vmatpush1.msra.mxu0 0.0
        %2837 = vmatprep.subr.mxu0 0.0
        %2838 = vmatpush1.msra.mxu0 0.0
        %2839 = vmatprep.subr.mxu0 0.0
        %2840 = vmatpush1.msra.mxu0 0.0
        %2841 = vmatprep.subr.mxu0 0.0
        %2842 = vmatpush1.msra.mxu0 0.0
        %2843 = vmatprep.subr.mxu0 0.0
        %2844 = vmatpush1.msra.mxu0 0.0
        %2845 = vmatprep.subr.mxu0 0.0
        %2846 = vmatpush1.msra.mxu0 0.0
        %2847 = vmatprep.subr.mxu0 0.0
        %2848 = vmatpush1.msra.mxu0 0.0
        %2849 = vmatprep.subr.mxu0 0.0
        %2850 = vmatpush1.msra.mxu0 0.0
        %2851 = vmatprep.subr.mxu0 0.0
        %2852 = vmatpush1.msra.mxu0 0.0
        %2853 = vmatprep.subr.mxu0 0.0
        %2854 = vmatpush1.msra.mxu0 0.0
        %2855 = vmatprep.subr.mxu0 0.0
        %2856 = vmatpush1.msra.mxu0 0.0
        %2857 = vmatprep.subr.mxu0 0.0
        %2858 = vmatpush1.msra.mxu0 0.0
        %2859 = vmatprep.subr.mxu0 0.0
        %2860 = vmatpush1.msra.mxu0 0.0
        %2861 = vmatprep.subr.mxu0 0.0
        %2862 = vmatpush1.msra.mxu0 0.0
        %2863 = vmatprep.subr.mxu0 0.0
        %2864 = vmatpush1.msra.mxu0 0.0
        %2865 = vmatprep.subr.mxu0 0.0
        %2866 = vmatpush1.msra.mxu0 0.0
        %2867 = vmatprep.subr.mxu0 0.0
        %2868 = vmatpush1.msra.mxu0 0.0
        %2869 = vmatprep.subr.mxu0 0.0
        %2870 = vmatpush1.msra.mxu0 0.0
        %2871 = vmatprep.subr.mxu0 0.0
        %2872 = vmatpush1.msra.mxu0 0.0
        %2873 = vmatprep.subr.mxu0 0.0
        %2874 = vmatpush1.msra.mxu0 0.0
        %2875 = vmatprep.subr.mxu0 0.0
        %2876 = vmatpush1.msra.mxu0 0.0
        %2877 = vmatprep.subr.mxu0 0.0
        %2878 = vmatpush1.msra.mxu0 0.0
        %2879 = vmatprep.subr.mxu0 0.0
        %2880 = vmatpush1.msra.mxu0 0.0
        %2881 = vmatprep.subr.mxu0 0.0
        %2882 = vmatpush1.msra.mxu0 0.0
        %2883 = vmatprep.subr.mxu0 0.0
        %2884 = vmatpush1.msra.mxu0 0.0
        %2885 = vmatprep.subr.mxu0 0.0
        %2886 = vmatpush1.msra.mxu0 0.0
        %2887 = vmatprep.subr.mxu0 0.0
        %2888 = vmatpush1.msra.mxu0 0.0
        %2889 = vmatprep.subr.mxu0 0.0
        %2890 = vmatpush1.msra.mxu0 0.0
        %2891 = vmatprep.subr.mxu0 0.0
        %2892 = vmatpush1.msra.mxu0 0.0
        %2893 = vmatprep.subr.mxu0 0.0
        %2894 = vmatpush1.msra.mxu0 0.0
        %2895 = vmatprep.mubr.f32.mxu0 0.0
        %2896 = vmatmul.mubr.f32.gmra.mrb[0].mxu0 %v2829
        %v2897 = vpop.f32.mrb[0].mxu0
        %v2898 = vadd.f32 0.0, %v2897
        %v2899 = vpop.f32.mrb[0].mxu0
        %2900 = vdwg.mxu0
        %2901 = vrot.lane.b32.xlu0 %v2455, 120
        %v2902 = vpop.permute.xlu0 %2901
        %2903 = vrot.lane.b32.xlu0 %v2542, 120
        %v2904 = vpop.permute.xlu0 %2903
        %2905 = vrot.lane.b32.xlu0 %v2547, 120
        %v2906 = vpop.permute.xlu0 %2905
        %v2907 = vsel %vm694, %v2902, 0
        %v2909 = vsel %vm694, %v2904, 0
        %v2911 = vsel %vm694, %v2906, 0
        %2913 = vmatprep.subr.mxu0 0.0
        %2914 = vmatpush1.xpose.msra.mxu0 %v2909
        %2915 = vmatprep.subr.mxu0 0.0
        %2916 = vmatpush1.xpose.msra.mxu0 %v2911
        %2917 = vmatprep.subr.mxu0 0.0
        %2918 = vmatpush1.xpose.msra.mxu0 0.0
        %2919 = vmatprep.subr.mxu0 0.0
        %2920 = vmatpush1.xpose.msra.mxu0 0.0
        %2921 = vmatprep.subr.mxu0 0.0
        %2922 = vmatpush1.xpose.msra.mxu0 0.0
        %2923 = vmatprep.subr.mxu0 0.0
        %2924 = vmatpush1.xpose.msra.mxu0 0.0
        %2925 = vmatprep.subr.mxu0 0.0
        %2926 = vmatpush1.xpose.msra.mxu0 0.0
        %2927 = vmatprep.subr.mxu0 0.0
        %2928 = vmatpush1.xpose.msra.mxu0 0.0
        %2929 = vmatprep.subr.mxu0 0.0
        %2930 = vmatpush1.xpose.msra.mxu0 0.0
        %2931 = vmatprep.subr.mxu0 0.0
        %2932 = vmatpush1.xpose.msra.mxu0 0.0
        %2933 = vmatprep.subr.mxu0 0.0
        %2934 = vmatpush1.xpose.msra.mxu0 0.0
        %2935 = vmatprep.subr.mxu0 0.0
        %2936 = vmatpush1.xpose.msra.mxu0 0.0
        %2937 = vmatprep.subr.mxu0 0.0
        %2938 = vmatpush1.xpose.msra.mxu0 0.0
        %2939 = vmatprep.subr.mxu0 0.0
        %2940 = vmatpush1.xpose.msra.mxu0 0.0
        %2941 = vmatprep.subr.mxu0 0.0
        %2942 = vmatpush1.xpose.msra.mxu0 0.0
        %2943 = vmatprep.subr.mxu0 0.0
        %2944 = vmatpush1.xpose.msra.mxu0 0.0
        %2945 = vmatprep.subr.mxu0 0.0
        %2946 = vmatpush1.xpose.msra.mxu0 0.0
        %2947 = vmatprep.subr.mxu0 0.0
        %2948 = vmatpush1.xpose.msra.mxu0 0.0
        %2949 = vmatprep.subr.mxu0 0.0
        %2950 = vmatpush1.xpose.msra.mxu0 0.0
        %2951 = vmatprep.subr.mxu0 0.0
        %2952 = vmatpush1.xpose.msra.mxu0 0.0
        %2953 = vmatprep.subr.mxu0 0.0
        %2954 = vmatpush1.xpose.msra.mxu0 0.0
        %2955 = vmatprep.subr.mxu0 0.0
        %2956 = vmatpush1.xpose.msra.mxu0 0.0
        %2957 = vmatprep.subr.mxu0 0.0
        %2958 = vmatpush1.xpose.msra.mxu0 0.0
        %2959 = vmatprep.subr.mxu0 0.0
        %2960 = vmatpush1.xpose.msra.mxu0 0.0
        %2961 = vmatprep.subr.mxu0 0.0
        %2962 = vmatpush1.xpose.msra.mxu0 0.0
        %2963 = vmatprep.subr.mxu0 0.0
        %2964 = vmatpush1.xpose.msra.mxu0 0.0
        %2965 = vmatprep.subr.mxu0 0.0
        %2966 = vmatpush1.xpose.msra.mxu0 0.0
        %2967 = vmatprep.subr.mxu0 0.0
        %2968 = vmatpush1.xpose.msra.mxu0 0.0
        %2969 = vmatprep.subr.mxu0 0.0
        %2970 = vmatpush1.xpose.msra.mxu0 0.0
        %2971 = vmatprep.subr.mxu0 0.0
        %2972 = vmatpush1.xpose.msra.mxu0 0.0
        %2973 = vmatprep.subr.mxu0 0.0
        %2974 = vmatpush1.xpose.msra.mxu0 0.0
        %2975 = vmatprep.subr.mxu0 0.0
        %2976 = vmatpush1.xpose.msra.mxu0 0.0
        %2977 = vmatprep.mubr.f32.mxu0 0.0
        %2978 = vmatmul.mubr.f32.gmra.mrb[0].mxu0 %v2907
        %v2979 = vpop.f32.mrb[0].mxu0
        %v2980 = vadd.f32 0.0, %v2979
        %v2981 = vpop.f32.mrb[0].mxu0
        %2982 = vdwg.mxu0
        %2983 = vrot.lane.b32.xlu0 %v2460, 120
        %v2984 = vpop.permute.xlu0 %2983
        %2985 = vrot.lane.b32.xlu0 %v2552, 120
        %v2986 = vpop.permute.xlu0 %2985
        %2987 = vrot.lane.b32.xlu0 %v2557, 120
        %v2988 = vpop.permute.xlu0 %2987
        %v2989 = vsel %vm694, %v2984, 0
        %v2991 = vsel %vm694, %v2986, 0
        %v2993 = vsel %vm694, %v2988, 0
        %2995 = vmatprep.subr.mxu0 0.0
        %2996 = vmatpush1.xpose.msra.mxu0 %v2991
        %2997 = vmatprep.subr.mxu0 0.0
        %2998 = vmatpush1.xpose.msra.mxu0 %v2993
        %2999 = vmatprep.subr.mxu0 0.0
        %3000 = vmatpush1.xpose.msra.mxu0 0.0
        %3001 = vmatprep.subr.mxu0 0.0
        %3002 = vmatpush1.xpose.msra.mxu0 0.0
        %3003 = vmatprep.subr.mxu0 0.0
        %3004 = vmatpush1.xpose.msra.mxu0 0.0
        %3005 = vmatprep.subr.mxu0 0.0
        %3006 = vmatpush1.xpose.msra.mxu0 0.0
        %3007 = vmatprep.subr.mxu0 0.0
        %3008 = vmatpush1.xpose.msra.mxu0 0.0
        %3009 = vmatprep.subr.mxu0 0.0
        %3010 = vmatpush1.xpose.msra.mxu0 0.0
        %3011 = vmatprep.subr.mxu0 0.0
        %3012 = vmatpush1.xpose.msra.mxu0 0.0
        %3013 = vmatprep.subr.mxu0 0.0
        %3014 = vmatpush1.xpose.msra.mxu0 0.0
        %3015 = vmatprep.subr.mxu0 0.0
        %3016 = vmatpush1.xpose.msra.mxu0 0.0
        %3017 = vmatprep.subr.mxu0 0.0
        %3018 = vmatpush1.xpose.msra.mxu0 0.0
        %3019 = vmatprep.subr.mxu0 0.0
        %3020 = vmatpush1.xpose.msra.mxu0 0.0
        %3021 = vmatprep.subr.mxu0 0.0
        %3022 = vmatpush1.xpose.msra.mxu0 0.0
        %3023 = vmatprep.subr.mxu0 0.0
        %3024 = vmatpush1.xpose.msra.mxu0 0.0
        %3025 = vmatprep.subr.mxu0 0.0
        %3026 = vmatpush1.xpose.msra.mxu0 0.0
        %3027 = vmatprep.subr.mxu0 0.0
        %3028 = vmatpush1.xpose.msra.mxu0 0.0
        %3029 = vmatprep.subr.mxu0 0.0
        %3030 = vmatpush1.xpose.msra.mxu0 0.0
        %3031 = vmatprep.subr.mxu0 0.0
        %3032 = vmatpush1.xpose.msra.mxu0 0.0
        %3033 = vmatprep.subr.mxu0 0.0
        %3034 = vmatpush1.xpose.msra.mxu0 0.0
        %3035 = vmatprep.subr.mxu0 0.0
        %3036 = vmatpush1.xpose.msra.mxu0 0.0
        %3037 = vmatprep.subr.mxu0 0.0
        %3038 = vmatpush1.xpose.msra.mxu0 0.0
        %3039 = vmatprep.subr.mxu0 0.0
        %3040 = vmatpush1.xpose.msra.mxu0 0.0
        %3041 = vmatprep.subr.mxu0 0.0
        %3042 = vmatpush1.xpose.msra.mxu0 0.0
        %3043 = vmatprep.subr.mxu0 0.0
        %3044 = vmatpush1.xpose.msra.mxu0 0.0
        %3045 = vmatprep.subr.mxu0 0.0
        %3046 = vmatpush1.xpose.msra.mxu0 0.0
        %3047 = vmatprep.subr.mxu0 0.0
        %3048 = vmatpush1.xpose.msra.mxu0 0.0
        %3049 = vmatprep.subr.mxu0 0.0
        %3050 = vmatpush1.xpose.msra.mxu0 0.0
        %3051 = vmatprep.subr.mxu0 0.0
        %3052 = vmatpush1.xpose.msra.mxu0 0.0
        %3053 = vmatprep.subr.mxu0 0.0
        %3054 = vmatpush1.xpose.msra.mxu0 0.0
        %3055 = vmatprep.subr.mxu0 0.0
        %3056 = vmatpush1.xpose.msra.mxu0 0.0
        %3057 = vmatprep.subr.mxu0 0.0
        %3058 = vmatpush1.xpose.msra.mxu0 0.0
        %3059 = vmatprep.mubr.f32.mxu0 0.0
        %3060 = vmatmul.mubr.f32.gmra.mrb[0].mxu0 %v2989
        %v3061 = vpop.f32.mrb[0].mxu0
        %v3062 = vadd.f32 0.0, %v3061
        %v3063 = vpop.f32.mrb[0].mxu0
        %3064 = vdwg.mxu0
        %v3065 = vmul.f32 %v2980, 0.35355338
        %v3066 = vmul.f32 %v3062, 0.35355338
        %v3067 = vsel %vm2720, %v3065, -inf
        %3068 = vmax.xlane.f32.xlu0 %v3067
        %v3069 = vpop.xlane.xlu0 %3068
        %v3070 = vsel %vm2720, %v3066, -inf
        %3071 = vmax.xlane.f32.xlu0 %v3070
        %v3072 = vpop.xlane.xlu0 %3071
        %v3073 = vsub.f32 %v3065, %v3069
        %v3074 = vsub.f32 %v3066, %v3072
        %v3075 = vmul.f32 %v3073, 1.442695
        %v3076 = vpow.pop %v3075
        %v3077 = vmul.f32 %v3074, 1.442695
        %v3078 = vpow.pop %v3077
        %v3079 = vsel %vm2720, %v3076, 0.0
        %3080 = vadd.xlane.f32.xlu0 %v3079
        %v3081 = vpop.xlane.xlu0 %3080
        %v3082 = vsel %vm2720, %v3078, 0.0
        %3083 = vadd.xlane.f32.xlu0 %v3082
        %v3084 = vpop.xlane.xlu0 %3083
        %v3085 = vrcp.pop %v3081
        %v3086 = vrcp.pop %v3084
        %v3087 = vmul.f32 %v3076, %v3085
        %v3088 = vmul.f32 %v3078, %v3086
        %3089 = vrot.lane.b32.xlu0 %v2542, 88
        %v3090 = vpop.permute.xlu0 %3089
        %3091 = vrot.lane.b32.xlu0 %v2547, 88
        %v3092 = vpop.permute.xlu0 %3091
        %v3096 = vsel %vm2720, %v3087, 0
        %3098 = vmatprep.subr.mxu0 0.0
        %3099 = vmatpush1.msra.mxu0 %v3090
        %3100 = vmatprep.subr.mxu0 0.0
        %3101 = vmatpush1.msra.mxu0 %v3092
        %3102 = vmatprep.subr.mxu0 0.0
        %3103 = vmatpush1.msra.mxu0 0.0
        %3104 = vmatprep.subr.mxu0 0.0
        %3105 = vmatpush1.msra.mxu0 0.0
        %3106 = vmatprep.subr.mxu0 0.0
        %3107 = vmatpush1.msra.mxu0 0.0
        %3108 = vmatprep.subr.mxu0 0.0
        %3109 = vmatpush1.msra.mxu0 0.0
        %3110 = vmatprep.subr.mxu0 0.0
        %3111 = vmatpush1.msra.mxu0 0.0
        %3112 = vmatprep.subr.mxu0 0.0
        %3113 = vmatpush1.msra.mxu0 0.0
        %3114 = vmatprep.subr.mxu0 0.0
        %3115 = vmatpush1.msra.mxu0 0.0
        %3116 = vmatprep.subr.mxu0 0.0
        %3117 = vmatpush1.msra.mxu0 0.0
        %3118 = vmatprep.subr.mxu0 0.0
        %3119 = vmatpush1.msra.mxu0 0.0
        %3120 = vmatprep.subr.mxu0 0.0
        %3121 = vmatpush1.msra.mxu0 0.0
        %3122 = vmatprep.subr.mxu0 0.0
        %3123 = vmatpush1.msra.mxu0 0.0
        %3124 = vmatprep.subr.mxu0 0.0
        %3125 = vmatpush1.msra.mxu0 0.0
        %3126 = vmatprep.subr.mxu0 0.0
        %3127 = vmatpush1.msra.mxu0 0.0
        %3128 = vmatprep.subr.mxu0 0.0
        %3129 = vmatpush1.msra.mxu0 0.0
        %3130 = vmatprep.subr.mxu0 0.0
        %3131 = vmatpush1.msra.mxu0 0.0
        %3132 = vmatprep.subr.mxu0 0.0
        %3133 = vmatpush1.msra.mxu0 0.0
        %3134 = vmatprep.subr.mxu0 0.0
        %3135 = vmatpush1.msra.mxu0 0.0
        %3136 = vmatprep.subr.mxu0 0.0
        %3137 = vmatpush1.msra.mxu0 0.0
        %3138 = vmatprep.subr.mxu0 0.0
        %3139 = vmatpush1.msra.mxu0 0.0
        %3140 = vmatprep.subr.mxu0 0.0
        %3141 = vmatpush1.msra.mxu0 0.0
        %3142 = vmatprep.subr.mxu0 0.0
        %3143 = vmatpush1.msra.mxu0 0.0
        %3144 = vmatprep.subr.mxu0 0.0
        %3145 = vmatpush1.msra.mxu0 0.0
        %3146 = vmatprep.subr.mxu0 0.0
        %3147 = vmatpush1.msra.mxu0 0.0
        %3148 = vmatprep.subr.mxu0 0.0
        %3149 = vmatpush1.msra.mxu0 0.0
        %3150 = vmatprep.subr.mxu0 0.0
        %3151 = vmatpush1.msra.mxu0 0.0
        %3152 = vmatprep.subr.mxu0 0.0
        %3153 = vmatpush1.msra.mxu0 0.0
        %3154 = vmatprep.subr.mxu0 0.0
        %3155 = vmatpush1.msra.mxu0 0.0
        %3156 = vmatprep.subr.mxu0 0.0
        %3157 = vmatpush1.msra.mxu0 0.0
        %3158 = vmatprep.subr.mxu0 0.0
        %3159 = vmatpush1.msra.mxu0 0.0
        %3160 = vmatprep.subr.mxu0 0.0
        %3161 = vmatpush1.msra.mxu0 0.0
        %3162 = vmatprep.mubr.f32.mxu0 0.0
        %3163 = vmatmul.mubr.f32.gmra.mrb[0].mxu0 %v3096
        %v3164 = vpop.f32.mrb[0].mxu0
        %v3165 = vadd.f32 0.0, %v3164
        %v3166 = vpop.f32.mrb[0].mxu0
        %3167 = vdwg.mxu0
        %3168 = vrot.lane.b32.xlu0 %v2552, 88
        %v3169 = vpop.permute.xlu0 %3168
        %3170 = vrot.lane.b32.xlu0 %v2557, 88
        %v3171 = vpop.permute.xlu0 %3170
        %v3175 = vsel %vm2720, %v3088, 0
        %3177 = vmatprep.subr.mxu0 0.0
        %3178 = vmatpush1.msra.mxu0 %v3169
        %3179 = vmatprep.subr.mxu0 0.0
        %3180 = vmatpush1.msra.mxu0 %v3171
        %3181 = vmatprep.subr.mxu0 0.0
        %3182 = vmatpush1.msra.mxu0 0.0
        %3183 = vmatprep.subr.mxu0 0.0
        %3184 = vmatpush1.msra.mxu0 0.0
        %3185 = vmatprep.subr.mxu0 0.0
        %3186 = vmatpush1.msra.mxu0 0.0
        %3187 = vmatprep.subr.mxu0 0.0
        %3188 = vmatpush1.msra.mxu0 0.0
        %3189 = vmatprep.subr.mxu0 0.0
        %3190 = vmatpush1.msra.mxu0 0.0
        %3191 = vmatprep.subr.mxu0 0.0
        %3192 = vmatpush1.msra.mxu0 0.0
        %3193 = vmatprep.subr.mxu0 0.0
        %3194 = vmatpush1.msra.mxu0 0.0
        %3195 = vmatprep.subr.mxu0 0.0
        %3196 = vmatpush1.msra.mxu0 0.0
        %3197 = vmatprep.subr.mxu0 0.0
        %3198 = vmatpush1.msra.mxu0 0.0
        %3199 = vmatprep.subr.mxu0 0.0
        %3200 = vmatpush1.msra.mxu0 0.0
        %3201 = vmatprep.subr.mxu0 0.0
        %3202 = vmatpush1.msra.mxu0 0.0
        %3203 = vmatprep.subr.mxu0 0.0
        %3204 = vmatpush1.msra.mxu0 0.0
        %3205 = vmatprep.subr.mxu0 0.0
        %3206 = vmatpush1.msra.mxu0 0.0
        %3207 = vmatprep.subr.mxu0 0.0
        %3208 = vmatpush1.msra.mxu0 0.0
        %3209 = vmatprep.subr.mxu0 0.0
        %3210 = vmatpush1.msra.mxu0 0.0
        %3211 = vmatprep.subr.mxu0 0.0
        %3212 = vmatpush1.msra.mxu0 0.0
        %3213 = vmatprep.subr.mxu0 0.0
        %3214 = vmatpush1.msra.mxu0 0.0
        %3215 = vmatprep.subr.mxu0 0.0
        %3216 = vmatpush1.msra.mxu0 0.0
        %3217 = vmatprep.subr.mxu0 0.0
        %3218 = vmatpush1.msra.mxu0 0.0
        %3219 = vmatprep.subr.mxu0 0.0
        %3220 = vmatpush1.msra.mxu0 0.0
        %3221 = vmatprep.subr.mxu0 0.0
        %3222 = vmatpush1.msra.mxu0 0.0
        %3223 = vmatprep.subr.mxu0 0.0
        %3224 = vmatpush1.msra.mxu0 0.0
        %3225 = vmatprep.subr.mxu0 0.0
        %3226 = vmatpush1.msra.mxu0 0.0
        %3227 = vmatprep.subr.mxu0 0.0
        %3228 = vmatpush1.msra.mxu0 0.0
        %3229 = vmatprep.subr.mxu0 0.0
        %3230 = vmatpush1.msra.mxu0 0.0
        %3231 = vmatprep.subr.mxu0 0.0
        %3232 = vmatpush1.msra.mxu0 0.0
        %3233 = vmatprep.subr.mxu0 0.0
        %3234 = vmatpush1.msra.mxu0 0.0
        %3235 = vmatprep.subr.mxu0 0.0
        %3236 = vmatpush1.msra.mxu0 0.0
        %3237 = vmatprep.subr.mxu0 0.0
        %3238 = vmatpush1.msra.mxu0 0.0
        %3239 = vmatprep.subr.mxu0 0.0
        %3240 = vmatpush1.msra.mxu0 0.0
        %3241 = vmatprep.mubr.f32.mxu0 0.0
        %3242 = vmatmul.mubr.f32.gmra.mrb[0].mxu0 %v3175
        %v3243 = vpop.f32.mrb[0].mxu0
        %v3244 = vadd.f32 0.0, %v3243
        %v3245 = vpop.f32.mrb[0].mxu0
        %3246 = vdwg.mxu0
        %v3248 = vsel %vm694, %v3165, 0
        %v3251 = vsel %vm694, %v3244, 0
        %3253 = vmatprep.subr.mxu0 0.0
        %3254 = vmatpush1.msra.mxu0 %v545
        %3255 = vmatprep.subr.mxu0 0.0
        %3256 = vmatpush1.msra.mxu0 0.0
        %3257 = vmatprep.subr.mxu0 0.0
        %3258 = vmatpush1.msra.mxu0 0.0
        %3259 = vmatprep.subr.mxu0 0.0
        %3260 = vmatpush1.msra.mxu0 0.0
        %3261 = vmatprep.subr.mxu0 0.0
        %3262 = vmatpush1.msra.mxu0 0.0
        %3263 = vmatprep.subr.mxu0 0.0
        %3264 = vmatpush1.msra.mxu0 0.0
        %3265 = vmatprep.subr.mxu0 0.0
        %3266 = vmatpush1.msra.mxu0 0.0
        %3267 = vmatprep.subr.mxu0 0.0
        %3268 = vmatpush1.msra.mxu0 0.0
        %3269 = vmatprep.subr.mxu0 0.0
        %3270 = vmatpush1.msra.mxu0 0.0
        %3271 = vmatprep.subr.mxu0 0.0
        %3272 = vmatpush1.msra.mxu0 0.0
        %3273 = vmatprep.subr.mxu0 0.0
        %3274 = vmatpush1.msra.mxu0 0.0
        %3275 = vmatprep.subr.mxu0 0.0
        %3276 = vmatpush1.msra.mxu0 0.0
        %3277 = vmatprep.subr.mxu0 0.0
        %3278 = vmatpush1.msra.mxu0 0.0
        %3279 = vmatprep.subr.mxu0 0.0
        %3280 = vmatpush1.msra.mxu0 0.0
        %3281 = vmatprep.subr.mxu0 0.0
        %3282 = vmatpush1.msra.mxu0 0.0
        %3283 = vmatprep.subr.mxu0 0.0
        %3284 = vmatpush1.msra.mxu0 0.0
        %3285 = vmatprep.subr.mxu0 0.0
        %3286 = vmatpush1.msra.mxu0 0.0
        %3287 = vmatprep.subr.mxu0 0.0
        %3288 = vmatpush1.msra.mxu0 0.0
        %3289 = vmatprep.subr.mxu0 0.0
        %3290 = vmatpush1.msra.mxu0 0.0
        %3291 = vmatprep.subr.mxu0 0.0
        %3292 = vmatpush1.msra.mxu0 0.0
        %3293 = vmatprep.subr.mxu0 0.0
        %3294 = vmatpush1.msra.mxu0 0.0
        %3295 = vmatprep.subr.mxu0 0.0
        %3296 = vmatpush1.msra.mxu0 0.0
        %3297 = vmatprep.subr.mxu0 0.0
        %3298 = vmatpush1.msra.mxu0 0.0
        %3299 = vmatprep.subr.mxu0 0.0
        %3300 = vmatpush1.msra.mxu0 0.0
        %3301 = vmatprep.subr.mxu0 0.0
        %3302 = vmatpush1.msra.mxu0 0.0
        %3303 = vmatprep.subr.mxu0 0.0
        %3304 = vmatpush1.msra.mxu0 0.0
        %3305 = vmatprep.subr.mxu0 0.0
        %3306 = vmatpush1.msra.mxu0 0.0
        %3307 = vmatprep.subr.mxu0 0.0
        %3308 = vmatpush1.msra.mxu0 0.0
        %3309 = vmatprep.subr.mxu0 0.0
        %3310 = vmatpush1.msra.mxu0 0.0
        %3311 = vmatprep.subr.mxu0 0.0
        %3312 = vmatpush1.msra.mxu0 0.0
        %3313 = vmatprep.subr.mxu0 0.0
        %3314 = vmatpush1.msra.mxu0 0.0
        %3315 = vmatprep.subr.mxu0 0.0
        %3316 = vmatpush1.msra.mxu0 0.0
        %3317 = vmatprep.mubr.f32.mxu0 0.0
        %3318 = vmatmul.mubr.f32.gmra.mrb[0].mxu0 %v3248
        %v3319 = vpop.f32.mrb[0].mxu0
        %v3320 = vadd.f32 0.0, %v3319
        %v3321 = vpop.f32.mrb[0].mxu0
        %3322 = vmatprep.mubr.f32.mxu0 0.0
        %3323 = vmatmul.mubr.f32.gmra.mrb[0].mxu0 %v3251
        %v3324 = vpop.f32.mrb[0].mxu0
        %v3325 = vadd.f32 0.0, %v3324
        %v3326 = vpop.f32.mrb[0].mxu0
        %3327 = vdwg.mxu0
        %v3329 = vsel %vm694, %v2819, 0
        %v3332 = vsel %vm694, %v2898, 0
        %3334 = vmatprep.subr.mxu0 0.0
        %3335 = vmatpush1.msra.mxu0 %v544
        %3336 = vmatprep.subr.mxu0 0.0
        %3337 = vmatpush1.msra.mxu0 0.0
        %3338 = vmatprep.subr.mxu0 0.0
        %3339 = vmatpush1.msra.mxu0 0.0
        %3340 = vmatprep.subr.mxu0 0.0
        %3341 = vmatpush1.msra.mxu0 0.0
        %3342 = vmatprep.subr.mxu0 0.0
        %3343 = vmatpush1.msra.mxu0 0.0
        %3344 = vmatprep.subr.mxu0 0.0
        %3345 = vmatpush1.msra.mxu0 0.0
        %3346 = vmatprep.subr.mxu0 0.0
        %3347 = vmatpush1.msra.mxu0 0.0
        %3348 = vmatprep.subr.mxu0 0.0
        %3349 = vmatpush1.msra.mxu0 0.0
        %3350 = vmatprep.subr.mxu0 0.0
        %3351 = vmatpush1.msra.mxu0 0.0
        %3352 = vmatprep.subr.mxu0 0.0
        %3353 = vmatpush1.msra.mxu0 0.0
        %3354 = vmatprep.subr.mxu0 0.0
        %3355 = vmatpush1.msra.mxu0 0.0
        %3356 = vmatprep.subr.mxu0 0.0
        %3357 = vmatpush1.msra.mxu0 0.0
        %3358 = vmatprep.subr.mxu0 0.0
        %3359 = vmatpush1.msra.mxu0 0.0
        %3360 = vmatprep.subr.mxu0 0.0
        %3361 = vmatpush1.msra.mxu0 0.0
        %3362 = vmatprep.subr.mxu0 0.0
        %3363 = vmatpush1.msra.mxu0 0.0
        %3364 = vmatprep.subr.mxu0 0.0
        %3365 = vmatpush1.msra.mxu0 0.0
        %3366 = vmatprep.subr.mxu0 0.0
        %3367 = vmatpush1.msra.mxu0 0.0
        %3368 = vmatprep.subr.mxu0 0.0
        %3369 = vmatpush1.msra.mxu0 0.0
        %3370 = vmatprep.subr.mxu0 0.0
        %3371 = vmatpush1.msra.mxu0 0.0
        %3372 = vmatprep.subr.mxu0 0.0
        %3373 = vmatpush1.msra.mxu0 0.0
        %3374 = vmatprep.subr.mxu0 0.0
        %3375 = vmatpush1.msra.mxu0 0.0
        %3376 = vmatprep.subr.mxu0 0.0
        %3377 = vmatpush1.msra.mxu0 0.0
        %3378 = vmatprep.subr.mxu0 0.0
        %3379 = vmatpush1.msra.mxu0 0.0
        %3380 = vmatprep.subr.mxu0 0.0
        %3381 = vmatpush1.msra.mxu0 0.0
        %3382 = vmatprep.subr.mxu0 0.0
        %3383 = vmatpush1.msra.mxu0 0.0
        %3384 = vmatprep.subr.mxu0 0.0
        %3385 = vmatpush1.msra.mxu0 0.0
        %3386 = vmatprep.subr.mxu0 0.0
        %3387 = vmatpush1.msra.mxu0 0.0
        %3388 = vmatprep.subr.mxu0 0.0
        %3389 = vmatpush1.msra.mxu0 0.0
        %3390 = vmatprep.subr.mxu0 0.0
        %3391 = vmatpush1.msra.mxu0 0.0
        %3392 = vmatprep.subr.mxu0 0.0
        %3393 = vmatpush1.msra.mxu0 0.0
        %3394 = vmatprep.subr.mxu0 0.0
        %3395 = vmatpush1.msra.mxu0 0.0
        %3396 = vmatprep.subr.mxu0 0.0
        %3397 = vmatpush1.msra.mxu0 0.0
        %3398 = vmatprep.mubr.f32.mxu0 0.0
        %3399 = vmatmul.mubr.f32.gmra.mrb[0].mxu0 %v3329
        %v3400 = vpop.f32.mrb[0].mxu0
        %v3401 = vadd.f32 %v3320, %v3400
        %v3402 = vpop.f32.mrb[0].mxu0
        %3403 = vmatprep.mubr.f32.mxu0 0.0
        %3404 = vmatmul.mubr.f32.gmra.mrb[0].mxu0 %v3332
        %v3405 = vpop.f32.mrb[0].mxu0
        %v3406 = vadd.f32 %v3325, %v3405
        %v3407 = vpop.f32.mrb[0].mxu0
        %3408 = vdwg.mxu0
        %3409 = vrot.lane.b32.xlu0 %v2455, 112
        %v3410 = vpop.permute.xlu0 %3409
        %3411 = vrot.lane.b32.xlu0 %v2542, 112
        %v3412 = vpop.permute.xlu0 %3411
        %3413 = vrot.lane.b32.xlu0 %v2547, 112
        %v3414 = vpop.permute.xlu0 %3413
        %v3415 = vsel %vm694, %v3410, 0
        %v3417 = vsel %vm694, %v3412, 0
        %v3419 = vsel %vm694, %v3414, 0
        %3421 = vmatprep.subr.mxu0 0.0
        %3422 = vmatpush1.xpose.msra.mxu0 %v3417
        %3423 = vmatprep.subr.mxu0 0.0
        %3424 = vmatpush1.xpose.msra.mxu0 %v3419
        %3425 = vmatprep.subr.mxu0 0.0
        %3426 = vmatpush1.xpose.msra.mxu0 0.0
        %3427 = vmatprep.subr.mxu0 0.0
        %3428 = vmatpush1.xpose.msra.mxu0 0.0
        %3429 = vmatprep.subr.mxu0 0.0
        %3430 = vmatpush1.xpose.msra.mxu0 0.0
        %3431 = vmatprep.subr.mxu0 0.0
        %3432 = vmatpush1.xpose.msra.mxu0 0.0
        %3433 = vmatprep.subr.mxu0 0.0
        %3434 = vmatpush1.xpose.msra.mxu0 0.0
        %3435 = vmatprep.subr.mxu0 0.0
        %3436 = vmatpush1.xpose.msra.mxu0 0.0
        %3437 = vmatprep.subr.mxu0 0.0
        %3438 = vmatpush1.xpose.msra.mxu0 0.0
        %3439 = vmatprep.subr.mxu0 0.0
        %3440 = vmatpush1.xpose.msra.mxu0 0.0
        %3441 = vmatprep.subr.mxu0 0.0
        %3442 = vmatpush1.xpose.msra.mxu0 0.0
        %3443 = vmatprep.subr.mxu0 0.0
        %3444 = vmatpush1.xpose.msra.mxu0 0.0
        %3445 = vmatprep.subr.mxu0 0.0
        %3446 = vmatpush1.xpose.msra.mxu0 0.0
        %3447 = vmatprep.subr.mxu0 0.0
        %3448 = vmatpush1.xpose.msra.mxu0 0.0
        %3449 = vmatprep.subr.mxu0 0.0
        %3450 = vmatpush1.xpose.msra.mxu0 0.0
        %3451 = vmatprep.subr.mxu0 0.0
        %3452 = vmatpush1.xpose.msra.mxu0 0.0
        %3453 = vmatprep.subr.mxu0 0.0
        %3454 = vmatpush1.xpose.msra.mxu0 0.0
        %3455 = vmatprep.subr.mxu0 0.0
        %3456 = vmatpush1.xpose.msra.mxu0 0.0
        %3457 = vmatprep.subr.mxu0 0.0
        %3458 = vmatpush1.xpose.msra.mxu0 0.0
        %3459 = vmatprep.subr.mxu0 0.0
        %3460 = vmatpush1.xpose.msra.mxu0 0.0
        %3461 = vmatprep.subr.mxu0 0.0
        %3462 = vmatpush1.xpose.msra.mxu0 0.0
        %3463 = vmatprep.subr.mxu0 0.0
        %3464 = vmatpush1.xpose.msra.mxu0 0.0
        %3465 = vmatprep.subr.mxu0 0.0
        %3466 = vmatpush1.xpose.msra.mxu0 0.0
        %3467 = vmatprep.subr.mxu0 0.0
        %3468 = vmatpush1.xpose.msra.mxu0 0.0
        %3469 = vmatprep.subr.mxu0 0.0
        %3470 = vmatpush1.xpose.msra.mxu0 0.0
        %3471 = vmatprep.subr.mxu0 0.0
        %3472 = vmatpush1.xpose.msra.mxu0 0.0
        %3473 = vmatprep.subr.mxu0 0.0
        %3474 = vmatpush1.xpose.msra.mxu0 0.0
        %3475 = vmatprep.subr.mxu0 0.0
        %3476 = vmatpush1.xpose.msra.mxu0 0.0
        %3477 = vmatprep.subr.mxu0 0.0
        %3478 = vmatpush1.xpose.msra.mxu0 0.0
        %3479 = vmatprep.subr.mxu0 0.0
        %3480 = vmatpush1.xpose.msra.mxu0 0.0
        %3481 = vmatprep.subr.mxu0 0.0
        %3482 = vmatpush1.xpose.msra.mxu0 0.0
        %3483 = vmatprep.subr.mxu0 0.0
        %3484 = vmatpush1.xpose.msra.mxu0 0.0
        %3485 = vmatprep.mubr.f32.mxu0 0.0
        %3486 = vmatmul.mubr.f32.gmra.mrb[0].mxu0 %v3415
        %v3487 = vpop.f32.mrb[0].mxu0
        %v3488 = vadd.f32 0.0, %v3487
        %v3489 = vpop.f32.mrb[0].mxu0
        %3490 = vdwg.mxu0
        %3491 = vrot.lane.b32.xlu0 %v2460, 112
        %v3492 = vpop.permute.xlu0 %3491
        %3493 = vrot.lane.b32.xlu0 %v2552, 112
        %v3494 = vpop.permute.xlu0 %3493
        %3495 = vrot.lane.b32.xlu0 %v2557, 112
        %v3496 = vpop.permute.xlu0 %3495
        %v3497 = vsel %vm694, %v3492, 0
        %v3499 = vsel %vm694, %v3494, 0
        %v3501 = vsel %vm694, %v3496, 0
        %3503 = vmatprep.subr.mxu0 0.0
        %3504 = vmatpush1.xpose.msra.mxu0 %v3499
        %3505 = vmatprep.subr.mxu0 0.0
        %3506 = vmatpush1.xpose.msra.mxu0 %v3501
        %3507 = vmatprep.subr.mxu0 0.0
        %3508 = vmatpush1.xpose.msra.mxu0 0.0
        %3509 = vmatprep.subr.mxu0 0.0
        %3510 = vmatpush1.xpose.msra.mxu0 0.0
        %3511 = vmatprep.subr.mxu0 0.0
        %3512 = vmatpush1.xpose.msra.mxu0 0.0
        %3513 = vmatprep.subr.mxu0 0.0
        %3514 = vmatpush1.xpose.msra.mxu0 0.0
        %3515 = vmatprep.subr.mxu0 0.0
        %3516 = vmatpush1.xpose.msra.mxu0 0.0
        %3517 = vmatprep.subr.mxu0 0.0
        %3518 = vmatpush1.xpose.msra.mxu0 0.0
        %3519 = vmatprep.subr.mxu0 0.0
        %3520 = vmatpush1.xpose.msra.mxu0 0.0
        %3521 = vmatprep.subr.mxu0 0.0
        %3522 = vmatpush1.xpose.msra.mxu0 0.0
        %3523 = vmatprep.subr.mxu0 0.0
        %3524 = vmatpush1.xpose.msra.mxu0 0.0
        %3525 = vmatprep.subr.mxu0 0.0
        %3526 = vmatpush1.xpose.msra.mxu0 0.0
        %3527 = vmatprep.subr.mxu0 0.0
        %3528 = vmatpush1.xpose.msra.mxu0 0.0
        %3529 = vmatprep.subr.mxu0 0.0
        %3530 = vmatpush1.xpose.msra.mxu0 0.0
        %3531 = vmatprep.subr.mxu0 0.0
        %3532 = vmatpush1.xpose.msra.mxu0 0.0
        %3533 = vmatprep.subr.mxu0 0.0
        %3534 = vmatpush1.xpose.msra.mxu0 0.0
        %3535 = vmatprep.subr.mxu0 0.0
        %3536 = vmatpush1.xpose.msra.mxu0 0.0
        %3537 = vmatprep.subr.mxu0 0.0
        %3538 = vmatpush1.xpose.msra.mxu0 0.0
        %3539 = vmatprep.subr.mxu0 0.0
        %3540 = vmatpush1.xpose.msra.mxu0 0.0
        %3541 = vmatprep.subr.mxu0 0.0
        %3542 = vmatpush1.xpose.msra.mxu0 0.0
        %3543 = vmatprep.subr.mxu0 0.0
        %3544 = vmatpush1.xpose.msra.mxu0 0.0
        %3545 = vmatprep.subr.mxu0 0.0
        %3546 = vmatpush1.xpose.msra.mxu0 0.0
        %3547 = vmatprep.subr.mxu0 0.0
        %3548 = vmatpush1.xpose.msra.mxu0 0.0
        %3549 = vmatprep.subr.mxu0 0.0
        %3550 = vmatpush1.xpose.msra.mxu0 0.0
        %3551 = vmatprep.subr.mxu0 0.0
        %3552 = vmatpush1.xpose.msra.mxu0 0.0
        %3553 = vmatprep.subr.mxu0 0.0
        %3554 = vmatpush1.xpose.msra.mxu0 0.0
        %3555 = vmatprep.subr.mxu0 0.0
        %3556 = vmatpush1.xpose.msra.mxu0 0.0
        %3557 = vmatprep.subr.mxu0 0.0
        %3558 = vmatpush1.xpose.msra.mxu0 0.0
        %3559 = vmatprep.subr.mxu0 0.0
        %3560 = vmatpush1.xpose.msra.mxu0 0.0
        %3561 = vmatprep.subr.mxu0 0.0
        %3562 = vmatpush1.xpose.msra.mxu0 0.0
        %3563 = vmatprep.subr.mxu0 0.0
        %3564 = vmatpush1.xpose.msra.mxu0 0.0
        %3565 = vmatprep.subr.mxu0 0.0
        %3566 = vmatpush1.xpose.msra.mxu0 0.0
        %3567 = vmatprep.mubr.f32.mxu0 0.0
        %3568 = vmatmul.mubr.f32.gmra.mrb[0].mxu0 %v3497
        %v3569 = vpop.f32.mrb[0].mxu0
        %v3570 = vadd.f32 0.0, %v3569
        %v3571 = vpop.f32.mrb[0].mxu0
        %3572 = vdwg.mxu0
        %v3573 = vmul.f32 %v3488, 0.35355338
        %v3574 = vmul.f32 %v3570, 0.35355338
        %v3575 = vsel %vm2720, %v3573, -inf
        %3576 = vmax.xlane.f32.xlu0 %v3575
        %v3577 = vpop.xlane.xlu0 %3576
        %v3578 = vsel %vm2720, %v3574, -inf
        %3579 = vmax.xlane.f32.xlu0 %v3578
        %v3580 = vpop.xlane.xlu0 %3579
        %v3581 = vsub.f32 %v3573, %v3577
        %v3582 = vsub.f32 %v3574, %v3580
        %v3583 = vmul.f32 %v3581, 1.442695
        %v3584 = vpow.pop %v3583
        %v3585 = vmul.f32 %v3582, 1.442695
        %v3586 = vpow.pop %v3585
        %v3587 = vsel %vm2720, %v3584, 0.0
        %3588 = vadd.xlane.f32.xlu0 %v3587
        %v3589 = vpop.xlane.xlu0 %3588
        %v3590 = vsel %vm2720, %v3586, 0.0
        %3591 = vadd.xlane.f32.xlu0 %v3590
        %v3592 = vpop.xlane.xlu0 %3591
        %v3593 = vrcp.pop %v3589
        %v3594 = vrcp.pop %v3592
        %v3595 = vmul.f32 %v3584, %v3593
        %v3596 = vmul.f32 %v3586, %v3594
        %3597 = vrot.lane.b32.xlu0 %v2542, 80
        %v3598 = vpop.permute.xlu0 %3597
        %3599 = vrot.lane.b32.xlu0 %v2547, 80
        %v3600 = vpop.permute.xlu0 %3599
        %v3604 = vsel %vm2720, %v3595, 0
        %3606 = vmatprep.subr.mxu0 0.0
        %3607 = vmatpush1.msra.mxu0 %v3598
        %3608 = vmatprep.subr.mxu0 0.0
        %3609 = vmatpush1.msra.mxu0 %v3600
        %3610 = vmatprep.subr.mxu0 0.0
        %3611 = vmatpush1.msra.mxu0 0.0
        %3612 = vmatprep.subr.mxu0 0.0
        %3613 = vmatpush1.msra.mxu0 0.0
        %3614 = vmatprep.subr.mxu0 0.0
        %3615 = vmatpush1.msra.mxu0 0.0
        %3616 = vmatprep.subr.mxu0 0.0
        %3617 = vmatpush1.msra.mxu0 0.0
        %3618 = vmatprep.subr.mxu0 0.0
        %3619 = vmatpush1.msra.mxu0 0.0
        %3620 = vmatprep.subr.mxu0 0.0
        %3621 = vmatpush1.msra.mxu0 0.0
        %3622 = vmatprep.subr.mxu0 0.0
        %3623 = vmatpush1.msra.mxu0 0.0
        %3624 = vmatprep.subr.mxu0 0.0
        %3625 = vmatpush1.msra.mxu0 0.0
        %3626 = vmatprep.subr.mxu0 0.0
        %3627 = vmatpush1.msra.mxu0 0.0
        %3628 = vmatprep.subr.mxu0 0.0
        %3629 = vmatpush1.msra.mxu0 0.0
        %3630 = vmatprep.subr.mxu0 0.0
        %3631 = vmatpush1.msra.mxu0 0.0
        %3632 = vmatprep.subr.mxu0 0.0
        %3633 = vmatpush1.msra.mxu0 0.0
        %3634 = vmatprep.subr.mxu0 0.0
        %3635 = vmatpush1.msra.mxu0 0.0
        %3636 = vmatprep.subr.mxu0 0.0
        %3637 = vmatpush1.msra.mxu0 0.0
        %3638 = vmatprep.subr.mxu0 0.0
        %3639 = vmatpush1.msra.mxu0 0.0
        %3640 = vmatprep.subr.mxu0 0.0
        %3641 = vmatpush1.msra.mxu0 0.0
        %3642 = vmatprep.subr.mxu0 0.0
        %3643 = vmatpush1.msra.mxu0 0.0
        %3644 = vmatprep.subr.mxu0 0.0
        %3645 = vmatpush1.msra.mxu0 0.0
        %3646 = vmatprep.subr.mxu0 0.0
        %3647 = vmatpush1.msra.mxu0 0.0
        %3648 = vmatprep.subr.mxu0 0.0
        %3649 = vmatpush1.msra.mxu0 0.0
        %3650 = vmatprep.subr.mxu0 0.0
        %3651 = vmatpush1.msra.mxu0 0.0
        %3652 = vmatprep.subr.mxu0 0.0
        %3653 = vmatpush1.msra.mxu0 0.0
        %3654 = vmatprep.subr.mxu0 0.0
        %3655 = vmatpush1.msra.mxu0 0.0
        %3656 = vmatprep.subr.mxu0 0.0
        %3657 = vmatpush1.msra.mxu0 0.0
        %3658 = vmatprep.subr.mxu0 0.0
        %3659 = vmatpush1.msra.mxu0 0.0
        %3660 = vmatprep.subr.mxu0 0.0
        %3661 = vmatpush1.msra.mxu0 0.0
        %3662 = vmatprep.subr.mxu0 0.0
        %3663 = vmatpush1.msra.mxu0 0.0
        %3664 = vmatprep.subr.mxu0 0.0
        %3665 = vmatpush1.msra.mxu0 0.0
        %3666 = vmatprep.subr.mxu0 0.0
        %3667 = vmatpush1.msra.mxu0 0.0
        %3668 = vmatprep.subr.mxu0 0.0
        %3669 = vmatpush1.msra.mxu0 0.0
        %3670 = vmatprep.mubr.f32.mxu0 0.0
        %3671 = vmatmul.mubr.f32.gmra.mrb[0].mxu0 %v3604
        %v3672 = vpop.f32.mrb[0].mxu0
        %v3673 = vadd.f32 0.0, %v3672
        %v3674 = vpop.f32.mrb[0].mxu0
        %3675 = vdwg.mxu0
        %3676 = vrot.lane.b32.xlu0 %v2552, 80
        %v3677 = vpop.permute.xlu0 %3676
        %3678 = vrot.lane.b32.xlu0 %v2557, 80
        %v3679 = vpop.permute.xlu0 %3678
        %v3683 = vsel %vm2720, %v3596, 0
        %3685 = vmatprep.subr.mxu0 0.0
        %3686 = vmatpush1.msra.mxu0 %v3677
        %3687 = vmatprep.subr.mxu0 0.0
        %3688 = vmatpush1.msra.mxu0 %v3679
        %3689 = vmatprep.subr.mxu0 0.0
        %3690 = vmatpush1.msra.mxu0 0.0
        %3691 = vmatprep.subr.mxu0 0.0
        %3692 = vmatpush1.msra.mxu0 0.0
        %3693 = vmatprep.subr.mxu0 0.0
        %3694 = vmatpush1.msra.mxu0 0.0
        %3695 = vmatprep.subr.mxu0 0.0
        %3696 = vmatpush1.msra.mxu0 0.0
        %3697 = vmatprep.subr.mxu0 0.0
        %3698 = vmatpush1.msra.mxu0 0.0
        %3699 = vmatprep.subr.mxu0 0.0
        %3700 = vmatpush1.msra.mxu0 0.0
        %3701 = vmatprep.subr.mxu0 0.0
        %3702 = vmatpush1.msra.mxu0 0.0
        %3703 = vmatprep.subr.mxu0 0.0
        %3704 = vmatpush1.msra.mxu0 0.0
        %3705 = vmatprep.subr.mxu0 0.0
        %3706 = vmatpush1.msra.mxu0 0.0
        %3707 = vmatprep.subr.mxu0 0.0
        %3708 = vmatpush1.msra.mxu0 0.0
        %3709 = vmatprep.subr.mxu0 0.0
        %3710 = vmatpush1.msra.mxu0 0.0
        %3711 = vmatprep.subr.mxu0 0.0
        %3712 = vmatpush1.msra.mxu0 0.0
        %3713 = vmatprep.subr.mxu0 0.0
        %3714 = vmatpush1.msra.mxu0 0.0
        %3715 = vmatprep.subr.mxu0 0.0
        %3716 = vmatpush1.msra.mxu0 0.0
        %3717 = vmatprep.subr.mxu0 0.0
        %3718 = vmatpush1.msra.mxu0 0.0
        %3719 = vmatprep.subr.mxu0 0.0
        %3720 = vmatpush1.msra.mxu0 0.0
        %3721 = vmatprep.subr.mxu0 0.0
        %3722 = vmatpush1.msra.mxu0 0.0
        %3723 = vmatprep.subr.mxu0 0.0
        %3724 = vmatpush1.msra.mxu0 0.0
        %3725 = vmatprep.subr.mxu0 0.0
        %3726 = vmatpush1.msra.mxu0 0.0
        %3727 = vmatprep.subr.mxu0 0.0
        %3728 = vmatpush1.msra.mxu0 0.0
        %3729 = vmatprep.subr.mxu0 0.0
        %3730 = vmatpush1.msra.mxu0 0.0
        %3731 = vmatprep.subr.mxu0 0.0
        %3732 = vmatpush1.msra.mxu0 0.0
        %3733 = vmatprep.subr.mxu0 0.0
        %3734 = vmatpush1.msra.mxu0 0.0
        %3735 = vmatprep.subr.mxu0 0.0
        %3736 = vmatpush1.msra.mxu0 0.0
        %3737 = vmatprep.subr.mxu0 0.0
        %3738 = vmatpush1.msra.mxu0 0.0
        %3739 = vmatprep.subr.mxu0 0.0
        %3740 = vmatpush1.msra.mxu0 0.0
        %3741 = vmatprep.subr.mxu0 0.0
        %3742 = vmatpush1.msra.mxu0 0.0
        %3743 = vmatprep.subr.mxu0 0.0
        %3744 = vmatpush1.msra.mxu0 0.0
        %3745 = vmatprep.subr.mxu0 0.0
        %3746 = vmatpush1.msra.mxu0 0.0
        %3747 = vmatprep.subr.mxu0 0.0
        %3748 = vmatpush1.msra.mxu0 0.0
        %3749 = vmatprep.mubr.f32.mxu0 0.0
        %3750 = vmatmul.mubr.f32.gmra.mrb[0].mxu0 %v3683
        %v3751 = vpop.f32.mrb[0].mxu0
        %v3752 = vadd.f32 0.0, %v3751
        %v3753 = vpop.f32.mrb[0].mxu0
        %3754 = vdwg.mxu0
        %v3756 = vsel %vm694, %v3673, 0
        %v3759 = vsel %vm694, %v3752, 0
        %3761 = vmatprep.subr.mxu0 0.0
        %3762 = vmatpush1.msra.mxu0 %v546
        %3763 = vmatprep.subr.mxu0 0.0
        %3764 = vmatpush1.msra.mxu0 0.0
        %3765 = vmatprep.subr.mxu0 0.0
        %3766 = vmatpush1.msra.mxu0 0.0
        %3767 = vmatprep.subr.mxu0 0.0
        %3768 = vmatpush1.msra.mxu0 0.0
        %3769 = vmatprep.subr.mxu0 0.0
        %3770 = vmatpush1.msra.mxu0 0.0
        %3771 = vmatprep.subr.mxu0 0.0
        %3772 = vmatpush1.msra.mxu0 0.0
        %3773 = vmatprep.subr.mxu0 0.0
        %3774 = vmatpush1.msra.mxu0 0.0
        %3775 = vmatprep.subr.mxu0 0.0
        %3776 = vmatpush1.msra.mxu0 0.0
        %3777 = vmatprep.subr.mxu0 0.0
        %3778 = vmatpush1.msra.mxu0 0.0
        %3779 = vmatprep.subr.mxu0 0.0
        %3780 = vmatpush1.msra.mxu0 0.0
        %3781 = vmatprep.subr.mxu0 0.0
        %3782 = vmatpush1.msra.mxu0 0.0
        %3783 = vmatprep.subr.mxu0 0.0
        %3784 = vmatpush1.msra.mxu0 0.0
        %3785 = vmatprep.subr.mxu0 0.0
        %3786 = vmatpush1.msra.mxu0 0.0
        %3787 = vmatprep.subr.mxu0 0.0
        %3788 = vmatpush1.msra.mxu0 0.0
        %3789 = vmatprep.subr.mxu0 0.0
        %3790 = vmatpush1.msra.mxu0 0.0
        %3791 = vmatprep.subr.mxu0 0.0
        %3792 = vmatpush1.msra.mxu0 0.0
        %3793 = vmatprep.subr.mxu0 0.0
        %3794 = vmatpush1.msra.mxu0 0.0
        %3795 = vmatprep.subr.mxu0 0.0
        %3796 = vmatpush1.msra.mxu0 0.0
        %3797 = vmatprep.subr.mxu0 0.0
        %3798 = vmatpush1.msra.mxu0 0.0
        %3799 = vmatprep.subr.mxu0 0.0
        %3800 = vmatpush1.msra.mxu0 0.0
        %3801 = vmatprep.subr.mxu0 0.0
        %3802 = vmatpush1.msra.mxu0 0.0
        %3803 = vmatprep.subr.mxu0 0.0
        %3804 = vmatpush1.msra.mxu0 0.0
        %3805 = vmatprep.subr.mxu0 0.0
        %3806 = vmatpush1.msra.mxu0 0.0
        %3807 = vmatprep.subr.mxu0 0.0
        %3808 = vmatpush1.msra.mxu0 0.0
        %3809 = vmatprep.subr.mxu0 0.0
        %3810 = vmatpush1.msra.mxu0 0.0
        %3811 = vmatprep.subr.mxu0 0.0
        %3812 = vmatpush1.msra.mxu0 0.0
        %3813 = vmatprep.subr.mxu0 0.0
        %3814 = vmatpush1.msra.mxu0 0.0
        %3815 = vmatprep.subr.mxu0 0.0
        %3816 = vmatpush1.msra.mxu0 0.0
        %3817 = vmatprep.subr.mxu0 0.0
        %3818 = vmatpush1.msra.mxu0 0.0
        %3819 = vmatprep.subr.mxu0 0.0
        %3820 = vmatpush1.msra.mxu0 0.0
        %3821 = vmatprep.subr.mxu0 0.0
        %3822 = vmatpush1.msra.mxu0 0.0
        %3823 = vmatprep.subr.mxu0 0.0
        %3824 = vmatpush1.msra.mxu0 0.0
        %3825 = vmatprep.mubr.f32.mxu0 0.0
        %3826 = vmatmul.mubr.f32.gmra.mrb[0].mxu0 %v3756
        %v3827 = vpop.f32.mrb[0].mxu0
        %v3828 = vadd.f32 0.0, %v3827
        %v3829 = vpop.f32.mrb[0].mxu0
        %3830 = vmatprep.mubr.f32.mxu0 0.0
        %3831 = vmatmul.mubr.f32.gmra.mrb[0].mxu0 %v3759
        %v3832 = vpop.f32.mrb[0].mxu0
        %v3833 = vadd.f32 0.0, %v3832
        %v3834 = vpop.f32.mrb[0].mxu0
        %3835 = vdwg.mxu0
        %v3836 = vadd.f32 %v3401, %v3828
        %v3837 = vadd.f32 %v3406, %v3833
        %3838 = vrot.lane.b32.xlu0 %v2455, 104
        %v3839 = vpop.permute.xlu0 %3838
        %3840 = vrot.lane.b32.xlu0 %v2542, 104
        %v3841 = vpop.permute.xlu0 %3840
        %3842 = vrot.lane.b32.xlu0 %v2547, 104
        %v3843 = vpop.permute.xlu0 %3842
        %v3844 = vsel %vm694, %v3839, 0
        %v3846 = vsel %vm694, %v3841, 0
        %v3848 = vsel %vm694, %v3843, 0
        %3850 = vmatprep.subr.mxu0 0.0
        %3851 = vmatpush1.xpose.msra.mxu0 %v3846
        %3852 = vmatprep.subr.mxu0 0.0
        %3853 = vmatpush1.xpose.msra.mxu0 %v3848
        %3854 = vmatprep.subr.mxu0 0.0
        %3855 = vmatpush1.xpose.msra.mxu0 0.0
        %3856 = vmatprep.subr.mxu0 0.0
        %3857 = vmatpush1.xpose.msra.mxu0 0.0
        %3858 = vmatprep.subr.mxu0 0.0
        %3859 = vmatpush1.xpose.msra.mxu0 0.0
        %3860 = vmatprep.subr.mxu0 0.0
        %3861 = vmatpush1.xpose.msra.mxu0 0.0
        %3862 = vmatprep.subr.mxu0 0.0
        %3863 = vmatpush1.xpose.msra.mxu0 0.0
        %3864 = vmatprep.subr.mxu0 0.0
        %3865 = vmatpush1.xpose.msra.mxu0 0.0
        %3866 = vmatprep.subr.mxu0 0.0
        %3867 = vmatpush1.xpose.msra.mxu0 0.0
        %3868 = vmatprep.subr.mxu0 0.0
        %3869 = vmatpush1.xpose.msra.mxu0 0.0
        %3870 = vmatprep.subr.mxu0 0.0
        %3871 = vmatpush1.xpose.msra.mxu0 0.0
        %3872 = vmatprep.subr.mxu0 0.0
        %3873 = vmatpush1.xpose.msra.mxu0 0.0
        %3874 = vmatprep.subr.mxu0 0.0
        %3875 = vmatpush1.xpose.msra.mxu0 0.0
        %3876 = vmatprep.subr.mxu0 0.0
        %3877 = vmatpush1.xpose.msra.mxu0 0.0
        %3878 = vmatprep.subr.mxu0 0.0
        %3879 = vmatpush1.xpose.msra.mxu0 0.0
        %3880 = vmatprep.subr.mxu0 0.0
        %3881 = vmatpush1.xpose.msra.mxu0 0.0
        %3882 = vmatprep.subr.mxu0 0.0
        %3883 = vmatpush1.xpose.msra.mxu0 0.0
        %3884 = vmatprep.subr.mxu0 0.0
        %3885 = vmatpush1.xpose.msra.mxu0 0.0
        %3886 = vmatprep.subr.mxu0 0.0
        %3887 = vmatpush1.xpose.msra.mxu0 0.0
        %3888 = vmatprep.subr.mxu0 0.0
        %3889 = vmatpush1.xpose.msra.mxu0 0.0
        %3890 = vmatprep.subr.mxu0 0.0
        %3891 = vmatpush1.xpose.msra.mxu0 0.0
        %3892 = vmatprep.subr.mxu0 0.0
        %3893 = vmatpush1.xpose.msra.mxu0 0.0
        %3894 = vmatprep.subr.mxu0 0.0
        %3895 = vmatpush1.xpose.msra.mxu0 0.0
        %3896 = vmatprep.subr.mxu0 0.0
        %3897 = vmatpush1.xpose.msra.mxu0 0.0
        %3898 = vmatprep.subr.mxu0 0.0
        %3899 = vmatpush1.xpose.msra.mxu0 0.0
        %3900 = vmatprep.subr.mxu0 0.0
        %3901 = vmatpush1.xpose.msra.mxu0 0.0
        %3902 = vmatprep.subr.mxu0 0.0
        %3903 = vmatpush1.xpose.msra.mxu0 0.0
        %3904 = vmatprep.subr.mxu0 0.0
        %3905 = vmatpush1.xpose.msra.mxu0 0.0
        %3906 = vmatprep.subr.mxu0 0.0
        %3907 = vmatpush1.xpose.msra.mxu0 0.0
        %3908 = vmatprep.subr.mxu0 0.0
        %3909 = vmatpush1.xpose.msra.mxu0 0.0
        %3910 = vmatprep.subr.mxu0 0.0
        %3911 = vmatpush1.xpose.msra.mxu0 0.0
        %3912 = vmatprep.subr.mxu0 0.0
        %3913 = vmatpush1.xpose.msra.mxu0 0.0
        %3914 = vmatprep.mubr.f32.mxu0 0.0
        %3915 = vmatmul.mubr.f32.gmra.mrb[0].mxu0 %v3844
        %v3916 = vpop.f32.mrb[0].mxu0
        %v3917 = vadd.f32 0.0, %v3916
        %v3918 = vpop.f32.mrb[0].mxu0
        %3919 = vdwg.mxu0
        %3920 = vrot.lane.b32.xlu0 %v2460, 104
        %v3921 = vpop.permute.xlu0 %3920
        %3922 = vrot.lane.b32.xlu0 %v2552, 104
        %v3923 = vpop.permute.xlu0 %3922
        %3924 = vrot.lane.b32.xlu0 %v2557, 104
        %v3925 = vpop.permute.xlu0 %3924
        %v3926 = vsel %vm694, %v3921, 0
        %v3928 = vsel %vm694, %v3923, 0
        %v3930 = vsel %vm694, %v3925, 0
        %3932 = vmatprep.subr.mxu0 0.0
        %3933 = vmatpush1.xpose.msra.mxu0 %v3928
        %3934 = vmatprep.subr.mxu0 0.0
        %3935 = vmatpush1.xpose.msra.mxu0 %v3930
        %3936 = vmatprep.subr.mxu0 0.0
        %3937 = vmatpush1.xpose.msra.mxu0 0.0
        %3938 = vmatprep.subr.mxu0 0.0
        %3939 = vmatpush1.xpose.msra.mxu0 0.0
        %3940 = vmatprep.subr.mxu0 0.0
        %3941 = vmatpush1.xpose.msra.mxu0 0.0
        %3942 = vmatprep.subr.mxu0 0.0
        %3943 = vmatpush1.xpose.msra.mxu0 0.0
        %3944 = vmatprep.subr.mxu0 0.0
        %3945 = vmatpush1.xpose.msra.mxu0 0.0
        %3946 = vmatprep.subr.mxu0 0.0
        %3947 = vmatpush1.xpose.msra.mxu0 0.0
        %3948 = vmatprep.subr.mxu0 0.0
        %3949 = vmatpush1.xpose.msra.mxu0 0.0
        %3950 = vmatprep.subr.mxu0 0.0
        %3951 = vmatpush1.xpose.msra.mxu0 0.0
        %3952 = vmatprep.subr.mxu0 0.0
        %3953 = vmatpush1.xpose.msra.mxu0 0.0
        %3954 = vmatprep.subr.mxu0 0.0
        %3955 = vmatpush1.xpose.msra.mxu0 0.0
        %3956 = vmatprep.subr.mxu0 0.0
        %3957 = vmatpush1.xpose.msra.mxu0 0.0
        %3958 = vmatprep.subr.mxu0 0.0
        %3959 = vmatpush1.xpose.msra.mxu0 0.0
        %3960 = vmatprep.subr.mxu0 0.0
        %3961 = vmatpush1.xpose.msra.mxu0 0.0
        %3962 = vmatprep.subr.mxu0 0.0
        %3963 = vmatpush1.xpose.msra.mxu0 0.0
        %3964 = vmatprep.subr.mxu0 0.0
        %3965 = vmatpush1.xpose.msra.mxu0 0.0
        %3966 = vmatprep.subr.mxu0 0.0
        %3967 = vmatpush1.xpose.msra.mxu0 0.0
        %3968 = vmatprep.subr.mxu0 0.0
        %3969 = vmatpush1.xpose.msra.mxu0 0.0
        %3970 = vmatprep.subr.mxu0 0.0
        %3971 = vmatpush1.xpose.msra.mxu0 0.0
        %3972 = vmatprep.subr.mxu0 0.0
        %3973 = vmatpush1.xpose.msra.mxu0 0.0
        %3974 = vmatprep.subr.mxu0 0.0
        %3975 = vmatpush1.xpose.msra.mxu0 0.0
        %3976 = vmatprep.subr.mxu0 0.0
        %3977 = vmatpush1.xpose.msra.mxu0 0.0
        %3978 = vmatprep.subr.mxu0 0.0
        %3979 = vmatpush1.xpose.msra.mxu0 0.0
        %3980 = vmatprep.subr.mxu0 0.0
        %3981 = vmatpush1.xpose.msra.mxu0 0.0
        %3982 = vmatprep.subr.mxu0 0.0
        %3983 = vmatpush1.xpose.msra.mxu0 0.0
        %3984 = vmatprep.subr.mxu0 0.0
        %3985 = vmatpush1.xpose.msra.mxu0 0.0
        %3986 = vmatprep.subr.mxu0 0.0
        %3987 = vmatpush1.xpose.msra.mxu0 0.0
        %3988 = vmatprep.subr.mxu0 0.0
        %3989 = vmatpush1.xpose.msra.mxu0 0.0
        %3990 = vmatprep.subr.mxu0 0.0
        %3991 = vmatpush1.xpose.msra.mxu0 0.0
        %3992 = vmatprep.subr.mxu0 0.0
        %3993 = vmatpush1.xpose.msra.mxu0 0.0
        %3994 = vmatprep.subr.mxu0 0.0
        %3995 = vmatpush1.xpose.msra.mxu0 0.0
        %3996 = vmatprep.mubr.f32.mxu0 0.0
        %3997 = vmatmul.mubr.f32.gmra.mrb[0].mxu0 %v3926
        %v3998 = vpop.f32.mrb[0].mxu0
        %v3999 = vadd.f32 0.0, %v3998
        %v4000 = vpop.f32.mrb[0].mxu0
        %4001 = vdwg.mxu0
        %v4002 = vmul.f32 %v3917, 0.35355338
        %v4003 = vmul.f32 %v3999, 0.35355338
        %v4004 = vsel %vm2720, %v4002, -inf
        %4005 = vmax.xlane.f32.xlu0 %v4004
        %v4006 = vpop.xlane.xlu0 %4005
        %v4007 = vsel %vm2720, %v4003, -inf
        %4008 = vmax.xlane.f32.xlu0 %v4007
        %v4009 = vpop.xlane.xlu0 %4008
        %v4010 = vsub.f32 %v4002, %v4006
        %v4011 = vsub.f32 %v4003, %v4009
        %v4012 = vmul.f32 %v4010, 1.442695
        %v4013 = vpow.pop %v4012
        %v4014 = vmul.f32 %v4011, 1.442695
        %v4015 = vpow.pop %v4014
        %v4016 = vsel %vm2720, %v4013, 0.0
        %4017 = vadd.xlane.f32.xlu0 %v4016
        %v4018 = vpop.xlane.xlu0 %4017
        %v4019 = vsel %vm2720, %v4015, 0.0
        %4020 = vadd.xlane.f32.xlu0 %v4019
        %v4021 = vpop.xlane.xlu0 %4020
        %v4022 = vrcp.pop %v4018
        %v4023 = vrcp.pop %v4021
        %v4024 = vmul.f32 %v4013, %v4022
        %v4025 = vmul.f32 %v4015, %v4023
        %4026 = vrot.lane.b32.xlu0 %v2542, 72
        %v4027 = vpop.permute.xlu0 %4026
        %4028 = vrot.lane.b32.xlu0 %v2547, 72
        %v4029 = vpop.permute.xlu0 %4028
        %v4033 = vsel %vm2720, %v4024, 0
        %4035 = vmatprep.subr.mxu0 0.0
        %4036 = vmatpush1.msra.mxu0 %v4027
        %4037 = vmatprep.subr.mxu0 0.0
        %4038 = vmatpush1.msra.mxu0 %v4029
        %4039 = vmatprep.subr.mxu0 0.0
        %4040 = vmatpush1.msra.mxu0 0.0
        %4041 = vmatprep.subr.mxu0 0.0
        %4042 = vmatpush1.msra.mxu0 0.0
        %4043 = vmatprep.subr.mxu0 0.0
        %4044 = vmatpush1.msra.mxu0 0.0
        %4045 = vmatprep.subr.mxu0 0.0
        %4046 = vmatpush1.msra.mxu0 0.0
        %4047 = vmatprep.subr.mxu0 0.0
        %4048 = vmatpush1.msra.mxu0 0.0
        %4049 = vmatprep.subr.mxu0 0.0
        %4050 = vmatpush1.msra.mxu0 0.0
        %4051 = vmatprep.subr.mxu0 0.0
        %4052 = vmatpush1.msra.mxu0 0.0
        %4053 = vmatprep.subr.mxu0 0.0
        %4054 = vmatpush1.msra.mxu0 0.0
        %4055 = vmatprep.subr.mxu0 0.0
        %4056 = vmatpush1.msra.mxu0 0.0
        %4057 = vmatprep.subr.mxu0 0.0
        %4058 = vmatpush1.msra.mxu0 0.0
        %4059 = vmatprep.subr.mxu0 0.0
        %4060 = vmatpush1.msra.mxu0 0.0
        %4061 = vmatprep.subr.mxu0 0.0
        %4062 = vmatpush1.msra.mxu0 0.0
        %4063 = vmatprep.subr.mxu0 0.0
        %4064 = vmatpush1.msra.mxu0 0.0
        %4065 = vmatprep.subr.mxu0 0.0
        %4066 = vmatpush1.msra.mxu0 0.0
        %4067 = vmatprep.subr.mxu0 0.0
        %4068 = vmatpush1.msra.mxu0 0.0
        %4069 = vmatprep.subr.mxu0 0.0
        %4070 = vmatpush1.msra.mxu0 0.0
        %4071 = vmatprep.subr.mxu0 0.0
        %4072 = vmatpush1.msra.mxu0 0.0
        %4073 = vmatprep.subr.mxu0 0.0
        %4074 = vmatpush1.msra.mxu0 0.0
        %4075 = vmatprep.subr.mxu0 0.0
        %4076 = vmatpush1.msra.mxu0 0.0
        %4077 = vmatprep.subr.mxu0 0.0
        %4078 = vmatpush1.msra.mxu0 0.0
        %4079 = vmatprep.subr.mxu0 0.0
        %4080 = vmatpush1.msra.mxu0 0.0
        %4081 = vmatprep.subr.mxu0 0.0
        %4082 = vmatpush1.msra.mxu0 0.0
        %4083 = vmatprep.subr.mxu0 0.0
        %4084 = vmatpush1.msra.mxu0 0.0
        %4085 = vmatprep.subr.mxu0 0.0
        %4086 = vmatpush1.msra.mxu0 0.0
        %4087 = vmatprep.subr.mxu0 0.0
        %4088 = vmatpush1.msra.mxu0 0.0
        %4089 = vmatprep.subr.mxu0 0.0
        %4090 = vmatpush1.msra.mxu0 0.0
        %4091 = vmatprep.subr.mxu0 0.0
        %4092 = vmatpush1.msra.mxu0 0.0
        %4093 = vmatprep.subr.mxu0 0.0
        %4094 = vmatpush1.msra.mxu0 0.0
        %4095 = vmatprep.subr.mxu0 0.0
        %4096 = vmatpush1.msra.mxu0 0.0
        %4097 = vmatprep.subr.mxu0 0.0
        %4098 = vmatpush1.msra.mxu0 0.0
        %4099 = vmatprep.mubr.f32.mxu0 0.0
        %4100 = vmatmul.mubr.f32.gmra.mrb[0].mxu0 %v4033
        %v4101 = vpop.f32.mrb[0].mxu0
        %v4102 = vadd.f32 0.0, %v4101
        %v4103 = vpop.f32.mrb[0].mxu0
        %4104 = vdwg.mxu0
        %4105 = vrot.lane.b32.xlu0 %v2552, 72
        %v4106 = vpop.permute.xlu0 %4105
        %4107 = vrot.lane.b32.xlu0 %v2557, 72
        %v4108 = vpop.permute.xlu0 %4107
        %v4112 = vsel %vm2720, %v4025, 0
        %4114 = vmatprep.subr.mxu0 0.0
        %4115 = vmatpush1.msra.mxu0 %v4106
        %4116 = vmatprep.subr.mxu0 0.0
        %4117 = vmatpush1.msra.mxu0 %v4108
        %4118 = vmatprep.subr.mxu0 0.0
        %4119 = vmatpush1.msra.mxu0 0.0
        %4120 = vmatprep.subr.mxu0 0.0
        %4121 = vmatpush1.msra.mxu0 0.0
        %4122 = vmatprep.subr.mxu0 0.0
        %4123 = vmatpush1.msra.mxu0 0.0
        %4124 = vmatprep.subr.mxu0 0.0
        %4125 = vmatpush1.msra.mxu0 0.0
        %4126 = vmatprep.subr.mxu0 0.0
        %4127 = vmatpush1.msra.mxu0 0.0
        %4128 = vmatprep.subr.mxu0 0.0
        %4129 = vmatpush1.msra.mxu0 0.0
        %4130 = vmatprep.subr.mxu0 0.0
        %4131 = vmatpush1.msra.mxu0 0.0
        %4132 = vmatprep.subr.mxu0 0.0
        %4133 = vmatpush1.msra.mxu0 0.0
        %4134 = vmatprep.subr.mxu0 0.0
        %4135 = vmatpush1.msra.mxu0 0.0
        %4136 = vmatprep.subr.mxu0 0.0
        %4137 = vmatpush1.msra.mxu0 0.0
        %4138 = vmatprep.subr.mxu0 0.0
        %4139 = vmatpush1.msra.mxu0 0.0
        %4140 = vmatprep.subr.mxu0 0.0
        %4141 = vmatpush1.msra.mxu0 0.0
        %4142 = vmatprep.subr.mxu0 0.0
        %4143 = vmatpush1.msra.mxu0 0.0
        %4144 = vmatprep.subr.mxu0 0.0
        %4145 = vmatpush1.msra.mxu0 0.0
        %4146 = vmatprep.subr.mxu0 0.0
        %4147 = vmatpush1.msra.mxu0 0.0
        %4148 = vmatprep.subr.mxu0 0.0
        %4149 = vmatpush1.msra.mxu0 0.0
        %4150 = vmatprep.subr.mxu0 0.0
        %4151 = vmatpush1.msra.mxu0 0.0
        %4152 = vmatprep.subr.mxu0 0.0
        %4153 = vmatpush1.msra.mxu0 0.0
        %4154 = vmatprep.subr.mxu0 0.0
        %4155 = vmatpush1.msra.mxu0 0.0
        %4156 = vmatprep.subr.mxu0 0.0
        %4157 = vmatpush1.msra.mxu0 0.0
        %4158 = vmatprep.subr.mxu0 0.0
        %4159 = vmatpush1.msra.mxu0 0.0
        %4160 = vmatprep.subr.mxu0 0.0
        %4161 = vmatpush1.msra.mxu0 0.0
        %4162 = vmatprep.subr.mxu0 0.0
        %4163 = vmatpush1.msra.mxu0 0.0
        %4164 = vmatprep.subr.mxu0 0.0
        %4165 = vmatpush1.msra.mxu0 0.0
        %4166 = vmatprep.subr.mxu0 0.0
        %4167 = vmatpush1.msra.mxu0 0.0
        %4168 = vmatprep.subr.mxu0 0.0
        %4169 = vmatpush1.msra.mxu0 0.0
        %4170 = vmatprep.subr.mxu0 0.0
        %4171 = vmatpush1.msra.mxu0 0.0
        %4172 = vmatprep.subr.mxu0 0.0
        %4173 = vmatpush1.msra.mxu0 0.0
        %4174 = vmatprep.subr.mxu0 0.0
        %4175 = vmatpush1.msra.mxu0 0.0
        %4176 = vmatprep.subr.mxu0 0.0
        %4177 = vmatpush1.msra.mxu0 0.0
        %4178 = vmatprep.mubr.f32.mxu0 0.0
        %4179 = vmatmul.mubr.f32.gmra.mrb[0].mxu0 %v4112
        %v4180 = vpop.f32.mrb[0].mxu0
        %v4181 = vadd.f32 0.0, %v4180
        %v4182 = vpop.f32.mrb[0].mxu0
        %4183 = vdwg.mxu0
        %v4185 = vsel %vm694, %v4102, 0
        %v4188 = vsel %vm694, %v4181, 0
        %4190 = vmatprep.subr.mxu0 0.0
        %4191 = vmatpush1.msra.mxu0 %v547
        %4192 = vmatprep.subr.mxu0 0.0
        %4193 = vmatpush1.msra.mxu0 0.0
        %4194 = vmatprep.subr.mxu0 0.0
        %4195 = vmatpush1.msra.mxu0 0.0
        %4196 = vmatprep.subr.mxu0 0.0
        %4197 = vmatpush1.msra.mxu0 0.0
        %4198 = vmatprep.subr.mxu0 0.0
        %4199 = vmatpush1.msra.mxu0 0.0
        %4200 = vmatprep.subr.mxu0 0.0
        %4201 = vmatpush1.msra.mxu0 0.0
        %4202 = vmatprep.subr.mxu0 0.0
        %4203 = vmatpush1.msra.mxu0 0.0
        %4204 = vmatprep.subr.mxu0 0.0
        %4205 = vmatpush1.msra.mxu0 0.0
        %4206 = vmatprep.subr.mxu0 0.0
        %4207 = vmatpush1.msra.mxu0 0.0
        %4208 = vmatprep.subr.mxu0 0.0
        %4209 = vmatpush1.msra.mxu0 0.0
        %4210 = vmatprep.subr.mxu0 0.0
        %4211 = vmatpush1.msra.mxu0 0.0
        %4212 = vmatprep.subr.mxu0 0.0
        %4213 = vmatpush1.msra.mxu0 0.0
        %4214 = vmatprep.subr.mxu0 0.0
        %4215 = vmatpush1.msra.mxu0 0.0
        %4216 = vmatprep.subr.mxu0 0.0
        %4217 = vmatpush1.msra.mxu0 0.0
        %4218 = vmatprep.subr.mxu0 0.0
        %4219 = vmatpush1.msra.mxu0 0.0
        %4220 = vmatprep.subr.mxu0 0.0
        %4221 = vmatpush1.msra.mxu0 0.0
        %4222 = vmatprep.subr.mxu0 0.0
        %4223 = vmatpush1.msra.mxu0 0.0
        %4224 = vmatprep.subr.mxu0 0.0
        %4225 = vmatpush1.msra.mxu0 0.0
        %4226 = vmatprep.subr.mxu0 0.0
        %4227 = vmatpush1.msra.mxu0 0.0
        %4228 = vmatprep.subr.mxu0 0.0
        %4229 = vmatpush1.msra.mxu0 0.0
        %4230 = vmatprep.subr.mxu0 0.0
        %4231 = vmatpush1.msra.mxu0 0.0
        %4232 = vmatprep.subr.mxu0 0.0
        %4233 = vmatpush1.msra.mxu0 0.0
        %4234 = vmatprep.subr.mxu0 0.0
        %4235 = vmatpush1.msra.mxu0 0.0
        %4236 = vmatprep.subr.mxu0 0.0
        %4237 = vmatpush1.msra.mxu0 0.0
        %4238 = vmatprep.subr.mxu0 0.0
        %4239 = vmatpush1.msra.mxu0 0.0
        %4240 = vmatprep.subr.mxu0 0.0
        %4241 = vmatpush1.msra.mxu0 0.0
        %4242 = vmatprep.subr.mxu0 0.0
        %4243 = vmatpush1.msra.mxu0 0.0
        %4244 = vmatprep.subr.mxu0 0.0
        %4245 = vmatpush1.msra.mxu0 0.0
        %4246 = vmatprep.subr.mxu0 0.0
        %4247 = vmatpush1.msra.mxu0 0.0
        %4248 = vmatprep.subr.mxu0 0.0
        %4249 = vmatpush1.msra.mxu0 0.0
        %4250 = vmatprep.subr.mxu0 0.0
        %4251 = vmatpush1.msra.mxu0 0.0
        %4252 = vmatprep.subr.mxu0 0.0
        %4253 = vmatpush1.msra.mxu0 0.0
        %4254 = vmatprep.mubr.f32.mxu0 0.0
        %4255 = vmatmul.mubr.f32.gmra.mrb[0].mxu0 %v4185
        %v4256 = vpop.f32.mrb[0].mxu0
        %v4257 = vadd.f32 0.0, %v4256
        %v4258 = vpop.f32.mrb[0].mxu0
        %4259 = vmatprep.mubr.f32.mxu0 0.0
        %4260 = vmatmul.mubr.f32.gmra.mrb[0].mxu0 %v4188
        %v4261 = vpop.f32.mrb[0].mxu0
        %v4262 = vadd.f32 0.0, %v4261
        %v4263 = vpop.f32.mrb[0].mxu0
        %4264 = vdwg.mxu0
        %v4265 = vadd.f32 %v3836, %v4257
        %v4266 = vadd.f32 %v3837, %v4262
        %v4267 = vadd.f32 %v4265, %v2346
        %v4268 = vadd.f32 %v4266, %v2347
        %v4270 = vsel %vm574, %v4267, 0
        %v4273 = vsel %vm574, %v4268, 0
        %4275 = vmatprep.subr.mxu0 0.0
        %4276 = vmatpush1.msra.mxu0 %v548
        %4277 = vmatprep.subr.mxu0 0.0
        %4278 = vmatpush1.msra.mxu0 %v549
        %4279 = vmatprep.subr.mxu0 0.0
        %4280 = vmatpush1.msra.mxu0 %v550
        %4281 = vmatprep.subr.mxu0 0.0
        %4282 = vmatpush1.msra.mxu0 %v551
        %4283 = vmatprep.subr.mxu0 0.0
        %4284 = vmatpush1.msra.mxu0 0.0
        %4285 = vmatprep.subr.mxu0 0.0
        %4286 = vmatpush1.msra.mxu0 0.0
        %4287 = vmatprep.subr.mxu0 0.0
        %4288 = vmatpush1.msra.mxu0 0.0
        %4289 = vmatprep.subr.mxu0 0.0
        %4290 = vmatpush1.msra.mxu0 0.0
        %4291 = vmatprep.subr.mxu0 0.0
        %4292 = vmatpush1.msra.mxu0 0.0
        %4293 = vmatprep.subr.mxu0 0.0
        %4294 = vmatpush1.msra.mxu0 0.0
        %4295 = vmatprep.subr.mxu0 0.0
        %4296 = vmatpush1.msra.mxu0 0.0
        %4297 = vmatprep.subr.mxu0 0.0
        %4298 = vmatpush1.msra.mxu0 0.0
        %4299 = vmatprep.subr.mxu0 0.0
        %4300 = vmatpush1.msra.mxu0 0.0
        %4301 = vmatprep.subr.mxu0 0.0
        %4302 = vmatpush1.msra.mxu0 0.0
        %4303 = vmatprep.subr.mxu0 0.0
        %4304 = vmatpush1.msra.mxu0 0.0
        %4305 = vmatprep.subr.mxu0 0.0
        %4306 = vmatpush1.msra.mxu0 0.0
        %4307 = vmatprep.subr.mxu0 0.0
        %4308 = vmatpush1.msra.mxu0 0.0
        %4309 = vmatprep.subr.mxu0 0.0
        %4310 = vmatpush1.msra.mxu0 0.0
        %4311 = vmatprep.subr.mxu0 0.0
        %4312 = vmatpush1.msra.mxu0 0.0
        %4313 = vmatprep.subr.mxu0 0.0
        %4314 = vmatpush1.msra.mxu0 0.0
        %4315 = vmatprep.subr.mxu0 0.0
        %4316 = vmatpush1.msra.mxu0 0.0
        %4317 = vmatprep.subr.mxu0 0.0
        %4318 = vmatpush1.msra.mxu0 0.0
        %4319 = vmatprep.subr.mxu0 0.0
        %4320 = vmatpush1.msra.mxu0 0.0
        %4321 = vmatprep.subr.mxu0 0.0
        %4322 = vmatpush1.msra.mxu0 0.0
        %4323 = vmatprep.subr.mxu0 0.0
        %4324 = vmatpush1.msra.mxu0 0.0
        %4325 = vmatprep.subr.mxu0 0.0
        %4326 = vmatpush1.msra.mxu0 0.0
        %4327 = vmatprep.subr.mxu0 0.0
        %4328 = vmatpush1.msra.mxu0 0.0
        %4329 = vmatprep.subr.mxu0 0.0
        %4330 = vmatpush1.msra.mxu0 0.0
        %4331 = vmatprep.subr.mxu0 0.0
        %4332 = vmatpush1.msra.mxu0 0.0
        %4333 = vmatprep.subr.mxu0 0.0
        %4334 = vmatpush1.msra.mxu0 0.0
        %4335 = vmatprep.subr.mxu0 0.0
        %4336 = vmatpush1.msra.mxu0 0.0
        %4337 = vmatprep.subr.mxu0 0.0
        %4338 = vmatpush1.msra.mxu0 0.0
        %4339 = vmatprep.mubr.f32.mxu0 0.0
        %4340 = vmatmul.mubr.f32.gmra.mrb[0].mxu0 %v4270
        %v4341 = vpop.f32.mrb[0].mxu0
        %v4342 = vadd.f32 0.0, %v4341
        %v4343 = vpop.f32.mrb[0].mxu0
        %4344 = vmatprep.mubr.f32.mxu0 0.0
        %4345 = vmatmul.mubr.f32.gmra.mrb[0].mxu0 %v4273
        %v4346 = vpop.f32.mrb[0].mxu0
        %v4347 = vadd.f32 0.0, %v4346
        %v4348 = vpop.f32.mrb[0].mxu0
        %4349 = vdwg.mxu0
        %v4350 = vmul.f32 %v4342, 0.5
        %v4351 = vmul.f32 %v4347, 0.5
        %v4352 = vmul.f32 %v4342, 0.70710677
        %v4353 = vmul.f32 %v4347, 0.70710677
        %v4354 = verf.f32.pop %v4352
        %v4355 = verf.f32.pop %v4353
        %v4356 = vadd.f32 %v4354, 1.0
        %v4357 = vadd.f32 %v4355, 1.0
        %v4358 = vmul.f32 %v4350, %v4356
        %v4359 = vmul.f32 %v4351, %v4357
        %4360 = vadd.xlane.f32.xlu0 %v4358
        %v4361 = vpop.xlane.xlu0 %4360
        %4362 = vadd.xlane.f32.xlu0 %v4359
        %v4363 = vpop.xlane.xlu0 %4362
        %v4364 = vrcp.pop 128.0
        %v4365 = vmul.f32 %v4361, %v4364
        %v4366 = vmul.f32 %v4363, %v4364
        %v4367 = vsub.f32 %v4358, %v4365
        %v4368 = vsub.f32 %v4359, %v4366
        %v4369 = vmul.f32 %v4367, %v4367
        %v4370 = vmul.f32 %v4368, %v4368
        %4371 = vadd.xlane.f32.xlu0 %v4369
        %v4372 = vpop.xlane.xlu0 %4371
        %4373 = vadd.xlane.f32.xlu0 %v4370
        %v4374 = vpop.xlane.xlu0 %4373
        %v4375 = vmul.f32 %v4372, %v4364
        %v4376 = vmul.f32 %v4374, %v4364
        %v4377 = vadd.f32 %v4375, 1e-05
        %v4378 = vadd.f32 %v4376, 1e-05
        %v4379 = vrsqrt.pop %v4377
        %v4380 = vrsqrt.pop %v4378
        %v4381 = vmul.f32 %v4367, %v4379
        %v4382 = vmul.f32 %v4368, %v4380
        %v4384 = vlaneseq
        %v4385 = vshrl.u32 %v4384, 7
        %v4386 = vsub.s32 0, %v4385
        %v4387 = vrot.slane %v527, %v4386
        %v4389 = vmul.f32 %v4381, %v4387
        %v4390 = vmul.f32 %v4382, %v4387
        %4391 = vmatprep.subr.mxu0 0.0
        %4392 = vmatpush1.msra.mxu0 %v552
        %4393 = vmatprep.subr.mxu0 0.0
        %4394 = vmatpush1.msra.mxu0 %v553
        %4395 = vmatprep.subr.mxu0 0.0
        %4396 = vmatpush1.msra.mxu0 %v554
        %4397 = vmatprep.subr.mxu0 0.0
        %4398 = vmatpush1.msra.mxu0 %v555
        %4399 = vmatprep.subr.mxu0 0.0
        %4400 = vmatpush1.msra.mxu0 %v556
        %4401 = vmatprep.subr.mxu0 0.0
        %4402 = vmatpush1.msra.mxu0 %v557
        %4403 = vmatprep.subr.mxu0 0.0
        %4404 = vmatpush1.msra.mxu0 %v558
        %4405 = vmatprep.subr.mxu0 0.0
        %4406 = vmatpush1.msra.mxu0 %v559
        %4407 = vmatprep.subr.mxu0 0.0
        %4408 = vmatpush1.msra.mxu0 %v560
        %4409 = vmatprep.subr.mxu0 0.0
        %4410 = vmatpush1.msra.mxu0 %v561
        %4411 = vmatprep.subr.mxu0 0.0
        %4412 = vmatpush1.msra.mxu0 %v562
        %4413 = vmatprep.subr.mxu0 0.0
        %4414 = vmatpush1.msra.mxu0 %v563
        %4415 = vmatprep.subr.mxu0 0.0
        %4416 = vmatpush1.msra.mxu0 %v564
        %4417 = vmatprep.subr.mxu0 0.0
        %4418 = vmatpush1.msra.mxu0 %v565
        %4419 = vmatprep.subr.mxu0 0.0
        %4420 = vmatpush1.msra.mxu0 %v566
        %4421 = vmatprep.subr.mxu0 0.0
        %4422 = vmatpush1.msra.mxu0 %v567
        %4423 = vmatprep.subr.mxu0 0.0
        %4424 = vmatpush1.msra.mxu0 0.0
        %4425 = vmatprep.subr.mxu0 0.0
        %4426 = vmatpush1.msra.mxu0 0.0
        %4427 = vmatprep.subr.mxu0 0.0
        %4428 = vmatpush1.msra.mxu0 0.0
        %4429 = vmatprep.subr.mxu0 0.0
        %4430 = vmatpush1.msra.mxu0 0.0
        %4431 = vmatprep.subr.mxu0 0.0
        %4432 = vmatpush1.msra.mxu0 0.0
        %4433 = vmatprep.subr.mxu0 0.0
        %4434 = vmatpush1.msra.mxu0 0.0
        %4435 = vmatprep.subr.mxu0 0.0
        %4436 = vmatpush1.msra.mxu0 0.0
        %4437 = vmatprep.subr.mxu0 0.0
        %4438 = vmatpush1.msra.mxu0 0.0
        %4439 = vmatprep.subr.mxu0 0.0
        %4440 = vmatpush1.msra.mxu0 0.0
        %4441 = vmatprep.subr.mxu0 0.0
        %4442 = vmatpush1.msra.mxu0 0.0
        %4443 = vmatprep.subr.mxu0 0.0
        %4444 = vmatpush1.msra.mxu0 0.0
        %4445 = vmatprep.subr.mxu0 0.0
        %4446 = vmatpush1.msra.mxu0 0.0
        %4447 = vmatprep.subr.mxu0 0.0
        %4448 = vmatpush1.msra.mxu0 0.0
        %4449 = vmatprep.subr.mxu0 0.0
        %4450 = vmatpush1.msra.mxu0 0.0
        %4451 = vmatprep.subr.mxu0 0.0
        %4452 = vmatpush1.msra.mxu0 0.0
        %4453 = vmatprep.subr.mxu0 0.0
        %4454 = vmatpush1.msra.mxu0 0.0
        %4455 = vmatprep.mubr.f32.mxu0 0.0
        %4456 = vmatmul.mubr.f32.gmra.mrb[0].mxu0 %v4389
        %v4457 = vpop.f32.mrb[0].mxu0
        %v4458 = vadd.f32 %v4267, %v4457
        %v4459 = vpop.f32.mrb[0].mxu0
        %4460 = vmatprep.mubr.f32.mxu0 0.0
        %4461 = vmatmul.mubr.f32.gmra.mrb[0].mxu0 %v4390
        %v4462 = vpop.f32.mrb[0].mxu0
        %v4463 = vadd.f32 %v4268, %v4462
        %v4464 = vpop.f32.mrb[0].mxu0
        %4465 = vdwg.mxu0
        %v4466 = vsel %vm574, %v4458, 0.0
        %4467 = vadd.xlane.f32.xlu0 %v4466
        %v4468 = vpop.xlane.xlu0 %4467
        %v4469 = vsel %vm574, %v4463, 0.0
        %4470 = vadd.xlane.f32.xlu0 %v4469
        %v4471 = vpop.xlane.xlu0 %4470
        %v4472 = vmul.f32 %v4468, %v581
        %v4473 = vmul.f32 %v4471, %v581
        %v4474 = vsub.f32 %v4458, %v4472
        %v4475 = vsub.f32 %v4463, %v4473
        %v4476 = vmul.f32 %v4474, %v4474
        %v4477 = vmul.f32 %v4475, %v4475
        %v4478 = vsel %vm574, %v4476, 0.0
        %4479 = vadd.xlane.f32.xlu0 %v4478
        %v4480 = vpop.xlane.xlu0 %4479
        %v4481 = vsel %vm574, %v4477, 0.0
        %4482 = vadd.xlane.f32.xlu0 %v4481
        %v4483 = vpop.xlane.xlu0 %4482
        %v4484 = vmul.f32 %v4480, %v581
        %v4485 = vmul.f32 %v4483, %v581
        %v4486 = vadd.f32 %v4484, 1e-05
        %v4487 = vadd.f32 %v4485, 1e-05
        %v4488 = vrsqrt.pop %v4486
        %v4489 = vrsqrt.pop %v4487
        %v4490 = vmul.f32 %v4474, %v4488
        %v4491 = vmul.f32 %v4475, %v4489
        %v4493 = vlaneseq
        %v4494 = vshrl.u32 %v4493, 7
        %v4495 = vsub.s32 0, %v4494
        %v4496 = vrot.slane %v526, %v4495
        %v4498 = vmul.f32 %v4490, %v4496
        %v4499 = vmul.f32 %v4491, %v4496
        %4500 = vst.msk [vmem:[%s509] sm:$0xff] %vm574, %v4498
        %4501 = vst.msk [vmem:[%s509 + $0x8] sm:$0xff] %vm574, %v4499
        %s4502 = sand.u32 %s321, 1
        %s4503 = scalar_lea.sflag [#allocation4], %s4502
        %s4504 = sand.u32 %s321, 1
        %s4505 = smul.addr %s4504, 16
        %s4506 = scalar_lea.vmem [#allocation10], %s4505
        // Predicated region
        $region89: #{tpu_custom_call.1} parent=71 // pred_check
          %p4507 = pneg %p331
        $region90: #{tpu_custom_call.1} parent=71 // pred_check_branch
          %4509 = sbr.rel (%p4507) target = $region92
        $region91: #{tpu_custom_call.1} parent=71 // pred_region
          %s4510 = smul.u32 2, %s30
          %s4512 = ssub.s32 256, 256
          %4513 = vsyncadd %s4503, %s4512
          %s4514 = smul.addr %s4510, 128
          %s4515 = scalar_lea.hbm %s13, %s4514
          %s4516 = sshll.u32 %s4506, 4
          %s4517 = int_to_ptr.vmem [resolvable:$true] %s4516
          %4522 = dma.vmem_to_hbm [thread:$0]  %s4517, 256, %s4515, %s4503, 128, 128, 8
        $region92: #{tpu_custom_call.1} parent=71 // pred_fallthru
          _
      $region72: #{tpu_custom_call.1} parent=5 // pred_fallthru
        _
      %p4523 = scmp.le.s32.totalorder 2, %s25
      // Predicated region
      $region93: #{tpu_custom_call.1} parent=5 // pred_check
        %p4524 = pneg %p4523
      $region94: #{tpu_custom_call.1} parent=5 // pred_check_branch
        %4526 = sbr.rel (%p4524) target = $region96
      $region95: #{tpu_custom_call.1} parent=5 // pred_region
        %s4527 = ssub.s32 %s25, 2
        // Predicated region
        $region97: #{tpu_custom_call.1} parent=95 // pred_check
          %p4528 = pneg %p337
        $region98: #{tpu_custom_call.1} parent=95 // pred_check_branch
          %4530 = sbr.rel (%p4528) target = $region100
        $region99: #{tpu_custom_call.1} parent=95 // pred_region
          %s4531 = sand.u32 %s322, 1
          %s4532 = scalar_lea.sflag [#allocation4], %s4531
          %s4533 = sand.u32 %s322, 1
          %s4534 = smul.addr %s4533, 16
          %s4535 = scalar_lea.vmem [#allocation10], %s4534
          %4536 = dma.done %s4532, 256
        $region100: #{tpu_custom_call.1} parent=95 // pred_fallthru
          _
      $region96: #{tpu_custom_call.1} parent=5 // pred_fallthru
        _
    $region6: #{tpu_custom_call.1} parent=1 // loop_footer
      %s29 = sadd.s32 1, %s25
    $region7: #{tpu_custom_call.1} parent=1 // loop_footer_branch
      %24 = sbr.rel target = $region3
    $region8: #{tpu_custom_call.1} parent=1 // loop_exit
      _
    %4537 = vsyncpa [#allocation3], 1
    %s4538 = scalar_lea.sflag [#allocation3], 1
    %4539 = vsyncpa %s4538, 1
    %4540 = vsyncpa [#allocation6], 1
    %4541 = vsyncpa [#allocation9], 1
    %4542 = vsyncpa [#allocation4], 1
    %s4543 = scalar_lea.sflag [#allocation4], 1
    %4544 = vsyncpa %s4543, 1

</llo_original>
